<compile_context>
chip_gen: v6e
topology: v6e:2x2x1
jax: 0.10.0
libtpu: 0.0.40
codegen_flags: <defaults>
</compile_context>

<pallas_src>
import functools

import jax
import jax.numpy as jnp
from jax import lax
from jax.experimental import pallas as pl
from jax.experimental.pallas import tpu as pltpu

NUM_FEATURES = 64
KERNEL_SIZE = 7
PAD = KERNEL_SIZE // 2
LANES = 128


def _round_up(x, m):
    return (x + m - 1) // m * m


def _xunit_kernel(x_blk, x_hbm, w_ref, b_ref, o_ref,
                  pad_buf, halo_buf, sem, *, TH, W, CP, K, WC):
    """One (image, H-tile) per grid step.

    x_blk   : (1, TH, W, CP)   pipelined center tile (raw x; also the gate)
    x_hbm   : (NB, H, W, CP)   full array in HBM (pl.ANY) -- halo DMAs only
    w_ref   : (K, K, CP)       depthwise conv weights
    b_ref   : (1, CP)          depthwise conv bias
    o_ref   : (1, TH, W, CP)
    pad_buf : VMEM (TH+2P, W+2P, CP) f32   relu(x) with zero halo
    halo_buf: VMEM (2, P, W, CP)           raw halo rows (0=top, 1=bottom)
    sem     : DMA semaphores (2,)
    """
    P = K // 2
    b = pl.program_id(0)
    i = pl.program_id(1)
    n_h = pl.num_programs(1)
    row0 = i * TH

    def halo_copy(src_row, slot):
        return pltpu.make_async_copy(
            x_hbm.at[b, pl.ds(src_row, P)],
            halo_buf.at[slot],
            sem.at[slot])

    # Kick off the (tiny) halo DMAs first so they overlap the center pass.
    @pl.when(i > 0)
    def _():
        halo_copy(row0 - P, 0).start()

    @pl.when(i < n_h - 1)
    def _():
        halo_copy(row0 + TH, 1).start()

    # Zero the W-halo columns (the scratch is reused across grid steps).
    zcol = jnp.zeros((TH + 2 * P, P, CP), jnp.float32)
    pad_buf[:, 0:P, :] = zcol
    pad_buf[:, P + W:, :] = zcol

    # Center rows: relu(x) streamed from the pipelined block.
    pad_buf[P:P + TH, P:P + W, :] = jnp.maximum(
        x_blk[0].astype(jnp.float32), 0.0)

    zrow = jnp.zeros((P, W, CP), jnp.float32)

    # Top halo rows: relu(DMA'd rows) inside the image, zeros at the border.
    @pl.when(i > 0)
    def _():
        halo_copy(0, 0).wait()                  # wait only needs shapes/sem
        pad_buf[0:P, P:P + W, :] = jnp.maximum(
            halo_buf[0].astype(jnp.float32), 0.0)

    @pl.when(i == 0)
    def _():
        pad_buf[0:P, P:P + W, :] = zrow

    # Bottom halo rows.
    @pl.when(i < n_h - 1)
    def _():
        halo_copy(0, 1).wait()
        pad_buf[P + TH:, P:P + W, :] = jnp.maximum(
            halo_buf[1].astype(jnp.float32), 0.0)

    @pl.when(i == n_h - 1)
    def _():
        pad_buf[P + TH:, P:P + W, :] = zrow

    # 49-tap depthwise cross-correlation: stream shifted windows from the
    # VMEM scratch ref, accumulate per W-chunk with two partial accumulators.
    bias = b_ref[0].astype(jnp.float32)                       # (CP,)
    for w0 in range(0, W, WC):
        wcs = min(WC, W - w0)
        acc0 = jnp.zeros((TH, wcs, CP), jnp.float32)
        acc1 = jnp.zeros((TH, wcs, CP), jnp.float32)
        for kh in range(K):
            for kw in range(K):
                win = pad_buf[kh:kh + TH, w0 + kw:w0 + kw + wcs, :]
                tap = win * w_ref[kh, kw, :].astype(jnp.float32)
                if (kh * K + kw) % 2 == 0:
                    acc0 = acc0 + tap
                else:
                    acc1 = acc1 + tap
        a = jax.nn.sigmoid(acc0 + acc1 + bias)                # attention map
        gate_in = x_blk[0, :, w0:w0 + wcs, :].astype(jnp.float32)
        o_ref[0, :, w0:w0 + wcs, :] = (gate_in * a).astype(o_ref.dtype)


def _vmem_bytes(tile_h, W, CP, dtype, p):
    esz = jnp.dtype(dtype).itemsize
    cpl = _round_up(CP, LANES)                       # lane padding
    blk = tile_h * _round_up(W, 8) * cpl * esz       # one pipelined block
    pad_buf = (tile_h + 2 * p) * _round_up(W + 2 * p, 8) * cpl * 4
    halo = 2 * p * _round_up(W, 8) * cpl * esz
    consts = KERNEL_SIZE * _round_up(KERNEL_SIZE, 8) * cpl * 4 + 8 * cpl * 4
    # in + out blocks are double-buffered by the pipeline.
    return 4 * blk + pad_buf + halo + consts


def _pick_tile_h(H, W, CP, dtype, p, *, budget_bytes=24 * 2**20, max_tile=8):
    # Largest divisor of H that keeps the halo scheme valid (tile_h >= p, or
    # a single tile) and fits the VMEM budget; correctness first on fallback.
    divs = [d for d in range(1, H + 1) if H % d == 0]
    valid = [d for d in divs if d >= p or d == H]
    fitting = [d for d in valid
               if d <= max_tile and _vmem_bytes(d, W, CP, dtype, p) <= budget_bytes]
    if fitting:
        return max(fitting)
    return min(valid)


def xunit_pallas(x_nchw, w_hwc, bias, *, tile_h=None):
    """xUnit forward. x_nchw: (N, C, H, W); w_hwc: (K, K, C); bias: (C,).

    NCHW in/out to match the PyTorch module.
    # TODO(synk): if the surrounding model runs NHWC, add an NHWC entry point
    # and drop the two relayouts below (pure HBM traffic).
    """
    N, C, H, W = x_nchw.shape
    K = w_hwc.shape[0]
    assert w_hwc.shape == (K, K, C) and bias.shape == (C,)
    p = K // 2

    # Fold G images into the channel axis so the lane dim is 128-wide.
    G = 1
    if C < LANES and LANES % C == 0:
        for g in range(min(LANES // C, N), 0, -1):
            if N % g == 0:
                G = g
                break
    NB, CP = N // G, G * C

    # NCHW -> packed NHWC (the packing rides on the relayout we already pay).
    x = (x_nchw.reshape(NB, G, C, H, W)
         .transpose(0, 3, 4, 1, 2)
         .reshape(NB, H, W, CP))
    w = jnp.tile(w_hwc, (1, 1, G))                    # (K, K, CP)
    b2 = jnp.tile(bias, G).reshape(1, CP)             # (1, CP)

    if tile_h is None:
        tile_h = _pick_tile_h(H, W, CP, x.dtype, p)
    assert H % tile_h == 0 and (tile_h >= p or tile_h == H)
    n_h = H // tile_h

    # W-chunk size so the two f32 accumulators stay ~16 vregs.
    cpl = _round_up(CP, LANES)
    wc = max(8, (8192 // max(tile_h * cpl, 1)) // 8 * 8)
    wc = min(wc, W)

    vmem_est = _vmem_bytes(tile_h, W, CP, x.dtype, p)
    vmem_limit = int(min(max(vmem_est * 3 // 2, 16 * 2**20), 64 * 2**20))

    kernel = functools.partial(_xunit_kernel, TH=tile_h, W=W, CP=CP, K=K, WC=wc)

    out = pl.pallas_call(
        kernel,
        out_shape=jax.ShapeDtypeStruct((NB, H, W, CP), x.dtype),
        grid=(NB, n_h),
        in_specs=[
            pl.BlockSpec((1, tile_h, W, CP), lambda nb, ih: (nb, ih, 0, 0)),
            pl.BlockSpec(memory_space=pl.ANY),        # same array: halo DMAs
            pl.BlockSpec((K, K, CP), lambda nb, ih: (0, 0, 0)),
            pl.BlockSpec((1, CP), lambda nb, ih: (0, 0)),
        ],
        out_specs=pl.BlockSpec((1, tile_h, W, CP), lambda nb, ih: (nb, ih, 0, 0)),
        scratch_shapes=[
            pltpu.VMEM((tile_h + 2 * p, W + 2 * p, CP), jnp.float32),
            pltpu.VMEM((2, p, W, CP), x.dtype),
            pltpu.SemaphoreType.DMA((2,)),
        ],
        compiler_params=pltpu.CompilerParams(
            dimension_semantics=("parallel", "parallel"),
            vmem_limit_bytes=vmem_limit,
        ),
    )(x, x, w, b2)

    # packed NHWC -> NCHW
    out = (out.reshape(NB, H, W, G, C)
           .transpose(0, 3, 4, 1, 2)
           .reshape(N, C, H, W))
    return out


def xunit_reference(x_nchw, w_hwc, bias):
    """Pure-JAX reference matching nn.Conv2d(groups=C) semantics."""
    x = jnp.transpose(x_nchw, (0, 2, 3, 1))           # NHWC
    C = x.shape[-1]
    K = w_hwc.shape[0]
    p = K // 2
    xr = jnp.maximum(x, 0.0)
    w_hwio = w_hwc[:, :, None, :]                     # (K, K, 1, C) depthwise
    a = lax.conv_general_dilated(
        xr, w_hwio,
        window_strides=(1, 1),
        padding=((p, p), (p, p)),
        dimension_numbers=("NHWC", "HWIO", "NHWC"),
        feature_group_count=C,
    ) + bias.reshape(1, 1, 1, C)
    r = x * jax.nn.sigmoid(a)
    return jnp.transpose(r, (0, 3, 1, 2))


if __name__ == "__main__":
    key = jax.random.PRNGKey(0)
    k_x, k_w, k_b = jax.random.split(key, 3)

    N, C, H, W = 2, NUM_FEATURES, 16, 16
    x = jax.random.normal(k_x, (N, C, H, W), jnp.float32)
    # Deterministic synthetic parameters (nn.Conv2d(C, C, 7, groups=C) shapes).
    w = jax.random.normal(k_w, (KERNEL_SIZE, KERNEL_SIZE, C), jnp.float32) * 0.05
    b = jax.random.normal(k_b, (C,), jnp.float32) * 0.05

    # tile_h=8 -> grid (1, 2): exercises both halo DMAs and both zero paths.
    out = xunit_pallas(x, w, b, tile_h=8)
    jax.block_until_ready(out)

    ref = xunit_reference(x, w, b)
    assert out.shape == (N, C, H, W)
    err = float(jnp.max(jnp.abs(out - ref)))
    assert jnp.allclose(out, ref, rtol=1e-5, atol=1e-5), err

    print("KERNEL_OK")
</pallas_src>

<mosaic_0001>
module attributes {stable_mosaic.version = 11 : i64} {
  func.func @_xunit_kernel(%arg0: i32, %arg1: i32, %arg2: memref<1x8x16x128xf32, #tpu.memory_space<vmem>>, %arg3: memref<1x16x16x128xf32, #tpu.memory_space<any>>, %arg4: memref<7x7x128xf32, #tpu.memory_space<vmem>>, %arg5: memref<1x128xf32, #tpu.memory_space<vmem>>, %arg6: memref<1x8x16x128xf32, #tpu.memory_space<vmem>>, %arg7: memref<14x22x128xf32, #tpu.memory_space<vmem>>, %arg8: memref<2x3x16x128xf32, #tpu.memory_space<vmem>>, %arg9: memref<2x!tpu.dma_semaphore, #tpu.memory_space<semaphore_mem>>) attributes {dimension_semantics = [#tpu.dimension_semantics<parallel>, #tpu.dimension_semantics<parallel>], iteration_bounds = array<i64: 1, 2>, scalar_prefetch = 0 : i64, scratch_operands = 3 : i64, tpu.core_type = #tpu.core_type<tc>, window_params = [{transform_indices = @transform_0, window_bounds = array<i64: 1, 8, 16, 128>}, {}, {pipeline_mode = #tpu.pipeline_mode<synchronous>, transform_indices = @transform_2, window_bounds = array<i64: 7, 7, 128>}, {pipeline_mode = #tpu.pipeline_mode<synchronous>, transform_indices = @transform_3, window_bounds = array<i64: 1, 128>}, {transform_indices = @transform_4, window_bounds = array<i64: 1, 8, 16, 128>}]} {
    %c8_i32 = arith.constant 8 : i32
    %0 = arith.muli %arg1, %c8_i32 : i32
    %c0_i32 = arith.constant 0 : i32
    %1 = arith.cmpi sgt, %arg1, %c0_i32 : i32
    %2 = arith.extui %1 : i1 to i32
    %c0_i32_0 = arith.constant 0 : i32
    %3 = arith.cmpi ne, %2, %c0_i32_0 : i32
    scf.if %3 {
      %c3_i32 = arith.constant 3 : i32
      %750 = arith.subi %0, %c3_i32 : i32
      %c0_i32_622 = arith.constant 0 : i32
      %c0_i32_623 = arith.constant 0 : i32
      %c0_i32_624 = arith.constant 0 : i32
      %c0_i32_625 = arith.constant 0 : i32
      %751 = tpu.memref_slice %arg3[%arg0, %750, %c0_i32_624, %c0_i32_625] : memref<1x16x16x128xf32, #tpu.memory_space<any>> -> memref<1x3x16x128xf32, #tpu.memory_space<any>>
      %752 = tpu.memref_squeeze %751 : memref<1x3x16x128xf32, #tpu.memory_space<any>> -> memref<3x16x128xf32, #tpu.memory_space<any>>
      %c0_i32_626 = arith.constant 0 : i32
      %c0_i32_627 = arith.constant 0 : i32
      %c0_i32_628 = arith.constant 0 : i32
      %753 = tpu.memref_slice %arg8[%c0_i32_622, %c0_i32_626, %c0_i32_627, %c0_i32_628] : memref<2x3x16x128xf32, #tpu.memory_space<vmem>> -> memref<1x3x16x128xf32, #tpu.memory_space<vmem>>
      %754 = tpu.memref_squeeze %753 : memref<1x3x16x128xf32, #tpu.memory_space<vmem>> -> memref<3x16x128xf32, #tpu.memory_space<vmem>>
      %755 = tpu.memref_slice %arg9[%c0_i32_623] : memref<2x!tpu.dma_semaphore, #tpu.memory_space<semaphore_mem>> -> memref<1x!tpu.dma_semaphore, #tpu.memory_space<semaphore_mem>>
      %756 = tpu.memref_squeeze %755 : memref<1x!tpu.dma_semaphore, #tpu.memory_space<semaphore_mem>> -> memref<!tpu.dma_semaphore, #tpu.memory_space<semaphore_mem>>
      tpu.enqueue_dma source(%752 : memref<3x16x128xf32, #tpu.memory_space<any>>) target(%754 : memref<3x16x128xf32, #tpu.memory_space<vmem>>) target_semaphore(%756 : memref<!tpu.dma_semaphore, #tpu.memory_space<semaphore_mem>>)
    } else {
    }
    %c1_i32 = arith.constant 1 : i32
    %4 = arith.cmpi slt, %arg1, %c1_i32 : i32
    %5 = arith.extui %4 : i1 to i32
    %c0_i32_1 = arith.constant 0 : i32
    %6 = arith.cmpi ne, %5, %c0_i32_1 : i32
    scf.if %6 {
      %c8_i32_622 = arith.constant 8 : i32
      %750 = arith.addi %0, %c8_i32_622 : i32
      %c1_i32_623 = arith.constant 1 : i32
      %c1_i32_624 = arith.constant 1 : i32
      %c0_i32_625 = arith.constant 0 : i32
      %c0_i32_626 = arith.constant 0 : i32
      %751 = tpu.memref_slice %arg3[%arg0, %750, %c0_i32_625, %c0_i32_626] : memref<1x16x16x128xf32, #tpu.memory_space<any>> -> memref<1x3x16x128xf32, #tpu.memory_space<any>>
      %752 = tpu.memref_squeeze %751 : memref<1x3x16x128xf32, #tpu.memory_space<any>> -> memref<3x16x128xf32, #tpu.memory_space<any>>
      %c0_i32_627 = arith.constant 0 : i32
      %c0_i32_628 = arith.constant 0 : i32
      %c0_i32_629 = arith.constant 0 : i32
      %753 = tpu.memref_slice %arg8[%c1_i32_623, %c0_i32_627, %c0_i32_628, %c0_i32_629] : memref<2x3x16x128xf32, #tpu.memory_space<vmem>> -> memref<1x3x16x128xf32, #tpu.memory_space<vmem>>
      %754 = tpu.memref_squeeze %753 : memref<1x3x16x128xf32, #tpu.memory_space<vmem>> -> memref<3x16x128xf32, #tpu.memory_space<vmem>>
      %755 = tpu.memref_slice %arg9[%c1_i32_624] : memref<2x!tpu.dma_semaphore, #tpu.memory_space<semaphore_mem>> -> memref<1x!tpu.dma_semaphore, #tpu.memory_space<semaphore_mem>>
      %756 = tpu.memref_squeeze %755 : memref<1x!tpu.dma_semaphore, #tpu.memory_space<semaphore_mem>> -> memref<!tpu.dma_semaphore, #tpu.memory_space<semaphore_mem>>
      tpu.enqueue_dma source(%752 : memref<3x16x128xf32, #tpu.memory_space<any>>) target(%754 : memref<3x16x128xf32, #tpu.memory_space<vmem>>) target_semaphore(%756 : memref<!tpu.dma_semaphore, #tpu.memory_space<semaphore_mem>>)
    } else {
    }
    %cst = arith.constant 0.000000e+00 : f32
    %7 = vector.broadcast %cst : f32 to vector<14x3x128xf32>
    %c0 = arith.constant 0 : index
    %c0_2 = arith.constant 0 : index
    %c0_3 = arith.constant 0 : index
    %8 = vector.load %arg7[%c0, %c0_2, %c0_3] : memref<14x22x128xf32, #tpu.memory_space<vmem>>, vector<14x3x128xf32>
    tpu.vector_store %arg7[%c0, %c0_2, %c0_3], %7 {strides = array<i32>} : memref<14x22x128xf32, #tpu.memory_space<vmem>>, vector<14x3x128xf32>,
    %c0_4 = arith.constant 0 : index
    %c19 = arith.constant 19 : index
    %c0_5 = arith.constant 0 : index
    %9 = vector.load %arg7[%c0_4, %c19, %c0_5] : memref<14x22x128xf32, #tpu.memory_space<vmem>>, vector<14x3x128xf32>
    tpu.vector_store %arg7[%c0_4, %c19, %c0_5], %7 {strides = array<i32>} : memref<14x22x128xf32, #tpu.memory_space<vmem>>, vector<14x3x128xf32>,
    %c0_6 = arith.constant 0 : index
    %c0_7 = arith.constant 0 : index
    %c0_8 = arith.constant 0 : index
    %c0_9 = arith.constant 0 : index
    %10 = vector.load %arg2[%c0_6, %c0_7, %c0_8, %c0_9] : memref<1x8x16x128xf32, #tpu.memory_space<vmem>>, vector<1x8x16x128xf32>
    %11 = vector.shape_cast %10 : vector<1x8x16x128xf32> to vector<8x16x128xf32>
    %cst_10 = arith.constant 0.000000e+00 : f32
    %12 = vector.broadcast %cst_10 : f32 to vector<8x16x128xf32>
    %13 = arith.maximumf %11, %12 : vector<8x16x128xf32>
    %c3 = arith.constant 3 : index
    %c3_11 = arith.constant 3 : index
    %c0_12 = arith.constant 0 : index
    %14 = vector.load %arg7[%c3, %c3_11, %c0_12] : memref<14x22x128xf32, #tpu.memory_space<vmem>>, vector<8x16x128xf32>
    tpu.vector_store %arg7[%c3, %c3_11, %c0_12], %13 {strides = array<i32>} : memref<14x22x128xf32, #tpu.memory_space<vmem>>, vector<8x16x128xf32>,
    %cst_13 = arith.constant 0.000000e+00 : f32
    %15 = vector.broadcast %cst_13 : f32 to vector<3x16x128xf32>
    %c0_i32_14 = arith.constant 0 : i32
    %16 = arith.cmpi sgt, %arg1, %c0_i32_14 : i32
    %17 = arith.extui %16 : i1 to i32
    %c0_i32_15 = arith.constant 0 : i32
    %18 = arith.cmpi ne, %17, %c0_i32_15 : i32
    scf.if %18 {
      %c0_i32_622 = arith.constant 0 : i32
      %c0_i32_623 = arith.constant 0 : i32
      %c0_i32_624 = arith.constant 0 : i32
      %c0_i32_625 = arith.constant 0 : i32
      %c0_i32_626 = arith.constant 0 : i32
      %750 = tpu.memref_slice %arg3[%arg0, %c0_i32_624, %c0_i32_625, %c0_i32_626] : memref<1x16x16x128xf32, #tpu.memory_space<any>> -> memref<1x3x16x128xf32, #tpu.memory_space<any>>
      %751 = tpu.memref_squeeze %750 : memref<1x3x16x128xf32, #tpu.memory_space<any>> -> memref<3x16x128xf32, #tpu.memory_space<any>>
      %c0_i32_627 = arith.constant 0 : i32
      %c0_i32_628 = arith.constant 0 : i32
      %c0_i32_629 = arith.constant 0 : i32
      %752 = tpu.memref_slice %arg8[%c0_i32_622, %c0_i32_627, %c0_i32_628, %c0_i32_629] : memref<2x3x16x128xf32, #tpu.memory_space<vmem>> -> memref<1x3x16x128xf32, #tpu.memory_space<vmem>>
      %753 = tpu.memref_squeeze %752 : memref<1x3x16x128xf32, #tpu.memory_space<vmem>> -> memref<3x16x128xf32, #tpu.memory_space<vmem>>
      %754 = tpu.memref_slice %arg9[%c0_i32_623] : memref<2x!tpu.dma_semaphore, #tpu.memory_space<semaphore_mem>> -> memref<1x!tpu.dma_semaphore, #tpu.memory_space<semaphore_mem>>
      %755 = tpu.memref_squeeze %754 : memref<1x!tpu.dma_semaphore, #tpu.memory_space<semaphore_mem>> -> memref<!tpu.dma_semaphore, #tpu.memory_space<semaphore_mem>>
      tpu.wait_dma2 semaphore(%755 : memref<!tpu.dma_semaphore, #tpu.memory_space<semaphore_mem>>) src(%751 : memref<3x16x128xf32, #tpu.memory_space<any>>) dst(%753 : memref<3x16x128xf32, #tpu.memory_space<vmem>>)
      %c0_630 = arith.constant 0 : index
      %c0_631 = arith.constant 0 : index
      %c0_632 = arith.constant 0 : index
      %c0_633 = arith.constant 0 : index
      %756 = vector.load %arg8[%c0_630, %c0_631, %c0_632, %c0_633] : memref<2x3x16x128xf32, #tpu.memory_space<vmem>>, vector<1x3x16x128xf32>
      %757 = vector.shape_cast %756 : vector<1x3x16x128xf32> to vector<3x16x128xf32>
      %cst_634 = arith.constant 0.000000e+00 : f32
      %758 = vector.broadcast %cst_634 : f32 to vector<3x16x128xf32>
      %759 = arith.maximumf %757, %758 : vector<3x16x128xf32>
      %c0_635 = arith.constant 0 : index
      %c3_636 = arith.constant 3 : index
      %c0_637 = arith.constant 0 : index
      %760 = vector.load %arg7[%c0_635, %c3_636, %c0_637] : memref<14x22x128xf32, #tpu.memory_space<vmem>>, vector<3x16x128xf32>
      tpu.vector_store %arg7[%c0_635, %c3_636, %c0_637], %759 {strides = array<i32>} : memref<14x22x128xf32, #tpu.memory_space<vmem>>, vector<3x16x128xf32>,
    } else {
    }
    %c0_i32_16 = arith.constant 0 : i32
    %19 = arith.cmpi eq, %arg1, %c0_i32_16 : i32
    %20 = arith.extui %19 : i1 to i32
    %c0_i32_17 = arith.constant 0 : i32
    %21 = arith.cmpi ne, %20, %c0_i32_17 : i32
    scf.if %21 {
      %c0_622 = arith.constant 0 : index
      %c3_623 = arith.constant 3 : index
      %c0_624 = arith.constant 0 : index
      %750 = vector.load %arg7[%c0_622, %c3_623, %c0_624] : memref<14x22x128xf32, #tpu.memory_space<vmem>>, vector<3x16x128xf32>
      tpu.vector_store %arg7[%c0_622, %c3_623, %c0_624], %15 {strides = array<i32>} : memref<14x22x128xf32, #tpu.memory_space<vmem>>, vector<3x16x128xf32>,
    } else {
    }
    %c1_i32_18 = arith.constant 1 : i32
    %22 = arith.cmpi slt, %arg1, %c1_i32_18 : i32
    %23 = arith.extui %22 : i1 to i32
    %c0_i32_19 = arith.constant 0 : i32
    %24 = arith.cmpi ne, %23, %c0_i32_19 : i32
    scf.if %24 {
      %c1_i32_622 = arith.constant 1 : i32
      %c1_i32_623 = arith.constant 1 : i32
      %c0_i32_624 = arith.constant 0 : i32
      %c0_i32_625 = arith.constant 0 : i32
      %c0_i32_626 = arith.constant 0 : i32
      %750 = tpu.memref_slice %arg3[%arg0, %c0_i32_624, %c0_i32_625, %c0_i32_626] : memref<1x16x16x128xf32, #tpu.memory_space<any>> -> memref<1x3x16x128xf32, #tpu.memory_space<any>>
      %751 = tpu.memref_squeeze %750 : memref<1x3x16x128xf32, #tpu.memory_space<any>> -> memref<3x16x128xf32, #tpu.memory_space<any>>
      %c0_i32_627 = arith.constant 0 : i32
      %c0_i32_628 = arith.constant 0 : i32
      %c0_i32_629 = arith.constant 0 : i32
      %752 = tpu.memref_slice %arg8[%c1_i32_622, %c0_i32_627, %c0_i32_628, %c0_i32_629] : memref<2x3x16x128xf32, #tpu.memory_space<vmem>> -> memref<1x3x16x128xf32, #tpu.memory_space<vmem>>
      %753 = tpu.memref_squeeze %752 : memref<1x3x16x128xf32, #tpu.memory_space<vmem>> -> memref<3x16x128xf32, #tpu.memory_space<vmem>>
      %754 = tpu.memref_slice %arg9[%c1_i32_623] : memref<2x!tpu.dma_semaphore, #tpu.memory_space<semaphore_mem>> -> memref<1x!tpu.dma_semaphore, #tpu.memory_space<semaphore_mem>>
      %755 = tpu.memref_squeeze %754 : memref<1x!tpu.dma_semaphore, #tpu.memory_space<semaphore_mem>> -> memref<!tpu.dma_semaphore, #tpu.memory_space<semaphore_mem>>
      tpu.wait_dma2 semaphore(%755 : memref<!tpu.dma_semaphore, #tpu.memory_space<semaphore_mem>>) src(%751 : memref<3x16x128xf32, #tpu.memory_space<any>>) dst(%753 : memref<3x16x128xf32, #tpu.memory_space<vmem>>)
      %c1_630 = arith.constant 1 : index
      %c0_631 = arith.constant 0 : index
      %c0_632 = arith.constant 0 : index
      %c0_633 = arith.constant 0 : index
      %756 = vector.load %arg8[%c1_630, %c0_631, %c0_632, %c0_633] : memref<2x3x16x128xf32, #tpu.memory_space<vmem>>, vector<1x3x16x128xf32>
      %757 = vector.shape_cast %756 : vector<1x3x16x128xf32> to vector<3x16x128xf32>
      %cst_634 = arith.constant 0.000000e+00 : f32
      %758 = vector.broadcast %cst_634 : f32 to vector<3x16x128xf32>
      %759 = arith.maximumf %757, %758 : vector<3x16x128xf32>
      %c11_635 = arith.constant 11 : index
      %c3_636 = arith.constant 3 : index
      %c0_637 = arith.constant 0 : index
      %760 = vector.load %arg7[%c11_635, %c3_636, %c0_637] : memref<14x22x128xf32, #tpu.memory_space<vmem>>, vector<3x16x128xf32>
      tpu.vector_store %arg7[%c11_635, %c3_636, %c0_637], %759 {strides = array<i32>} : memref<14x22x128xf32, #tpu.memory_space<vmem>>, vector<3x16x128xf32>,
    } else {
    }
    %c1_i32_20 = arith.constant 1 : i32
    %25 = arith.cmpi eq, %arg1, %c1_i32_20 : i32
    %26 = arith.extui %25 : i1 to i32
    %c0_i32_21 = arith.constant 0 : i32
    %27 = arith.cmpi ne, %26, %c0_i32_21 : i32
    scf.if %27 {
      %c11_622 = arith.constant 11 : index
      %c3_623 = arith.constant 3 : index
      %c0_624 = arith.constant 0 : index
      %750 = vector.load %arg7[%c11_622, %c3_623, %c0_624] : memref<14x22x128xf32, #tpu.memory_space<vmem>>, vector<3x16x128xf32>
      tpu.vector_store %arg7[%c11_622, %c3_623, %c0_624], %15 {strides = array<i32>} : memref<14x22x128xf32, #tpu.memory_space<vmem>>, vector<3x16x128xf32>,
    } else {
    }
    %c0_22 = arith.constant 0 : index
    %c0_23 = arith.constant 0 : index
    %28 = vector.load %arg5[%c0_22, %c0_23] : memref<1x128xf32, #tpu.memory_space<vmem>>, vector<1x128xf32>
    %29 = vector.shape_cast %28 : vector<1x128xf32> to vector<128xf32>
    %cst_24 = arith.constant 0.000000e+00 : f32
    %30 = vector.broadcast %cst_24 : f32 to vector<8x8x128xf32>
    %cst_25 = arith.constant 0.000000e+00 : f32
    %31 = vector.broadcast %cst_25 : f32 to vector<8x8x128xf32>
    %c0_26 = arith.constant 0 : index
    %c0_27 = arith.constant 0 : index
    %c0_28 = arith.constant 0 : index
    %32 = vector.load %arg7[%c0_26, %c0_27, %c0_28] : memref<14x22x128xf32, #tpu.memory_space<vmem>>, vector<8x8x128xf32>
    %c0_29 = arith.constant 0 : index
    %c0_30 = arith.constant 0 : index
    %c0_31 = arith.constant 0 : index
    %33 = vector.load %arg4[%c0_29, %c0_30, %c0_31] : memref<7x7x128xf32, #tpu.memory_space<vmem>>, vector<1x1x128xf32>
    %34 = vector.shape_cast %33 : vector<1x1x128xf32> to vector<128xf32>
    %35 = vector.shape_cast %34 : vector<128xf32> to vector<1x1x128xf32>
    %36 = vector.broadcast %35 : vector<1x1x128xf32> to vector<8x8x128xf32>
    %37 = arith.mulf %32, %36 : vector<8x8x128xf32>
    %38 = arith.addf %30, %37 : vector<8x8x128xf32>
    %c0_32 = arith.constant 0 : index
    %c1 = arith.constant 1 : index
    %c0_33 = arith.constant 0 : index
    %39 = vector.load %arg7[%c0_32, %c1, %c0_33] : memref<14x22x128xf32, #tpu.memory_space<vmem>>, vector<8x8x128xf32>
    %c0_34 = arith.constant 0 : index
    %c1_35 = arith.constant 1 : index
    %c0_36 = arith.constant 0 : index
    %40 = vector.load %arg4[%c0_34, %c1_35, %c0_36] : memref<7x7x128xf32, #tpu.memory_space<vmem>>, vector<1x1x128xf32>
    %41 = vector.shape_cast %40 : vector<1x1x128xf32> to vector<128xf32>
    %42 = vector.shape_cast %41 : vector<128xf32> to vector<1x1x128xf32>
    %43 = vector.broadcast %42 : vector<1x1x128xf32> to vector<8x8x128xf32>
    %44 = arith.mulf %39, %43 : vector<8x8x128xf32>
    %45 = arith.addf %31, %44 : vector<8x8x128xf32>
    %c0_37 = arith.constant 0 : index
    %c2 = arith.constant 2 : index
    %c0_38 = arith.constant 0 : index
    %46 = vector.load %arg7[%c0_37, %c2, %c0_38] : memref<14x22x128xf32, #tpu.memory_space<vmem>>, vector<8x8x128xf32>
    %c0_39 = arith.constant 0 : index
    %c2_40 = arith.constant 2 : index
    %c0_41 = arith.constant 0 : index
    %47 = vector.load %arg4[%c0_39, %c2_40, %c0_41] : memref<7x7x128xf32, #tpu.memory_space<vmem>>, vector<1x1x128xf32>
    %48 = vector.shape_cast %47 : vector<1x1x128xf32> to vector<128xf32>
    %49 = vector.shape_cast %48 : vector<128xf32> to vector<1x1x128xf32>
    %50 = vector.broadcast %49 : vector<1x1x128xf32> to vector<8x8x128xf32>
    %51 = arith.mulf %46, %50 : vector<8x8x128xf32>
    %52 = arith.addf %38, %51 : vector<8x8x128xf32>
    %c0_42 = arith.constant 0 : index
    %c3_43 = arith.constant 3 : index
    %c0_44 = arith.constant 0 : index
    %53 = vector.load %arg7[%c0_42, %c3_43, %c0_44] : memref<14x22x128xf32, #tpu.memory_space<vmem>>, vector<8x8x128xf32>
    %c0_45 = arith.constant 0 : index
    %c3_46 = arith.constant 3 : index
    %c0_47 = arith.constant 0 : index
    %54 = vector.load %arg4[%c0_45, %c3_46, %c0_47] : memref<7x7x128xf32, #tpu.memory_space<vmem>>, vector<1x1x128xf32>
    %55 = vector.shape_cast %54 : vector<1x1x128xf32> to vector<128xf32>
    %56 = vector.shape_cast %55 : vector<128xf32> to vector<1x1x128xf32>
    %57 = vector.broadcast %56 : vector<1x1x128xf32> to vector<8x8x128xf32>
    %58 = arith.mulf %53, %57 : vector<8x8x128xf32>
    %59 = arith.addf %45, %58 : vector<8x8x128xf32>
    %c0_48 = arith.constant 0 : index
    %c4 = arith.constant 4 : index
    %c0_49 = arith.constant 0 : index
    %60 = vector.load %arg7[%c0_48, %c4, %c0_49] : memref<14x22x128xf32, #tpu.memory_space<vmem>>, vector<8x8x128xf32>
    %c0_50 = arith.constant 0 : index
    %c4_51 = arith.constant 4 : index
    %c0_52 = arith.constant 0 : index
    %61 = vector.load %arg4[%c0_50, %c4_51, %c0_52] : memref<7x7x128xf32, #tpu.memory_space<vmem>>, vector<1x1x128xf32>
    %62 = vector.shape_cast %61 : vector<1x1x128xf32> to vector<128xf32>
    %63 = vector.shape_cast %62 : vector<128xf32> to vector<1x1x128xf32>
    %64 = vector.broadcast %63 : vector<1x1x128xf32> to vector<8x8x128xf32>
    %65 = arith.mulf %60, %64 : vector<8x8x128xf32>
    %66 = arith.addf %52, %65 : vector<8x8x128xf32>
    %c0_53 = arith.constant 0 : index
    %c5 = arith.constant 5 : index
    %c0_54 = arith.constant 0 : index
    %67 = vector.load %arg7[%c0_53, %c5, %c0_54] : memref<14x22x128xf32, #tpu.memory_space<vmem>>, vector<8x8x128xf32>
    %c0_55 = arith.constant 0 : index
    %c5_56 = arith.constant 5 : index
    %c0_57 = arith.constant 0 : index
    %68 = vector.load %arg4[%c0_55, %c5_56, %c0_57] : memref<7x7x128xf32, #tpu.memory_space<vmem>>, vector<1x1x128xf32>
    %69 = vector.shape_cast %68 : vector<1x1x128xf32> to vector<128xf32>
    %70 = vector.shape_cast %69 : vector<128xf32> to vector<1x1x128xf32>
    %71 = vector.broadcast %70 : vector<1x1x128xf32> to vector<8x8x128xf32>
    %72 = arith.mulf %67, %71 : vector<8x8x128xf32>
    %73 = arith.addf %59, %72 : vector<8x8x128xf32>
    %c0_58 = arith.constant 0 : index
    %c6 = arith.constant 6 : index
    %c0_59 = arith.constant 0 : index
    %74 = vector.load %arg7[%c0_58, %c6, %c0_59] : memref<14x22x128xf32, #tpu.memory_space<vmem>>, vector<8x8x128xf32>
    %c0_60 = arith.constant 0 : index
    %c6_61 = arith.constant 6 : index
    %c0_62 = arith.constant 0 : index
    %75 = vector.load %arg4[%c0_60, %c6_61, %c0_62] : memref<7x7x128xf32, #tpu.memory_space<vmem>>, vector<1x1x128xf32>
    %76 = vector.shape_cast %75 : vector<1x1x128xf32> to vector<128xf32>
    %77 = vector.shape_cast %76 : vector<128xf32> to vector<1x1x128xf32>
    %78 = vector.broadcast %77 : vector<1x1x128xf32> to vector<8x8x128xf32>
    %79 = arith.mulf %74, %78 : vector<8x8x128xf32>
    %80 = arith.addf %66, %79 : vector<8x8x128xf32>
    %c1_63 = arith.constant 1 : index
    %c0_64 = arith.constant 0 : index
    %c0_65 = arith.constant 0 : index
    %81 = vector.load %arg7[%c1_63, %c0_64, %c0_65] : memref<14x22x128xf32, #tpu.memory_space<vmem>>, vector<8x8x128xf32>
    %c1_66 = arith.constant 1 : index
    %c0_67 = arith.constant 0 : index
    %c0_68 = arith.constant 0 : index
    %82 = vector.load %arg4[%c1_66, %c0_67, %c0_68] : memref<7x7x128xf32, #tpu.memory_space<vmem>>, vector<1x1x128xf32>
    %83 = vector.shape_cast %82 : vector<1x1x128xf32> to vector<128xf32>
    %84 = vector.shape_cast %83 : vector<128xf32> to vector<1x1x128xf32>
    %85 = vector.broadcast %84 : vector<1x1x128xf32> to vector<8x8x128xf32>
    %86 = arith.mulf %81, %85 : vector<8x8x128xf32>
    %87 = arith.addf %73, %86 : vector<8x8x128xf32>
    %c1_69 = arith.constant 1 : index
    %c1_70 = arith.constant 1 : index
    %c0_71 = arith.constant 0 : index
    %88 = vector.load %arg7[%c1_69, %c1_70, %c0_71] : memref<14x22x128xf32, #tpu.memory_space<vmem>>, vector<8x8x128xf32>
    %c1_72 = arith.constant 1 : index
    %c1_73 = arith.constant 1 : index
    %c0_74 = arith.constant 0 : index
    %89 = vector.load %arg4[%c1_72, %c1_73, %c0_74] : memref<7x7x128xf32, #tpu.memory_space<vmem>>, vector<1x1x128xf32>
    %90 = vector.shape_cast %89 : vector<1x1x128xf32> to vector<128xf32>
    %91 = vector.shape_cast %90 : vector<128xf32> to vector<1x1x128xf32>
    %92 = vector.broadcast %91 : vector<1x1x128xf32> to vector<8x8x128xf32>
    %93 = arith.mulf %88, %92 : vector<8x8x128xf32>
    %94 = arith.addf %80, %93 : vector<8x8x128xf32>
    %c1_75 = arith.constant 1 : index
    %c2_76 = arith.constant 2 : index
    %c0_77 = arith.constant 0 : index
    %95 = vector.load %arg7[%c1_75, %c2_76, %c0_77] : memref<14x22x128xf32, #tpu.memory_space<vmem>>, vector<8x8x128xf32>
    %c1_78 = arith.constant 1 : index
    %c2_79 = arith.constant 2 : index
    %c0_80 = arith.constant 0 : index
    %96 = vector.load %arg4[%c1_78, %c2_79, %c0_80] : memref<7x7x128xf32, #tpu.memory_space<vmem>>, vector<1x1x128xf32>
    %97 = vector.shape_cast %96 : vector<1x1x128xf32> to vector<128xf32>
    %98 = vector.shape_cast %97 : vector<128xf32> to vector<1x1x128xf32>
    %99 = vector.broadcast %98 : vector<1x1x128xf32> to vector<8x8x128xf32>
    %100 = arith.mulf %95, %99 : vector<8x8x128xf32>
    %101 = arith.addf %87, %100 : vector<8x8x128xf32>
    %c1_81 = arith.constant 1 : index
    %c3_82 = arith.constant 3 : index
    %c0_83 = arith.constant 0 : index
    %102 = vector.load %arg7[%c1_81, %c3_82, %c0_83] : memref<14x22x128xf32, #tpu.memory_space<vmem>>, vector<8x8x128xf32>
    %c1_84 = arith.constant 1 : index
    %c3_85 = arith.constant 3 : index
    %c0_86 = arith.constant 0 : index
    %103 = vector.load %arg4[%c1_84, %c3_85, %c0_86] : memref<7x7x128xf32, #tpu.memory_space<vmem>>, vector<1x1x128xf32>
    %104 = vector.shape_cast %103 : vector<1x1x128xf32> to vector<128xf32>
    %105 = vector.shape_cast %104 : vector<128xf32> to vector<1x1x128xf32>
    %106 = vector.broadcast %105 : vector<1x1x128xf32> to vector<8x8x128xf32>
    %107 = arith.mulf %102, %106 : vector<8x8x128xf32>
    %108 = arith.addf %94, %107 : vector<8x8x128xf32>
    %c1_87 = arith.constant 1 : index
    %c4_88 = arith.constant 4 : index
    %c0_89 = arith.constant 0 : index
    %109 = vector.load %arg7[%c1_87, %c4_88, %c0_89] : memref<14x22x128xf32, #tpu.memory_space<vmem>>, vector<8x8x128xf32>
    %c1_90 = arith.constant 1 : index
    %c4_91 = arith.constant 4 : index
    %c0_92 = arith.constant 0 : index
    %110 = vector.load %arg4[%c1_90, %c4_91, %c0_92] : memref<7x7x128xf32, #tpu.memory_space<vmem>>, vector<1x1x128xf32>
    %111 = vector.shape_cast %110 : vector<1x1x128xf32> to vector<128xf32>
    %112 = vector.shape_cast %111 : vector<128xf32> to vector<1x1x128xf32>
    %113 = vector.broadcast %112 : vector<1x1x128xf32> to vector<8x8x128xf32>
    %114 = arith.mulf %109, %113 : vector<8x8x128xf32>
    %115 = arith.addf %101, %114 : vector<8x8x128xf32>
    %c1_93 = arith.constant 1 : index
    %c5_94 = arith.constant 5 : index
    %c0_95 = arith.constant 0 : index
    %116 = vector.load %arg7[%c1_93, %c5_94, %c0_95] : memref<14x22x128xf32, #tpu.memory_space<vmem>>, vector<8x8x128xf32>
    %c1_96 = arith.constant 1 : index
    %c5_97 = arith.constant 5 : index
    %c0_98 = arith.constant 0 : index
    %117 = vector.load %arg4[%c1_96, %c5_97, %c0_98] : memref<7x7x128xf32, #tpu.memory_space<vmem>>, vector<1x1x128xf32>
    %118 = vector.shape_cast %117 : vector<1x1x128xf32> to vector<128xf32>
    %119 = vector.shape_cast %118 : vector<128xf32> to vector<1x1x128xf32>
    %120 = vector.broadcast %119 : vector<1x1x128xf32> to vector<8x8x128xf32>
    %121 = arith.mulf %116, %120 : vector<8x8x128xf32>
    %122 = arith.addf %108, %121 : vector<8x8x128xf32>
    %c1_99 = arith.constant 1 : index
    %c6_100 = arith.constant 6 : index
    %c0_101 = arith.constant 0 : index
    %123 = vector.load %arg7[%c1_99, %c6_100, %c0_101] : memref<14x22x128xf32, #tpu.memory_space<vmem>>, vector<8x8x128xf32>
    %c1_102 = arith.constant 1 : index
    %c6_103 = arith.constant 6 : index
    %c0_104 = arith.constant 0 : index
    %124 = vector.load %arg4[%c1_102, %c6_103, %c0_104] : memref<7x7x128xf32, #tpu.memory_space<vmem>>, vector<1x1x128xf32>
    %125 = vector.shape_cast %124 : vector<1x1x128xf32> to vector<128xf32>
    %126 = vector.shape_cast %125 : vector<128xf32> to vector<1x1x128xf32>
    %127 = vector.broadcast %126 : vector<1x1x128xf32> to vector<8x8x128xf32>
    %128 = arith.mulf %123, %127 : vector<8x8x128xf32>
    %129 = arith.addf %115, %128 : vector<8x8x128xf32>
    %c2_105 = arith.constant 2 : index
    %c0_106 = arith.constant 0 : index
    %c0_107 = arith.constant 0 : index
    %130 = vector.load %arg7[%c2_105, %c0_106, %c0_107] : memref<14x22x128xf32, #tpu.memory_space<vmem>>, vector<8x8x128xf32>
    %c2_108 = arith.constant 2 : index
    %c0_109 = arith.constant 0 : index
    %c0_110 = arith.constant 0 : index
    %131 = vector.load %arg4[%c2_108, %c0_109, %c0_110] : memref<7x7x128xf32, #tpu.memory_space<vmem>>, vector<1x1x128xf32>
    %132 = vector.shape_cast %131 : vector<1x1x128xf32> to vector<128xf32>
    %133 = vector.shape_cast %132 : vector<128xf32> to vector<1x1x128xf32>
    %134 = vector.broadcast %133 : vector<1x1x128xf32> to vector<8x8x128xf32>
    %135 = arith.mulf %130, %134 : vector<8x8x128xf32>
    %136 = arith.addf %122, %135 : vector<8x8x128xf32>
    %c2_111 = arith.constant 2 : index
    %c1_112 = arith.constant 1 : index
    %c0_113 = arith.constant 0 : index
    %137 = vector.load %arg7[%c2_111, %c1_112, %c0_113] : memref<14x22x128xf32, #tpu.memory_space<vmem>>, vector<8x8x128xf32>
    %c2_114 = arith.constant 2 : index
    %c1_115 = arith.constant 1 : index
    %c0_116 = arith.constant 0 : index
    %138 = vector.load %arg4[%c2_114, %c1_115, %c0_116] : memref<7x7x128xf32, #tpu.memory_space<vmem>>, vector<1x1x128xf32>
    %139 = vector.shape_cast %138 : vector<1x1x128xf32> to vector<128xf32>
    %140 = vector.shape_cast %139 : vector<128xf32> to vector<1x1x128xf32>
    %141 = vector.broadcast %140 : vector<1x1x128xf32> to vector<8x8x128xf32>
    %142 = arith.mulf %137, %141 : vector<8x8x128xf32>
    %143 = arith.addf %129, %142 : vector<8x8x128xf32>
    %c2_117 = arith.constant 2 : index
    %c2_118 = arith.constant 2 : index
    %c0_119 = arith.constant 0 : index
    %144 = vector.load %arg7[%c2_117, %c2_118, %c0_119] : memref<14x22x128xf32, #tpu.memory_space<vmem>>, vector<8x8x128xf32>
    %c2_120 = arith.constant 2 : index
    %c2_121 = arith.constant 2 : index
    %c0_122 = arith.constant 0 : index
    %145 = vector.load %arg4[%c2_120, %c2_121, %c0_122] : memref<7x7x128xf32, #tpu.memory_space<vmem>>, vector<1x1x128xf32>
    %146 = vector.shape_cast %145 : vector<1x1x128xf32> to vector<128xf32>
    %147 = vector.shape_cast %146 : vector<128xf32> to vector<1x1x128xf32>
    %148 = vector.broadcast %147 : vector<1x1x128xf32> to vector<8x8x128xf32>
    %149 = arith.mulf %144, %148 : vector<8x8x128xf32>
    %150 = arith.addf %136, %149 : vector<8x8x128xf32>
    %c2_123 = arith.constant 2 : index
    %c3_124 = arith.constant 3 : index
    %c0_125 = arith.constant 0 : index
    %151 = vector.load %arg7[%c2_123, %c3_124, %c0_125] : memref<14x22x128xf32, #tpu.memory_space<vmem>>, vector<8x8x128xf32>
    %c2_126 = arith.constant 2 : index
    %c3_127 = arith.constant 3 : index
    %c0_128 = arith.constant 0 : index
    %152 = vector.load %arg4[%c2_126, %c3_127, %c0_128] : memref<7x7x128xf32, #tpu.memory_space<vmem>>, vector<1x1x128xf32>
    %153 = vector.shape_cast %152 : vector<1x1x128xf32> to vector<128xf32>
    %154 = vector.shape_cast %153 : vector<128xf32> to vector<1x1x128xf32>
    %155 = vector.broadcast %154 : vector<1x1x128xf32> to vector<8x8x128xf32>
    %156 = arith.mulf %151, %155 : vector<8x8x128xf32>
    %157 = arith.addf %143, %156 : vector<8x8x128xf32>
    %c2_129 = arith.constant 2 : index
    %c4_130 = arith.constant 4 : index
    %c0_131 = arith.constant 0 : index
    %158 = vector.load %arg7[%c2_129, %c4_130, %c0_131] : memref<14x22x128xf32, #tpu.memory_space<vmem>>, vector<8x8x128xf32>
    %c2_132 = arith.constant 2 : index
    %c4_133 = arith.constant 4 : index
    %c0_134 = arith.constant 0 : index
    %159 = vector.load %arg4[%c2_132, %c4_133, %c0_134] : memref<7x7x128xf32, #tpu.memory_space<vmem>>, vector<1x1x128xf32>
    %160 = vector.shape_cast %159 : vector<1x1x128xf32> to vector<128xf32>
    %161 = vector.shape_cast %160 : vector<128xf32> to vector<1x1x128xf32>
    %162 = vector.broadcast %161 : vector<1x1x128xf32> to vector<8x8x128xf32>
    %163 = arith.mulf %158, %162 : vector<8x8x128xf32>
    %164 = arith.addf %150, %163 : vector<8x8x128xf32>
    %c2_135 = arith.constant 2 : index
    %c5_136 = arith.constant 5 : index
    %c0_137 = arith.constant 0 : index
    %165 = vector.load %arg7[%c2_135, %c5_136, %c0_137] : memref<14x22x128xf32, #tpu.memory_space<vmem>>, vector<8x8x128xf32>
    %c2_138 = arith.constant 2 : index
    %c5_139 = arith.constant 5 : index
    %c0_140 = arith.constant 0 : index
    %166 = vector.load %arg4[%c2_138, %c5_139, %c0_140] : memref<7x7x128xf32, #tpu.memory_space<vmem>>, vector<1x1x128xf32>
    %167 = vector.shape_cast %166 : vector<1x1x128xf32> to vector<128xf32>
    %168 = vector.shape_cast %167 : vector<128xf32> to vector<1x1x128xf32>
    %169 = vector.broadcast %168 : vector<1x1x128xf32> to vector<8x8x128xf32>
    %170 = arith.mulf %165, %169 : vector<8x8x128xf32>
    %171 = arith.addf %157, %170 : vector<8x8x128xf32>
    %c2_141 = arith.constant 2 : index
    %c6_142 = arith.constant 6 : index
    %c0_143 = arith.constant 0 : index
    %172 = vector.load %arg7[%c2_141, %c6_142, %c0_143] : memref<14x22x128xf32, #tpu.memory_space<vmem>>, vector<8x8x128xf32>
    %c2_144 = arith.constant 2 : index
    %c6_145 = arith.constant 6 : index
    %c0_146 = arith.constant 0 : index
    %173 = vector.load %arg4[%c2_144, %c6_145, %c0_146] : memref<7x7x128xf32, #tpu.memory_space<vmem>>, vector<1x1x128xf32>
    %174 = vector.shape_cast %173 : vector<1x1x128xf32> to vector<128xf32>
    %175 = vector.shape_cast %174 : vector<128xf32> to vector<1x1x128xf32>
    %176 = vector.broadcast %175 : vector<1x1x128xf32> to vector<8x8x128xf32>
    %177 = arith.mulf %172, %176 : vector<8x8x128xf32>
    %178 = arith.addf %164, %177 : vector<8x8x128xf32>
    %c3_147 = arith.constant 3 : index
    %c0_148 = arith.constant 0 : index
    %c0_149 = arith.constant 0 : index
    %179 = vector.load %arg7[%c3_147, %c0_148, %c0_149] : memref<14x22x128xf32, #tpu.memory_space<vmem>>, vector<8x8x128xf32>
    %c3_150 = arith.constant 3 : index
    %c0_151 = arith.constant 0 : index
    %c0_152 = arith.constant 0 : index
    %180 = vector.load %arg4[%c3_150, %c0_151, %c0_152] : memref<7x7x128xf32, #tpu.memory_space<vmem>>, vector<1x1x128xf32>
    %181 = vector.shape_cast %180 : vector<1x1x128xf32> to vector<128xf32>
    %182 = vector.shape_cast %181 : vector<128xf32> to vector<1x1x128xf32>
    %183 = vector.broadcast %182 : vector<1x1x128xf32> to vector<8x8x128xf32>
    %184 = arith.mulf %179, %183 : vector<8x8x128xf32>
    %185 = arith.addf %171, %184 : vector<8x8x128xf32>
    %c3_153 = arith.constant 3 : index
    %c1_154 = arith.constant 1 : index
    %c0_155 = arith.constant 0 : index
    %186 = vector.load %arg7[%c3_153, %c1_154, %c0_155] : memref<14x22x128xf32, #tpu.memory_space<vmem>>, vector<8x8x128xf32>
    %c3_156 = arith.constant 3 : index
    %c1_157 = arith.constant 1 : index
    %c0_158 = arith.constant 0 : index
    %187 = vector.load %arg4[%c3_156, %c1_157, %c0_158] : memref<7x7x128xf32, #tpu.memory_space<vmem>>, vector<1x1x128xf32>
    %188 = vector.shape_cast %187 : vector<1x1x128xf32> to vector<128xf32>
    %189 = vector.shape_cast %188 : vector<128xf32> to vector<1x1x128xf32>
    %190 = vector.broadcast %189 : vector<1x1x128xf32> to vector<8x8x128xf32>
    %191 = arith.mulf %186, %190 : vector<8x8x128xf32>
    %192 = arith.addf %178, %191 : vector<8x8x128xf32>
    %c3_159 = arith.constant 3 : index
    %c2_160 = arith.constant 2 : index
    %c0_161 = arith.constant 0 : index
    %193 = vector.load %arg7[%c3_159, %c2_160, %c0_161] : memref<14x22x128xf32, #tpu.memory_space<vmem>>, vector<8x8x128xf32>
    %c3_162 = arith.constant 3 : index
    %c2_163 = arith.constant 2 : index
    %c0_164 = arith.constant 0 : index
    %194 = vector.load %arg4[%c3_162, %c2_163, %c0_164] : memref<7x7x128xf32, #tpu.memory_space<vmem>>, vector<1x1x128xf32>
    %195 = vector.shape_cast %194 : vector<1x1x128xf32> to vector<128xf32>
    %196 = vector.shape_cast %195 : vector<128xf32> to vector<1x1x128xf32>
    %197 = vector.broadcast %196 : vector<1x1x128xf32> to vector<8x8x128xf32>
    %198 = arith.mulf %193, %197 : vector<8x8x128xf32>
    %199 = arith.addf %185, %198 : vector<8x8x128xf32>
    %c3_165 = arith.constant 3 : index
    %c3_166 = arith.constant 3 : index
    %c0_167 = arith.constant 0 : index
    %200 = vector.load %arg7[%c3_165, %c3_166, %c0_167] : memref<14x22x128xf32, #tpu.memory_space<vmem>>, vector<8x8x128xf32>
    %c3_168 = arith.constant 3 : index
    %c3_169 = arith.constant 3 : index
    %c0_170 = arith.constant 0 : index
    %201 = vector.load %arg4[%c3_168, %c3_169, %c0_170] : memref<7x7x128xf32, #tpu.memory_space<vmem>>, vector<1x1x128xf32>
    %202 = vector.shape_cast %201 : vector<1x1x128xf32> to vector<128xf32>
    %203 = vector.shape_cast %202 : vector<128xf32> to vector<1x1x128xf32>
    %204 = vector.broadcast %203 : vector<1x1x128xf32> to vector<8x8x128xf32>
    %205 = arith.mulf %200, %204 : vector<8x8x128xf32>
    %206 = arith.addf %192, %205 : vector<8x8x128xf32>
    %c3_171 = arith.constant 3 : index
    %c4_172 = arith.constant 4 : index
    %c0_173 = arith.constant 0 : index
    %207 = vector.load %arg7[%c3_171, %c4_172, %c0_173] : memref<14x22x128xf32, #tpu.memory_space<vmem>>, vector<8x8x128xf32>
    %c3_174 = arith.constant 3 : index
    %c4_175 = arith.constant 4 : index
    %c0_176 = arith.constant 0 : index
    %208 = vector.load %arg4[%c3_174, %c4_175, %c0_176] : memref<7x7x128xf32, #tpu.memory_space<vmem>>, vector<1x1x128xf32>
    %209 = vector.shape_cast %208 : vector<1x1x128xf32> to vector<128xf32>
    %210 = vector.shape_cast %209 : vector<128xf32> to vector<1x1x128xf32>
    %211 = vector.broadcast %210 : vector<1x1x128xf32> to vector<8x8x128xf32>
    %212 = arith.mulf %207, %211 : vector<8x8x128xf32>
    %213 = arith.addf %199, %212 : vector<8x8x128xf32>
    %c3_177 = arith.constant 3 : index
    %c5_178 = arith.constant 5 : index
    %c0_179 = arith.constant 0 : index
    %214 = vector.load %arg7[%c3_177, %c5_178, %c0_179] : memref<14x22x128xf32, #tpu.memory_space<vmem>>, vector<8x8x128xf32>
    %c3_180 = arith.constant 3 : index
    %c5_181 = arith.constant 5 : index
    %c0_182 = arith.constant 0 : index
    %215 = vector.load %arg4[%c3_180, %c5_181, %c0_182] : memref<7x7x128xf32, #tpu.memory_space<vmem>>, vector<1x1x128xf32>
    %216 = vector.shape_cast %215 : vector<1x1x128xf32> to vector<128xf32>
    %217 = vector.shape_cast %216 : vector<128xf32> to vector<1x1x128xf32>
    %218 = vector.broadcast %217 : vector<1x1x128xf32> to vector<8x8x128xf32>
    %219 = arith.mulf %214, %218 : vector<8x8x128xf32>
    %220 = arith.addf %206, %219 : vector<8x8x128xf32>
    %c3_183 = arith.constant 3 : index
    %c6_184 = arith.constant 6 : index
    %c0_185 = arith.constant 0 : index
    %221 = vector.load %arg7[%c3_183, %c6_184, %c0_185] : memref<14x22x128xf32, #tpu.memory_space<vmem>>, vector<8x8x128xf32>
    %c3_186 = arith.constant 3 : index
    %c6_187 = arith.constant 6 : index
    %c0_188 = arith.constant 0 : index
    %222 = vector.load %arg4[%c3_186, %c6_187, %c0_188] : memref<7x7x128xf32, #tpu.memory_space<vmem>>, vector<1x1x128xf32>
    %223 = vector.shape_cast %222 : vector<1x1x128xf32> to vector<128xf32>
    %224 = vector.shape_cast %223 : vector<128xf32> to vector<1x1x128xf32>
    %225 = vector.broadcast %224 : vector<1x1x128xf32> to vector<8x8x128xf32>
    %226 = arith.mulf %221, %225 : vector<8x8x128xf32>
    %227 = arith.addf %213, %226 : vector<8x8x128xf32>
    %c4_189 = arith.constant 4 : index
    %c0_190 = arith.constant 0 : index
    %c0_191 = arith.constant 0 : index
    %228 = vector.load %arg7[%c4_189, %c0_190, %c0_191] : memref<14x22x128xf32, #tpu.memory_space<vmem>>, vector<8x8x128xf32>
    %c4_192 = arith.constant 4 : index
    %c0_193 = arith.constant 0 : index
    %c0_194 = arith.constant 0 : index
    %229 = vector.load %arg4[%c4_192, %c0_193, %c0_194] : memref<7x7x128xf32, #tpu.memory_space<vmem>>, vector<1x1x128xf32>
    %230 = vector.shape_cast %229 : vector<1x1x128xf32> to vector<128xf32>
    %231 = vector.shape_cast %230 : vector<128xf32> to vector<1x1x128xf32>
    %232 = vector.broadcast %231 : vector<1x1x128xf32> to vector<8x8x128xf32>
    %233 = arith.mulf %228, %232 : vector<8x8x128xf32>
    %234 = arith.addf %220, %233 : vector<8x8x128xf32>
    %c4_195 = arith.constant 4 : index
    %c1_196 = arith.constant 1 : index
    %c0_197 = arith.constant 0 : index
    %235 = vector.load %arg7[%c4_195, %c1_196, %c0_197] : memref<14x22x128xf32, #tpu.memory_space<vmem>>, vector<8x8x128xf32>
    %c4_198 = arith.constant 4 : index
    %c1_199 = arith.constant 1 : index
    %c0_200 = arith.constant 0 : index
    %236 = vector.load %arg4[%c4_198, %c1_199, %c0_200] : memref<7x7x128xf32, #tpu.memory_space<vmem>>, vector<1x1x128xf32>
    %237 = vector.shape_cast %236 : vector<1x1x128xf32> to vector<128xf32>
    %238 = vector.shape_cast %237 : vector<128xf32> to vector<1x1x128xf32>
    %239 = vector.broadcast %238 : vector<1x1x128xf32> to vector<8x8x128xf32>
    %240 = arith.mulf %235, %239 : vector<8x8x128xf32>
    %241 = arith.addf %227, %240 : vector<8x8x128xf32>
    %c4_201 = arith.constant 4 : index
    %c2_202 = arith.constant 2 : index
    %c0_203 = arith.constant 0 : index
    %242 = vector.load %arg7[%c4_201, %c2_202, %c0_203] : memref<14x22x128xf32, #tpu.memory_space<vmem>>, vector<8x8x128xf32>
    %c4_204 = arith.constant 4 : index
    %c2_205 = arith.constant 2 : index
    %c0_206 = arith.constant 0 : index
    %243 = vector.load %arg4[%c4_204, %c2_205, %c0_206] : memref<7x7x128xf32, #tpu.memory_space<vmem>>, vector<1x1x128xf32>
    %244 = vector.shape_cast %243 : vector<1x1x128xf32> to vector<128xf32>
    %245 = vector.shape_cast %244 : vector<128xf32> to vector<1x1x128xf32>
    %246 = vector.broadcast %245 : vector<1x1x128xf32> to vector<8x8x128xf32>
    %247 = arith.mulf %242, %246 : vector<8x8x128xf32>
    %248 = arith.addf %234, %247 : vector<8x8x128xf32>
    %c4_207 = arith.constant 4 : index
    %c3_208 = arith.constant 3 : index
    %c0_209 = arith.constant 0 : index
    %249 = vector.load %arg7[%c4_207, %c3_208, %c0_209] : memref<14x22x128xf32, #tpu.memory_space<vmem>>, vector<8x8x128xf32>
    %c4_210 = arith.constant 4 : index
    %c3_211 = arith.constant 3 : index
    %c0_212 = arith.constant 0 : index
    %250 = vector.load %arg4[%c4_210, %c3_211, %c0_212] : memref<7x7x128xf32, #tpu.memory_space<vmem>>, vector<1x1x128xf32>
    %251 = vector.shape_cast %250 : vector<1x1x128xf32> to vector<128xf32>
    %252 = vector.shape_cast %251 : vector<128xf32> to vector<1x1x128xf32>
    %253 = vector.broadcast %252 : vector<1x1x128xf32> to vector<8x8x128xf32>
    %254 = arith.mulf %249, %253 : vector<8x8x128xf32>
    %255 = arith.addf %241, %254 : vector<8x8x128xf32>
    %c4_213 = arith.constant 4 : index
    %c4_214 = arith.constant 4 : index
    %c0_215 = arith.constant 0 : index
    %256 = vector.load %arg7[%c4_213, %c4_214, %c0_215] : memref<14x22x128xf32, #tpu.memory_space<vmem>>, vector<8x8x128xf32>
    %c4_216 = arith.constant 4 : index
    %c4_217 = arith.constant 4 : index
    %c0_218 = arith.constant 0 : index
    %257 = vector.load %arg4[%c4_216, %c4_217, %c0_218] : memref<7x7x128xf32, #tpu.memory_space<vmem>>, vector<1x1x128xf32>
    %258 = vector.shape_cast %257 : vector<1x1x128xf32> to vector<128xf32>
    %259 = vector.shape_cast %258 : vector<128xf32> to vector<1x1x128xf32>
    %260 = vector.broadcast %259 : vector<1x1x128xf32> to vector<8x8x128xf32>
    %261 = arith.mulf %256, %260 : vector<8x8x128xf32>
    %262 = arith.addf %248, %261 : vector<8x8x128xf32>
    %c4_219 = arith.constant 4 : index
    %c5_220 = arith.constant 5 : index
    %c0_221 = arith.constant 0 : index
    %263 = vector.load %arg7[%c4_219, %c5_220, %c0_221] : memref<14x22x128xf32, #tpu.memory_space<vmem>>, vector<8x8x128xf32>
    %c4_222 = arith.constant 4 : index
    %c5_223 = arith.constant 5 : index
    %c0_224 = arith.constant 0 : index
    %264 = vector.load %arg4[%c4_222, %c5_223, %c0_224] : memref<7x7x128xf32, #tpu.memory_space<vmem>>, vector<1x1x128xf32>
    %265 = vector.shape_cast %264 : vector<1x1x128xf32> to vector<128xf32>
    %266 = vector.shape_cast %265 : vector<128xf32> to vector<1x1x128xf32>
    %267 = vector.broadcast %266 : vector<1x1x128xf32> to vector<8x8x128xf32>
    %268 = arith.mulf %263, %267 : vector<8x8x128xf32>
    %269 = arith.addf %255, %268 : vector<8x8x128xf32>
    %c4_225 = arith.constant 4 : index
    %c6_226 = arith.constant 6 : index
    %c0_227 = arith.constant 0 : index
    %270 = vector.load %arg7[%c4_225, %c6_226, %c0_227] : memref<14x22x128xf32, #tpu.memory_space<vmem>>, vector<8x8x128xf32>
    %c4_228 = arith.constant 4 : index
    %c6_229 = arith.constant 6 : index
    %c0_230 = arith.constant 0 : index
    %271 = vector.load %arg4[%c4_228, %c6_229, %c0_230] : memref<7x7x128xf32, #tpu.memory_space<vmem>>, vector<1x1x128xf32>
    %272 = vector.shape_cast %271 : vector<1x1x128xf32> to vector<128xf32>
    %273 = vector.shape_cast %272 : vector<128xf32> to vector<1x1x128xf32>
    %274 = vector.broadcast %273 : vector<1x1x128xf32> to vector<8x8x128xf32>
    %275 = arith.mulf %270, %274 : vector<8x8x128xf32>
    %276 = arith.addf %262, %275 : vector<8x8x128xf32>
    %c5_231 = arith.constant 5 : index
    %c0_232 = arith.constant 0 : index
    %c0_233 = arith.constant 0 : index
    %277 = vector.load %arg7[%c5_231, %c0_232, %c0_233] : memref<14x22x128xf32, #tpu.memory_space<vmem>>, vector<8x8x128xf32>
    %c5_234 = arith.constant 5 : index
    %c0_235 = arith.constant 0 : index
    %c0_236 = arith.constant 0 : index
    %278 = vector.load %arg4[%c5_234, %c0_235, %c0_236] : memref<7x7x128xf32, #tpu.memory_space<vmem>>, vector<1x1x128xf32>
    %279 = vector.shape_cast %278 : vector<1x1x128xf32> to vector<128xf32>
    %280 = vector.shape_cast %279 : vector<128xf32> to vector<1x1x128xf32>
    %281 = vector.broadcast %280 : vector<1x1x128xf32> to vector<8x8x128xf32>
    %282 = arith.mulf %277, %281 : vector<8x8x128xf32>
    %283 = arith.addf %269, %282 : vector<8x8x128xf32>
    %c5_237 = arith.constant 5 : index
    %c1_238 = arith.constant 1 : index
    %c0_239 = arith.constant 0 : index
    %284 = vector.load %arg7[%c5_237, %c1_238, %c0_239] : memref<14x22x128xf32, #tpu.memory_space<vmem>>, vector<8x8x128xf32>
    %c5_240 = arith.constant 5 : index
    %c1_241 = arith.constant 1 : index
    %c0_242 = arith.constant 0 : index
    %285 = vector.load %arg4[%c5_240, %c1_241, %c0_242] : memref<7x7x128xf32, #tpu.memory_space<vmem>>, vector<1x1x128xf32>
    %286 = vector.shape_cast %285 : vector<1x1x128xf32> to vector<128xf32>
    %287 = vector.shape_cast %286 : vector<128xf32> to vector<1x1x128xf32>
    %288 = vector.broadcast %287 : vector<1x1x128xf32> to vector<8x8x128xf32>
    %289 = arith.mulf %284, %288 : vector<8x8x128xf32>
    %290 = arith.addf %276, %289 : vector<8x8x128xf32>
    %c5_243 = arith.constant 5 : index
    %c2_244 = arith.constant 2 : index
    %c0_245 = arith.constant 0 : index
    %291 = vector.load %arg7[%c5_243, %c2_244, %c0_245] : memref<14x22x128xf32, #tpu.memory_space<vmem>>, vector<8x8x128xf32>
    %c5_246 = arith.constant 5 : index
    %c2_247 = arith.constant 2 : index
    %c0_248 = arith.constant 0 : index
    %292 = vector.load %arg4[%c5_246, %c2_247, %c0_248] : memref<7x7x128xf32, #tpu.memory_space<vmem>>, vector<1x1x128xf32>
    %293 = vector.shape_cast %292 : vector<1x1x128xf32> to vector<128xf32>
    %294 = vector.shape_cast %293 : vector<128xf32> to vector<1x1x128xf32>
    %295 = vector.broadcast %294 : vector<1x1x128xf32> to vector<8x8x128xf32>
    %296 = arith.mulf %291, %295 : vector<8x8x128xf32>
    %297 = arith.addf %283, %296 : vector<8x8x128xf32>
    %c5_249 = arith.constant 5 : index
    %c3_250 = arith.constant 3 : index
    %c0_251 = arith.constant 0 : index
    %298 = vector.load %arg7[%c5_249, %c3_250, %c0_251] : memref<14x22x128xf32, #tpu.memory_space<vmem>>, vector<8x8x128xf32>
    %c5_252 = arith.constant 5 : index
    %c3_253 = arith.constant 3 : index
    %c0_254 = arith.constant 0 : index
    %299 = vector.load %arg4[%c5_252, %c3_253, %c0_254] : memref<7x7x128xf32, #tpu.memory_space<vmem>>, vector<1x1x128xf32>
    %300 = vector.shape_cast %299 : vector<1x1x128xf32> to vector<128xf32>
    %301 = vector.shape_cast %300 : vector<128xf32> to vector<1x1x128xf32>
    %302 = vector.broadcast %301 : vector<1x1x128xf32> to vector<8x8x128xf32>
    %303 = arith.mulf %298, %302 : vector<8x8x128xf32>
    %304 = arith.addf %290, %303 : vector<8x8x128xf32>
    %c5_255 = arith.constant 5 : index
    %c4_256 = arith.constant 4 : index
    %c0_257 = arith.constant 0 : index
    %305 = vector.load %arg7[%c5_255, %c4_256, %c0_257] : memref<14x22x128xf32, #tpu.memory_space<vmem>>, vector<8x8x128xf32>
    %c5_258 = arith.constant 5 : index
    %c4_259 = arith.constant 4 : index
    %c0_260 = arith.constant 0 : index
    %306 = vector.load %arg4[%c5_258, %c4_259, %c0_260] : memref<7x7x128xf32, #tpu.memory_space<vmem>>, vector<1x1x128xf32>
    %307 = vector.shape_cast %306 : vector<1x1x128xf32> to vector<128xf32>
    %308 = vector.shape_cast %307 : vector<128xf32> to vector<1x1x128xf32>
    %309 = vector.broadcast %308 : vector<1x1x128xf32> to vector<8x8x128xf32>
    %310 = arith.mulf %305, %309 : vector<8x8x128xf32>
    %311 = arith.addf %297, %310 : vector<8x8x128xf32>
    %c5_261 = arith.constant 5 : index
    %c5_262 = arith.constant 5 : index
    %c0_263 = arith.constant 0 : index
    %312 = vector.load %arg7[%c5_261, %c5_262, %c0_263] : memref<14x22x128xf32, #tpu.memory_space<vmem>>, vector<8x8x128xf32>
    %c5_264 = arith.constant 5 : index
    %c5_265 = arith.constant 5 : index
    %c0_266 = arith.constant 0 : index
    %313 = vector.load %arg4[%c5_264, %c5_265, %c0_266] : memref<7x7x128xf32, #tpu.memory_space<vmem>>, vector<1x1x128xf32>
    %314 = vector.shape_cast %313 : vector<1x1x128xf32> to vector<128xf32>
    %315 = vector.shape_cast %314 : vector<128xf32> to vector<1x1x128xf32>
    %316 = vector.broadcast %315 : vector<1x1x128xf32> to vector<8x8x128xf32>
    %317 = arith.mulf %312, %316 : vector<8x8x128xf32>
    %318 = arith.addf %304, %317 : vector<8x8x128xf32>
    %c5_267 = arith.constant 5 : index
    %c6_268 = arith.constant 6 : index
    %c0_269 = arith.constant 0 : index
    %319 = vector.load %arg7[%c5_267, %c6_268, %c0_269] : memref<14x22x128xf32, #tpu.memory_space<vmem>>, vector<8x8x128xf32>
    %c5_270 = arith.constant 5 : index
    %c6_271 = arith.constant 6 : index
    %c0_272 = arith.constant 0 : index
    %320 = vector.load %arg4[%c5_270, %c6_271, %c0_272] : memref<7x7x128xf32, #tpu.memory_space<vmem>>, vector<1x1x128xf32>
    %321 = vector.shape_cast %320 : vector<1x1x128xf32> to vector<128xf32>
    %322 = vector.shape_cast %321 : vector<128xf32> to vector<1x1x128xf32>
    %323 = vector.broadcast %322 : vector<1x1x128xf32> to vector<8x8x128xf32>
    %324 = arith.mulf %319, %323 : vector<8x8x128xf32>
    %325 = arith.addf %311, %324 : vector<8x8x128xf32>
    %c6_273 = arith.constant 6 : index
    %c0_274 = arith.constant 0 : index
    %c0_275 = arith.constant 0 : index
    %326 = vector.load %arg7[%c6_273, %c0_274, %c0_275] : memref<14x22x128xf32, #tpu.memory_space<vmem>>, vector<8x8x128xf32>
    %c6_276 = arith.constant 6 : index
    %c0_277 = arith.constant 0 : index
    %c0_278 = arith.constant 0 : index
    %327 = vector.load %arg4[%c6_276, %c0_277, %c0_278] : memref<7x7x128xf32, #tpu.memory_space<vmem>>, vector<1x1x128xf32>
    %328 = vector.shape_cast %327 : vector<1x1x128xf32> to vector<128xf32>
    %329 = vector.shape_cast %328 : vector<128xf32> to vector<1x1x128xf32>
    %330 = vector.broadcast %329 : vector<1x1x128xf32> to vector<8x8x128xf32>
    %331 = arith.mulf %326, %330 : vector<8x8x128xf32>
    %332 = arith.addf %318, %331 : vector<8x8x128xf32>
    %c6_279 = arith.constant 6 : index
    %c1_280 = arith.constant 1 : index
    %c0_281 = arith.constant 0 : index
    %333 = vector.load %arg7[%c6_279, %c1_280, %c0_281] : memref<14x22x128xf32, #tpu.memory_space<vmem>>, vector<8x8x128xf32>
    %c6_282 = arith.constant 6 : index
    %c1_283 = arith.constant 1 : index
    %c0_284 = arith.constant 0 : index
    %334 = vector.load %arg4[%c6_282, %c1_283, %c0_284] : memref<7x7x128xf32, #tpu.memory_space<vmem>>, vector<1x1x128xf32>
    %335 = vector.shape_cast %334 : vector<1x1x128xf32> to vector<128xf32>
    %336 = vector.shape_cast %335 : vector<128xf32> to vector<1x1x128xf32>
    %337 = vector.broadcast %336 : vector<1x1x128xf32> to vector<8x8x128xf32>
    %338 = arith.mulf %333, %337 : vector<8x8x128xf32>
    %339 = arith.addf %325, %338 : vector<8x8x128xf32>
    %c6_285 = arith.constant 6 : index
    %c2_286 = arith.constant 2 : index
    %c0_287 = arith.constant 0 : index
    %340 = vector.load %arg7[%c6_285, %c2_286, %c0_287] : memref<14x22x128xf32, #tpu.memory_space<vmem>>, vector<8x8x128xf32>
    %c6_288 = arith.constant 6 : index
    %c2_289 = arith.constant 2 : index
    %c0_290 = arith.constant 0 : index
    %341 = vector.load %arg4[%c6_288, %c2_289, %c0_290] : memref<7x7x128xf32, #tpu.memory_space<vmem>>, vector<1x1x128xf32>
    %342 = vector.shape_cast %341 : vector<1x1x128xf32> to vector<128xf32>
    %343 = vector.shape_cast %342 : vector<128xf32> to vector<1x1x128xf32>
    %344 = vector.broadcast %343 : vector<1x1x128xf32> to vector<8x8x128xf32>
    %345 = arith.mulf %340, %344 : vector<8x8x128xf32>
    %346 = arith.addf %332, %345 : vector<8x8x128xf32>
    %c6_291 = arith.constant 6 : index
    %c3_292 = arith.constant 3 : index
    %c0_293 = arith.constant 0 : index
    %347 = vector.load %arg7[%c6_291, %c3_292, %c0_293] : memref<14x22x128xf32, #tpu.memory_space<vmem>>, vector<8x8x128xf32>
    %c6_294 = arith.constant 6 : index
    %c3_295 = arith.constant 3 : index
    %c0_296 = arith.constant 0 : index
    %348 = vector.load %arg4[%c6_294, %c3_295, %c0_296] : memref<7x7x128xf32, #tpu.memory_space<vmem>>, vector<1x1x128xf32>
    %349 = vector.shape_cast %348 : vector<1x1x128xf32> to vector<128xf32>
    %350 = vector.shape_cast %349 : vector<128xf32> to vector<1x1x128xf32>
    %351 = vector.broadcast %350 : vector<1x1x128xf32> to vector<8x8x128xf32>
    %352 = arith.mulf %347, %351 : vector<8x8x128xf32>
    %353 = arith.addf %339, %352 : vector<8x8x128xf32>
    %c6_297 = arith.constant 6 : index
    %c4_298 = arith.constant 4 : index
    %c0_299 = arith.constant 0 : index
    %354 = vector.load %arg7[%c6_297, %c4_298, %c0_299] : memref<14x22x128xf32, #tpu.memory_space<vmem>>, vector<8x8x128xf32>
    %c6_300 = arith.constant 6 : index
    %c4_301 = arith.constant 4 : index
    %c0_302 = arith.constant 0 : index
    %355 = vector.load %arg4[%c6_300, %c4_301, %c0_302] : memref<7x7x128xf32, #tpu.memory_space<vmem>>, vector<1x1x128xf32>
    %356 = vector.shape_cast %355 : vector<1x1x128xf32> to vector<128xf32>
    %357 = vector.shape_cast %356 : vector<128xf32> to vector<1x1x128xf32>
    %358 = vector.broadcast %357 : vector<1x1x128xf32> to vector<8x8x128xf32>
    %359 = arith.mulf %354, %358 : vector<8x8x128xf32>
    %360 = arith.addf %346, %359 : vector<8x8x128xf32>
    %c6_303 = arith.constant 6 : index
    %c5_304 = arith.constant 5 : index
    %c0_305 = arith.constant 0 : index
    %361 = vector.load %arg7[%c6_303, %c5_304, %c0_305] : memref<14x22x128xf32, #tpu.memory_space<vmem>>, vector<8x8x128xf32>
    %c6_306 = arith.constant 6 : index
    %c5_307 = arith.constant 5 : index
    %c0_308 = arith.constant 0 : index
    %362 = vector.load %arg4[%c6_306, %c5_307, %c0_308] : memref<7x7x128xf32, #tpu.memory_space<vmem>>, vector<1x1x128xf32>
    %363 = vector.shape_cast %362 : vector<1x1x128xf32> to vector<128xf32>
    %364 = vector.shape_cast %363 : vector<128xf32> to vector<1x1x128xf32>
    %365 = vector.broadcast %364 : vector<1x1x128xf32> to vector<8x8x128xf32>
    %366 = arith.mulf %361, %365 : vector<8x8x128xf32>
    %367 = arith.addf %353, %366 : vector<8x8x128xf32>
    %c6_309 = arith.constant 6 : index
    %c6_310 = arith.constant 6 : index
    %c0_311 = arith.constant 0 : index
    %368 = vector.load %arg7[%c6_309, %c6_310, %c0_311] : memref<14x22x128xf32, #tpu.memory_space<vmem>>, vector<8x8x128xf32>
    %c6_312 = arith.constant 6 : index
    %c6_313 = arith.constant 6 : index
    %c0_314 = arith.constant 0 : index
    %369 = vector.load %arg4[%c6_312, %c6_313, %c0_314] : memref<7x7x128xf32, #tpu.memory_space<vmem>>, vector<1x1x128xf32>
    %370 = vector.shape_cast %369 : vector<1x1x128xf32> to vector<128xf32>
    %371 = vector.shape_cast %370 : vector<128xf32> to vector<1x1x128xf32>
    %372 = vector.broadcast %371 : vector<1x1x128xf32> to vector<8x8x128xf32>
    %373 = arith.mulf %368, %372 : vector<8x8x128xf32>
    %374 = arith.addf %360, %373 : vector<8x8x128xf32>
    %375 = arith.addf %374, %367 : vector<8x8x128xf32>
    %376 = vector.shape_cast %29 : vector<128xf32> to vector<1x1x128xf32>
    %377 = vector.broadcast %376 : vector<1x1x128xf32> to vector<8x8x128xf32>
    %378 = arith.addf %375, %377 : vector<8x8x128xf32>
    %379 = arith.negf %378 : vector<8x8x128xf32>
    %380 = math.exp %379 : vector<8x8x128xf32>
    %cst_315 = arith.constant 1.000000e+00 : f32
    %381 = vector.broadcast %cst_315 : f32 to vector<8x8x128xf32>
    %382 = arith.addf %381, %380 : vector<8x8x128xf32>
    %383 = arith.divf %381, %382 : vector<8x8x128xf32>
    %c0_316 = arith.constant 0 : index
    %c0_317 = arith.constant 0 : index
    %c0_318 = arith.constant 0 : index
    %c0_319 = arith.constant 0 : index
    %384 = vector.load %arg2[%c0_316, %c0_317, %c0_318, %c0_319] : memref<1x8x16x128xf32, #tpu.memory_space<vmem>>, vector<1x8x8x128xf32>
    %385 = vector.shape_cast %384 : vector<1x8x8x128xf32> to vector<8x8x128xf32>
    %386 = arith.mulf %385, %383 : vector<8x8x128xf32>
    %c0_320 = arith.constant 0 : index
    %c0_321 = arith.constant 0 : index
    %c0_322 = arith.constant 0 : index
    %c0_323 = arith.constant 0 : index
    %387 = vector.load %arg6[%c0_320, %c0_321, %c0_322, %c0_323] : memref<1x8x16x128xf32, #tpu.memory_space<vmem>>, vector<1x8x8x128xf32>
    %388 = vector.shape_cast %387 : vector<1x8x8x128xf32> to vector<8x8x128xf32>
    %389 = vector.shape_cast %386 : vector<8x8x128xf32> to vector<1x8x8x128xf32>
    tpu.vector_store %arg6[%c0_320, %c0_321, %c0_322, %c0_323], %389 {strides = array<i32>} : memref<1x8x16x128xf32, #tpu.memory_space<vmem>>, vector<1x8x8x128xf32>,
    %cst_324 = arith.constant 0.000000e+00 : f32
    %390 = vector.broadcast %cst_324 : f32 to vector<8x8x128xf32>
    %cst_325 = arith.constant 0.000000e+00 : f32
    %391 = vector.broadcast %cst_325 : f32 to vector<8x8x128xf32>
    %c0_326 = arith.constant 0 : index
    %c8 = arith.constant 8 : index
    %c0_327 = arith.constant 0 : index
    %392 = vector.load %arg7[%c0_326, %c8, %c0_327] : memref<14x22x128xf32, #tpu.memory_space<vmem>>, vector<8x8x128xf32>
    %c0_328 = arith.constant 0 : index
    %c0_329 = arith.constant 0 : index
    %c0_330 = arith.constant 0 : index
    %393 = vector.load %arg4[%c0_328, %c0_329, %c0_330] : memref<7x7x128xf32, #tpu.memory_space<vmem>>, vector<1x1x128xf32>
    %394 = vector.shape_cast %393 : vector<1x1x128xf32> to vector<128xf32>
    %395 = vector.shape_cast %394 : vector<128xf32> to vector<1x1x128xf32>
    %396 = vector.broadcast %395 : vector<1x1x128xf32> to vector<8x8x128xf32>
    %397 = arith.mulf %392, %396 : vector<8x8x128xf32>
    %398 = arith.addf %390, %397 : vector<8x8x128xf32>
    %c0_331 = arith.constant 0 : index
    %c9 = arith.constant 9 : index
    %c0_332 = arith.constant 0 : index
    %399 = vector.load %arg7[%c0_331, %c9, %c0_332] : memref<14x22x128xf32, #tpu.memory_space<vmem>>, vector<8x8x128xf32>
    %c0_333 = arith.constant 0 : index
    %c1_334 = arith.constant 1 : index
    %c0_335 = arith.constant 0 : index
    %400 = vector.load %arg4[%c0_333, %c1_334, %c0_335] : memref<7x7x128xf32, #tpu.memory_space<vmem>>, vector<1x1x128xf32>
    %401 = vector.shape_cast %400 : vector<1x1x128xf32> to vector<128xf32>
    %402 = vector.shape_cast %401 : vector<128xf32> to vector<1x1x128xf32>
    %403 = vector.broadcast %402 : vector<1x1x128xf32> to vector<8x8x128xf32>
    %404 = arith.mulf %399, %403 : vector<8x8x128xf32>
    %405 = arith.addf %391, %404 : vector<8x8x128xf32>
    %c0_336 = arith.constant 0 : index
    %c10 = arith.constant 10 : index
    %c0_337 = arith.constant 0 : index
    %406 = vector.load %arg7[%c0_336, %c10, %c0_337] : memref<14x22x128xf32, #tpu.memory_space<vmem>>, vector<8x8x128xf32>
    %c0_338 = arith.constant 0 : index
    %c2_339 = arith.constant 2 : index
    %c0_340 = arith.constant 0 : index
    %407 = vector.load %arg4[%c0_338, %c2_339, %c0_340] : memref<7x7x128xf32, #tpu.memory_space<vmem>>, vector<1x1x128xf32>
    %408 = vector.shape_cast %407 : vector<1x1x128xf32> to vector<128xf32>
    %409 = vector.shape_cast %408 : vector<128xf32> to vector<1x1x128xf32>
    %410 = vector.broadcast %409 : vector<1x1x128xf32> to vector<8x8x128xf32>
    %411 = arith.mulf %406, %410 : vector<8x8x128xf32>
    %412 = arith.addf %398, %411 : vector<8x8x128xf32>
    %c0_341 = arith.constant 0 : index
    %c11 = arith.constant 11 : index
    %c0_342 = arith.constant 0 : index
    %413 = vector.load %arg7[%c0_341, %c11, %c0_342] : memref<14x22x128xf32, #tpu.memory_space<vmem>>, vector<8x8x128xf32>
    %c0_343 = arith.constant 0 : index
    %c3_344 = arith.constant 3 : index
    %c0_345 = arith.constant 0 : index
    %414 = vector.load %arg4[%c0_343, %c3_344, %c0_345] : memref<7x7x128xf32, #tpu.memory_space<vmem>>, vector<1x1x128xf32>
    %415 = vector.shape_cast %414 : vector<1x1x128xf32> to vector<128xf32>
    %416 = vector.shape_cast %415 : vector<128xf32> to vector<1x1x128xf32>
    %417 = vector.broadcast %416 : vector<1x1x128xf32> to vector<8x8x128xf32>
    %418 = arith.mulf %413, %417 : vector<8x8x128xf32>
    %419 = arith.addf %405, %418 : vector<8x8x128xf32>
    %c0_346 = arith.constant 0 : index
    %c12 = arith.constant 12 : index
    %c0_347 = arith.constant 0 : index
    %420 = vector.load %arg7[%c0_346, %c12, %c0_347] : memref<14x22x128xf32, #tpu.memory_space<vmem>>, vector<8x8x128xf32>
    %c0_348 = arith.constant 0 : index
    %c4_349 = arith.constant 4 : index
    %c0_350 = arith.constant 0 : index
    %421 = vector.load %arg4[%c0_348, %c4_349, %c0_350] : memref<7x7x128xf32, #tpu.memory_space<vmem>>, vector<1x1x128xf32>
    %422 = vector.shape_cast %421 : vector<1x1x128xf32> to vector<128xf32>
    %423 = vector.shape_cast %422 : vector<128xf32> to vector<1x1x128xf32>
    %424 = vector.broadcast %423 : vector<1x1x128xf32> to vector<8x8x128xf32>
    %425 = arith.mulf %420, %424 : vector<8x8x128xf32>
    %426 = arith.addf %412, %425 : vector<8x8x128xf32>
    %c0_351 = arith.constant 0 : index
    %c13 = arith.constant 13 : index
    %c0_352 = arith.constant 0 : index
    %427 = vector.load %arg7[%c0_351, %c13, %c0_352] : memref<14x22x128xf32, #tpu.memory_space<vmem>>, vector<8x8x128xf32>
    %c0_353 = arith.constant 0 : index
    %c5_354 = arith.constant 5 : index
    %c0_355 = arith.constant 0 : index
    %428 = vector.load %arg4[%c0_353, %c5_354, %c0_355] : memref<7x7x128xf32, #tpu.memory_space<vmem>>, vector<1x1x128xf32>
    %429 = vector.shape_cast %428 : vector<1x1x128xf32> to vector<128xf32>
    %430 = vector.shape_cast %429 : vector<128xf32> to vector<1x1x128xf32>
    %431 = vector.broadcast %430 : vector<1x1x128xf32> to vector<8x8x128xf32>
    %432 = arith.mulf %427, %431 : vector<8x8x128xf32>
    %433 = arith.addf %419, %432 : vector<8x8x128xf32>
    %c0_356 = arith.constant 0 : index
    %c14 = arith.constant 14 : index
    %c0_357 = arith.constant 0 : index
    %434 = vector.load %arg7[%c0_356, %c14, %c0_357] : memref<14x22x128xf32, #tpu.memory_space<vmem>>, vector<8x8x128xf32>
    %c0_358 = arith.constant 0 : index
    %c6_359 = arith.constant 6 : index
    %c0_360 = arith.constant 0 : index
    %435 = vector.load %arg4[%c0_358, %c6_359, %c0_360] : memref<7x7x128xf32, #tpu.memory_space<vmem>>, vector<1x1x128xf32>
    %436 = vector.shape_cast %435 : vector<1x1x128xf32> to vector<128xf32>
    %437 = vector.shape_cast %436 : vector<128xf32> to vector<1x1x128xf32>
    %438 = vector.broadcast %437 : vector<1x1x128xf32> to vector<8x8x128xf32>
    %439 = arith.mulf %434, %438 : vector<8x8x128xf32>
    %440 = arith.addf %426, %439 : vector<8x8x128xf32>
    %c1_361 = arith.constant 1 : index
    %c8_362 = arith.constant 8 : index
    %c0_363 = arith.constant 0 : index
    %441 = vector.load %arg7[%c1_361, %c8_362, %c0_363] : memref<14x22x128xf32, #tpu.memory_space<vmem>>, vector<8x8x128xf32>
    %c1_364 = arith.constant 1 : index
    %c0_365 = arith.constant 0 : index
    %c0_366 = arith.constant 0 : index
    %442 = vector.load %arg4[%c1_364, %c0_365, %c0_366] : memref<7x7x128xf32, #tpu.memory_space<vmem>>, vector<1x1x128xf32>
    %443 = vector.shape_cast %442 : vector<1x1x128xf32> to vector<128xf32>
    %444 = vector.shape_cast %443 : vector<128xf32> to vector<1x1x128xf32>
    %445 = vector.broadcast %444 : vector<1x1x128xf32> to vector<8x8x128xf32>
    %446 = arith.mulf %441, %445 : vector<8x8x128xf32>
    %447 = arith.addf %433, %446 : vector<8x8x128xf32>
    %c1_367 = arith.constant 1 : index
    %c9_368 = arith.constant 9 : index
    %c0_369 = arith.constant 0 : index
    %448 = vector.load %arg7[%c1_367, %c9_368, %c0_369] : memref<14x22x128xf32, #tpu.memory_space<vmem>>, vector<8x8x128xf32>
    %c1_370 = arith.constant 1 : index
    %c1_371 = arith.constant 1 : index
    %c0_372 = arith.constant 0 : index
    %449 = vector.load %arg4[%c1_370, %c1_371, %c0_372] : memref<7x7x128xf32, #tpu.memory_space<vmem>>, vector<1x1x128xf32>
    %450 = vector.shape_cast %449 : vector<1x1x128xf32> to vector<128xf32>
    %451 = vector.shape_cast %450 : vector<128xf32> to vector<1x1x128xf32>
    %452 = vector.broadcast %451 : vector<1x1x128xf32> to vector<8x8x128xf32>
    %453 = arith.mulf %448, %452 : vector<8x8x128xf32>
    %454 = arith.addf %440, %453 : vector<8x8x128xf32>
    %c1_373 = arith.constant 1 : index
    %c10_374 = arith.constant 10 : index
    %c0_375 = arith.constant 0 : index
    %455 = vector.load %arg7[%c1_373, %c10_374, %c0_375] : memref<14x22x128xf32, #tpu.memory_space<vmem>>, vector<8x8x128xf32>
    %c1_376 = arith.constant 1 : index
    %c2_377 = arith.constant 2 : index
    %c0_378 = arith.constant 0 : index
    %456 = vector.load %arg4[%c1_376, %c2_377, %c0_378] : memref<7x7x128xf32, #tpu.memory_space<vmem>>, vector<1x1x128xf32>
    %457 = vector.shape_cast %456 : vector<1x1x128xf32> to vector<128xf32>
    %458 = vector.shape_cast %457 : vector<128xf32> to vector<1x1x128xf32>
    %459 = vector.broadcast %458 : vector<1x1x128xf32> to vector<8x8x128xf32>
    %460 = arith.mulf %455, %459 : vector<8x8x128xf32>
    %461 = arith.addf %447, %460 : vector<8x8x128xf32>
    %c1_379 = arith.constant 1 : index
    %c11_380 = arith.constant 11 : index
    %c0_381 = arith.constant 0 : index
    %462 = vector.load %arg7[%c1_379, %c11_380, %c0_381] : memref<14x22x128xf32, #tpu.memory_space<vmem>>, vector<8x8x128xf32>
    %c1_382 = arith.constant 1 : index
    %c3_383 = arith.constant 3 : index
    %c0_384 = arith.constant 0 : index
    %463 = vector.load %arg4[%c1_382, %c3_383, %c0_384] : memref<7x7x128xf32, #tpu.memory_space<vmem>>, vector<1x1x128xf32>
    %464 = vector.shape_cast %463 : vector<1x1x128xf32> to vector<128xf32>
    %465 = vector.shape_cast %464 : vector<128xf32> to vector<1x1x128xf32>
    %466 = vector.broadcast %465 : vector<1x1x128xf32> to vector<8x8x128xf32>
    %467 = arith.mulf %462, %466 : vector<8x8x128xf32>
    %468 = arith.addf %454, %467 : vector<8x8x128xf32>
    %c1_385 = arith.constant 1 : index
    %c12_386 = arith.constant 12 : index
    %c0_387 = arith.constant 0 : index
    %469 = vector.load %arg7[%c1_385, %c12_386, %c0_387] : memref<14x22x128xf32, #tpu.memory_space<vmem>>, vector<8x8x128xf32>
    %c1_388 = arith.constant 1 : index
    %c4_389 = arith.constant 4 : index
    %c0_390 = arith.constant 0 : index
    %470 = vector.load %arg4[%c1_388, %c4_389, %c0_390] : memref<7x7x128xf32, #tpu.memory_space<vmem>>, vector<1x1x128xf32>
    %471 = vector.shape_cast %470 : vector<1x1x128xf32> to vector<128xf32>
    %472 = vector.shape_cast %471 : vector<128xf32> to vector<1x1x128xf32>
    %473 = vector.broadcast %472 : vector<1x1x128xf32> to vector<8x8x128xf32>
    %474 = arith.mulf %469, %473 : vector<8x8x128xf32>
    %475 = arith.addf %461, %474 : vector<8x8x128xf32>
    %c1_391 = arith.constant 1 : index
    %c13_392 = arith.constant 13 : index
    %c0_393 = arith.constant 0 : index
    %476 = vector.load %arg7[%c1_391, %c13_392, %c0_393] : memref<14x22x128xf32, #tpu.memory_space<vmem>>, vector<8x8x128xf32>
    %c1_394 = arith.constant 1 : index
    %c5_395 = arith.constant 5 : index
    %c0_396 = arith.constant 0 : index
    %477 = vector.load %arg4[%c1_394, %c5_395, %c0_396] : memref<7x7x128xf32, #tpu.memory_space<vmem>>, vector<1x1x128xf32>
    %478 = vector.shape_cast %477 : vector<1x1x128xf32> to vector<128xf32>
    %479 = vector.shape_cast %478 : vector<128xf32> to vector<1x1x128xf32>
    %480 = vector.broadcast %479 : vector<1x1x128xf32> to vector<8x8x128xf32>
    %481 = arith.mulf %476, %480 : vector<8x8x128xf32>
    %482 = arith.addf %468, %481 : vector<8x8x128xf32>
    %c1_397 = arith.constant 1 : index
    %c14_398 = arith.constant 14 : index
    %c0_399 = arith.constant 0 : index
    %483 = vector.load %arg7[%c1_397, %c14_398, %c0_399] : memref<14x22x128xf32, #tpu.memory_space<vmem>>, vector<8x8x128xf32>
    %c1_400 = arith.constant 1 : index
    %c6_401 = arith.constant 6 : index
    %c0_402 = arith.constant 0 : index
    %484 = vector.load %arg4[%c1_400, %c6_401, %c0_402] : memref<7x7x128xf32, #tpu.memory_space<vmem>>, vector<1x1x128xf32>
    %485 = vector.shape_cast %484 : vector<1x1x128xf32> to vector<128xf32>
    %486 = vector.shape_cast %485 : vector<128xf32> to vector<1x1x128xf32>
    %487 = vector.broadcast %486 : vector<1x1x128xf32> to vector<8x8x128xf32>
    %488 = arith.mulf %483, %487 : vector<8x8x128xf32>
    %489 = arith.addf %475, %488 : vector<8x8x128xf32>
    %c2_403 = arith.constant 2 : index
    %c8_404 = arith.constant 8 : index
    %c0_405 = arith.constant 0 : index
    %490 = vector.load %arg7[%c2_403, %c8_404, %c0_405] : memref<14x22x128xf32, #tpu.memory_space<vmem>>, vector<8x8x128xf32>
    %c2_406 = arith.constant 2 : index
    %c0_407 = arith.constant 0 : index
    %c0_408 = arith.constant 0 : index
    %491 = vector.load %arg4[%c2_406, %c0_407, %c0_408] : memref<7x7x128xf32, #tpu.memory_space<vmem>>, vector<1x1x128xf32>
    %492 = vector.shape_cast %491 : vector<1x1x128xf32> to vector<128xf32>
    %493 = vector.shape_cast %492 : vector<128xf32> to vector<1x1x128xf32>
    %494 = vector.broadcast %493 : vector<1x1x128xf32> to vector<8x8x128xf32>
    %495 = arith.mulf %490, %494 : vector<8x8x128xf32>
    %496 = arith.addf %482, %495 : vector<8x8x128xf32>
    %c2_409 = arith.constant 2 : index
    %c9_410 = arith.constant 9 : index
    %c0_411 = arith.constant 0 : index
    %497 = vector.load %arg7[%c2_409, %c9_410, %c0_411] : memref<14x22x128xf32, #tpu.memory_space<vmem>>, vector<8x8x128xf32>
    %c2_412 = arith.constant 2 : index
    %c1_413 = arith.constant 1 : index
    %c0_414 = arith.constant 0 : index
    %498 = vector.load %arg4[%c2_412, %c1_413, %c0_414] : memref<7x7x128xf32, #tpu.memory_space<vmem>>, vector<1x1x128xf32>
    %499 = vector.shape_cast %498 : vector<1x1x128xf32> to vector<128xf32>
    %500 = vector.shape_cast %499 : vector<128xf32> to vector<1x1x128xf32>
    %501 = vector.broadcast %500 : vector<1x1x128xf32> to vector<8x8x128xf32>
    %502 = arith.mulf %497, %501 : vector<8x8x128xf32>
    %503 = arith.addf %489, %502 : vector<8x8x128xf32>
    %c2_415 = arith.constant 2 : index
    %c10_416 = arith.constant 10 : index
    %c0_417 = arith.constant 0 : index
    %504 = vector.load %arg7[%c2_415, %c10_416, %c0_417] : memref<14x22x128xf32, #tpu.memory_space<vmem>>, vector<8x8x128xf32>
    %c2_418 = arith.constant 2 : index
    %c2_419 = arith.constant 2 : index
    %c0_420 = arith.constant 0 : index
    %505 = vector.load %arg4[%c2_418, %c2_419, %c0_420] : memref<7x7x128xf32, #tpu.memory_space<vmem>>, vector<1x1x128xf32>
    %506 = vector.shape_cast %505 : vector<1x1x128xf32> to vector<128xf32>
    %507 = vector.shape_cast %506 : vector<128xf32> to vector<1x1x128xf32>
    %508 = vector.broadcast %507 : vector<1x1x128xf32> to vector<8x8x128xf32>
    %509 = arith.mulf %504, %508 : vector<8x8x128xf32>
    %510 = arith.addf %496, %509 : vector<8x8x128xf32>
    %c2_421 = arith.constant 2 : index
    %c11_422 = arith.constant 11 : index
    %c0_423 = arith.constant 0 : index
    %511 = vector.load %arg7[%c2_421, %c11_422, %c0_423] : memref<14x22x128xf32, #tpu.memory_space<vmem>>, vector<8x8x128xf32>
    %c2_424 = arith.constant 2 : index
    %c3_425 = arith.constant 3 : index
    %c0_426 = arith.constant 0 : index
    %512 = vector.load %arg4[%c2_424, %c3_425, %c0_426] : memref<7x7x128xf32, #tpu.memory_space<vmem>>, vector<1x1x128xf32>
    %513 = vector.shape_cast %512 : vector<1x1x128xf32> to vector<128xf32>
    %514 = vector.shape_cast %513 : vector<128xf32> to vector<1x1x128xf32>
    %515 = vector.broadcast %514 : vector<1x1x128xf32> to vector<8x8x128xf32>
    %516 = arith.mulf %511, %515 : vector<8x8x128xf32>
    %517 = arith.addf %503, %516 : vector<8x8x128xf32>
    %c2_427 = arith.constant 2 : index
    %c12_428 = arith.constant 12 : index
    %c0_429 = arith.constant 0 : index
    %518 = vector.load %arg7[%c2_427, %c12_428, %c0_429] : memref<14x22x128xf32, #tpu.memory_space<vmem>>, vector<8x8x128xf32>
    %c2_430 = arith.constant 2 : index
    %c4_431 = arith.constant 4 : index
    %c0_432 = arith.constant 0 : index
    %519 = vector.load %arg4[%c2_430, %c4_431, %c0_432] : memref<7x7x128xf32, #tpu.memory_space<vmem>>, vector<1x1x128xf32>
    %520 = vector.shape_cast %519 : vector<1x1x128xf32> to vector<128xf32>
    %521 = vector.shape_cast %520 : vector<128xf32> to vector<1x1x128xf32>
    %522 = vector.broadcast %521 : vector<1x1x128xf32> to vector<8x8x128xf32>
    %523 = arith.mulf %518, %522 : vector<8x8x128xf32>
    %524 = arith.addf %510, %523 : vector<8x8x128xf32>
    %c2_433 = arith.constant 2 : index
    %c13_434 = arith.constant 13 : index
    %c0_435 = arith.constant 0 : index
    %525 = vector.load %arg7[%c2_433, %c13_434, %c0_435] : memref<14x22x128xf32, #tpu.memory_space<vmem>>, vector<8x8x128xf32>
    %c2_436 = arith.constant 2 : index
    %c5_437 = arith.constant 5 : index
    %c0_438 = arith.constant 0 : index
    %526 = vector.load %arg4[%c2_436, %c5_437, %c0_438] : memref<7x7x128xf32, #tpu.memory_space<vmem>>, vector<1x1x128xf32>
    %527 = vector.shape_cast %526 : vector<1x1x128xf32> to vector<128xf32>
    %528 = vector.shape_cast %527 : vector<128xf32> to vector<1x1x128xf32>
    %529 = vector.broadcast %528 : vector<1x1x128xf32> to vector<8x8x128xf32>
    %530 = arith.mulf %525, %529 : vector<8x8x128xf32>
    %531 = arith.addf %517, %530 : vector<8x8x128xf32>
    %c2_439 = arith.constant 2 : index
    %c14_440 = arith.constant 14 : index
    %c0_441 = arith.constant 0 : index
    %532 = vector.load %arg7[%c2_439, %c14_440, %c0_441] : memref<14x22x128xf32, #tpu.memory_space<vmem>>, vector<8x8x128xf32>
    %c2_442 = arith.constant 2 : index
    %c6_443 = arith.constant 6 : index
    %c0_444 = arith.constant 0 : index
    %533 = vector.load %arg4[%c2_442, %c6_443, %c0_444] : memref<7x7x128xf32, #tpu.memory_space<vmem>>, vector<1x1x128xf32>
    %534 = vector.shape_cast %533 : vector<1x1x128xf32> to vector<128xf32>
    %535 = vector.shape_cast %534 : vector<128xf32> to vector<1x1x128xf32>
    %536 = vector.broadcast %535 : vector<1x1x128xf32> to vector<8x8x128xf32>
    %537 = arith.mulf %532, %536 : vector<8x8x128xf32>
    %538 = arith.addf %524, %537 : vector<8x8x128xf32>
    %c3_445 = arith.constant 3 : index
    %c8_446 = arith.constant 8 : index
    %c0_447 = arith.constant 0 : index
    %539 = vector.load %arg7[%c3_445, %c8_446, %c0_447] : memref<14x22x128xf32, #tpu.memory_space<vmem>>, vector<8x8x128xf32>
    %c3_448 = arith.constant 3 : index
    %c0_449 = arith.constant 0 : index
    %c0_450 = arith.constant 0 : index
    %540 = vector.load %arg4[%c3_448, %c0_449, %c0_450] : memref<7x7x128xf32, #tpu.memory_space<vmem>>, vector<1x1x128xf32>
    %541 = vector.shape_cast %540 : vector<1x1x128xf32> to vector<128xf32>
    %542 = vector.shape_cast %541 : vector<128xf32> to vector<1x1x128xf32>
    %543 = vector.broadcast %542 : vector<1x1x128xf32> to vector<8x8x128xf32>
    %544 = arith.mulf %539, %543 : vector<8x8x128xf32>
    %545 = arith.addf %531, %544 : vector<8x8x128xf32>
    %c3_451 = arith.constant 3 : index
    %c9_452 = arith.constant 9 : index
    %c0_453 = arith.constant 0 : index
    %546 = vector.load %arg7[%c3_451, %c9_452, %c0_453] : memref<14x22x128xf32, #tpu.memory_space<vmem>>, vector<8x8x128xf32>
    %c3_454 = arith.constant 3 : index
    %c1_455 = arith.constant 1 : index
    %c0_456 = arith.constant 0 : index
    %547 = vector.load %arg4[%c3_454, %c1_455, %c0_456] : memref<7x7x128xf32, #tpu.memory_space<vmem>>, vector<1x1x128xf32>
    %548 = vector.shape_cast %547 : vector<1x1x128xf32> to vector<128xf32>
    %549 = vector.shape_cast %548 : vector<128xf32> to vector<1x1x128xf32>
    %550 = vector.broadcast %549 : vector<1x1x128xf32> to vector<8x8x128xf32>
    %551 = arith.mulf %546, %550 : vector<8x8x128xf32>
    %552 = arith.addf %538, %551 : vector<8x8x128xf32>
    %c3_457 = arith.constant 3 : index
    %c10_458 = arith.constant 10 : index
    %c0_459 = arith.constant 0 : index
    %553 = vector.load %arg7[%c3_457, %c10_458, %c0_459] : memref<14x22x128xf32, #tpu.memory_space<vmem>>, vector<8x8x128xf32>
    %c3_460 = arith.constant 3 : index
    %c2_461 = arith.constant 2 : index
    %c0_462 = arith.constant 0 : index
    %554 = vector.load %arg4[%c3_460, %c2_461, %c0_462] : memref<7x7x128xf32, #tpu.memory_space<vmem>>, vector<1x1x128xf32>
    %555 = vector.shape_cast %554 : vector<1x1x128xf32> to vector<128xf32>
    %556 = vector.shape_cast %555 : vector<128xf32> to vector<1x1x128xf32>
    %557 = vector.broadcast %556 : vector<1x1x128xf32> to vector<8x8x128xf32>
    %558 = arith.mulf %553, %557 : vector<8x8x128xf32>
    %559 = arith.addf %545, %558 : vector<8x8x128xf32>
    %c3_463 = arith.constant 3 : index
    %c11_464 = arith.constant 11 : index
    %c0_465 = arith.constant 0 : index
    %560 = vector.load %arg7[%c3_463, %c11_464, %c0_465] : memref<14x22x128xf32, #tpu.memory_space<vmem>>, vector<8x8x128xf32>
    %c3_466 = arith.constant 3 : index
    %c3_467 = arith.constant 3 : index
    %c0_468 = arith.constant 0 : index
    %561 = vector.load %arg4[%c3_466, %c3_467, %c0_468] : memref<7x7x128xf32, #tpu.memory_space<vmem>>, vector<1x1x128xf32>
    %562 = vector.shape_cast %561 : vector<1x1x128xf32> to vector<128xf32>
    %563 = vector.shape_cast %562 : vector<128xf32> to vector<1x1x128xf32>
    %564 = vector.broadcast %563 : vector<1x1x128xf32> to vector<8x8x128xf32>
    %565 = arith.mulf %560, %564 : vector<8x8x128xf32>
    %566 = arith.addf %552, %565 : vector<8x8x128xf32>
    %c3_469 = arith.constant 3 : index
    %c12_470 = arith.constant 12 : index
    %c0_471 = arith.constant 0 : index
    %567 = vector.load %arg7[%c3_469, %c12_470, %c0_471] : memref<14x22x128xf32, #tpu.memory_space<vmem>>, vector<8x8x128xf32>
    %c3_472 = arith.constant 3 : index
    %c4_473 = arith.constant 4 : index
    %c0_474 = arith.constant 0 : index
    %568 = vector.load %arg4[%c3_472, %c4_473, %c0_474] : memref<7x7x128xf32, #tpu.memory_space<vmem>>, vector<1x1x128xf32>
    %569 = vector.shape_cast %568 : vector<1x1x128xf32> to vector<128xf32>
    %570 = vector.shape_cast %569 : vector<128xf32> to vector<1x1x128xf32>
    %571 = vector.broadcast %570 : vector<1x1x128xf32> to vector<8x8x128xf32>
    %572 = arith.mulf %567, %571 : vector<8x8x128xf32>
    %573 = arith.addf %559, %572 : vector<8x8x128xf32>
    %c3_475 = arith.constant 3 : index
    %c13_476 = arith.constant 13 : index
    %c0_477 = arith.constant 0 : index
    %574 = vector.load %arg7[%c3_475, %c13_476, %c0_477] : memref<14x22x128xf32, #tpu.memory_space<vmem>>, vector<8x8x128xf32>
    %c3_478 = arith.constant 3 : index
    %c5_479 = arith.constant 5 : index
    %c0_480 = arith.constant 0 : index
    %575 = vector.load %arg4[%c3_478, %c5_479, %c0_480] : memref<7x7x128xf32, #tpu.memory_space<vmem>>, vector<1x1x128xf32>
    %576 = vector.shape_cast %575 : vector<1x1x128xf32> to vector<128xf32>
    %577 = vector.shape_cast %576 : vector<128xf32> to vector<1x1x128xf32>
    %578 = vector.broadcast %577 : vector<1x1x128xf32> to vector<8x8x128xf32>
    %579 = arith.mulf %574, %578 : vector<8x8x128xf32>
    %580 = arith.addf %566, %579 : vector<8x8x128xf32>
    %c3_481 = arith.constant 3 : index
    %c14_482 = arith.constant 14 : index
    %c0_483 = arith.constant 0 : index
    %581 = vector.load %arg7[%c3_481, %c14_482, %c0_483] : memref<14x22x128xf32, #tpu.memory_space<vmem>>, vector<8x8x128xf32>
    %c3_484 = arith.constant 3 : index
    %c6_485 = arith.constant 6 : index
    %c0_486 = arith.constant 0 : index
    %582 = vector.load %arg4[%c3_484, %c6_485, %c0_486] : memref<7x7x128xf32, #tpu.memory_space<vmem>>, vector<1x1x128xf32>
    %583 = vector.shape_cast %582 : vector<1x1x128xf32> to vector<128xf32>
    %584 = vector.shape_cast %583 : vector<128xf32> to vector<1x1x128xf32>
    %585 = vector.broadcast %584 : vector<1x1x128xf32> to vector<8x8x128xf32>
    %586 = arith.mulf %581, %585 : vector<8x8x128xf32>
    %587 = arith.addf %573, %586 : vector<8x8x128xf32>
    %c4_487 = arith.constant 4 : index
    %c8_488 = arith.constant 8 : index
    %c0_489 = arith.constant 0 : index
    %588 = vector.load %arg7[%c4_487, %c8_488, %c0_489] : memref<14x22x128xf32, #tpu.memory_space<vmem>>, vector<8x8x128xf32>
    %c4_490 = arith.constant 4 : index
    %c0_491 = arith.constant 0 : index
    %c0_492 = arith.constant 0 : index
    %589 = vector.load %arg4[%c4_490, %c0_491, %c0_492] : memref<7x7x128xf32, #tpu.memory_space<vmem>>, vector<1x1x128xf32>
    %590 = vector.shape_cast %589 : vector<1x1x128xf32> to vector<128xf32>
    %591 = vector.shape_cast %590 : vector<128xf32> to vector<1x1x128xf32>
    %592 = vector.broadcast %591 : vector<1x1x128xf32> to vector<8x8x128xf32>
    %593 = arith.mulf %588, %592 : vector<8x8x128xf32>
    %594 = arith.addf %580, %593 : vector<8x8x128xf32>
    %c4_493 = arith.constant 4 : index
    %c9_494 = arith.constant 9 : index
    %c0_495 = arith.constant 0 : index
    %595 = vector.load %arg7[%c4_493, %c9_494, %c0_495] : memref<14x22x128xf32, #tpu.memory_space<vmem>>, vector<8x8x128xf32>
    %c4_496 = arith.constant 4 : index
    %c1_497 = arith.constant 1 : index
    %c0_498 = arith.constant 0 : index
    %596 = vector.load %arg4[%c4_496, %c1_497, %c0_498] : memref<7x7x128xf32, #tpu.memory_space<vmem>>, vector<1x1x128xf32>
    %597 = vector.shape_cast %596 : vector<1x1x128xf32> to vector<128xf32>
    %598 = vector.shape_cast %597 : vector<128xf32> to vector<1x1x128xf32>
    %599 = vector.broadcast %598 : vector<1x1x128xf32> to vector<8x8x128xf32>
    %600 = arith.mulf %595, %599 : vector<8x8x128xf32>
    %601 = arith.addf %587, %600 : vector<8x8x128xf32>
    %c4_499 = arith.constant 4 : index
    %c10_500 = arith.constant 10 : index
    %c0_501 = arith.constant 0 : index
    %602 = vector.load %arg7[%c4_499, %c10_500, %c0_501] : memref<14x22x128xf32, #tpu.memory_space<vmem>>, vector<8x8x128xf32>
    %c4_502 = arith.constant 4 : index
    %c2_503 = arith.constant 2 : index
    %c0_504 = arith.constant 0 : index
    %603 = vector.load %arg4[%c4_502, %c2_503, %c0_504] : memref<7x7x128xf32, #tpu.memory_space<vmem>>, vector<1x1x128xf32>
    %604 = vector.shape_cast %603 : vector<1x1x128xf32> to vector<128xf32>
    %605 = vector.shape_cast %604 : vector<128xf32> to vector<1x1x128xf32>
    %606 = vector.broadcast %605 : vector<1x1x128xf32> to vector<8x8x128xf32>
    %607 = arith.mulf %602, %606 : vector<8x8x128xf32>
    %608 = arith.addf %594, %607 : vector<8x8x128xf32>
    %c4_505 = arith.constant 4 : index
    %c11_506 = arith.constant 11 : index
    %c0_507 = arith.constant 0 : index
    %609 = vector.load %arg7[%c4_505, %c11_506, %c0_507] : memref<14x22x128xf32, #tpu.memory_space<vmem>>, vector<8x8x128xf32>
    %c4_508 = arith.constant 4 : index
    %c3_509 = arith.constant 3 : index
    %c0_510 = arith.constant 0 : index
    %610 = vector.load %arg4[%c4_508, %c3_509, %c0_510] : memref<7x7x128xf32, #tpu.memory_space<vmem>>, vector<1x1x128xf32>
    %611 = vector.shape_cast %610 : vector<1x1x128xf32> to vector<128xf32>
    %612 = vector.shape_cast %611 : vector<128xf32> to vector<1x1x128xf32>
    %613 = vector.broadcast %612 : vector<1x1x128xf32> to vector<8x8x128xf32>
    %614 = arith.mulf %609, %613 : vector<8x8x128xf32>
    %615 = arith.addf %601, %614 : vector<8x8x128xf32>
    %c4_511 = arith.constant 4 : index
    %c12_512 = arith.constant 12 : index
    %c0_513 = arith.constant 0 : index
    %616 = vector.load %arg7[%c4_511, %c12_512, %c0_513] : memref<14x22x128xf32, #tpu.memory_space<vmem>>, vector<8x8x128xf32>
    %c4_514 = arith.constant 4 : index
    %c4_515 = arith.constant 4 : index
    %c0_516 = arith.constant 0 : index
    %617 = vector.load %arg4[%c4_514, %c4_515, %c0_516] : memref<7x7x128xf32, #tpu.memory_space<vmem>>, vector<1x1x128xf32>
    %618 = vector.shape_cast %617 : vector<1x1x128xf32> to vector<128xf32>
    %619 = vector.shape_cast %618 : vector<128xf32> to vector<1x1x128xf32>
    %620 = vector.broadcast %619 : vector<1x1x128xf32> to vector<8x8x128xf32>
    %621 = arith.mulf %616, %620 : vector<8x8x128xf32>
    %622 = arith.addf %608, %621 : vector<8x8x128xf32>
    %c4_517 = arith.constant 4 : index
    %c13_518 = arith.constant 13 : index
    %c0_519 = arith.constant 0 : index
    %623 = vector.load %arg7[%c4_517, %c13_518, %c0_519] : memref<14x22x128xf32, #tpu.memory_space<vmem>>, vector<8x8x128xf32>
    %c4_520 = arith.constant 4 : index
    %c5_521 = arith.constant 5 : index
    %c0_522 = arith.constant 0 : index
    %624 = vector.load %arg4[%c4_520, %c5_521, %c0_522] : memref<7x7x128xf32, #tpu.memory_space<vmem>>, vector<1x1x128xf32>
    %625 = vector.shape_cast %624 : vector<1x1x128xf32> to vector<128xf32>
    %626 = vector.shape_cast %625 : vector<128xf32> to vector<1x1x128xf32>
    %627 = vector.broadcast %626 : vector<1x1x128xf32> to vector<8x8x128xf32>
    %628 = arith.mulf %623, %627 : vector<8x8x128xf32>
    %629 = arith.addf %615, %628 : vector<8x8x128xf32>
    %c4_523 = arith.constant 4 : index
    %c14_524 = arith.constant 14 : index
    %c0_525 = arith.constant 0 : index
    %630 = vector.load %arg7[%c4_523, %c14_524, %c0_525] : memref<14x22x128xf32, #tpu.memory_space<vmem>>, vector<8x8x128xf32>
    %c4_526 = arith.constant 4 : index
    %c6_527 = arith.constant 6 : index
    %c0_528 = arith.constant 0 : index
    %631 = vector.load %arg4[%c4_526, %c6_527, %c0_528] : memref<7x7x128xf32, #tpu.memory_space<vmem>>, vector<1x1x128xf32>
    %632 = vector.shape_cast %631 : vector<1x1x128xf32> to vector<128xf32>
    %633 = vector.shape_cast %632 : vector<128xf32> to vector<1x1x128xf32>
    %634 = vector.broadcast %633 : vector<1x1x128xf32> to vector<8x8x128xf32>
    %635 = arith.mulf %630, %634 : vector<8x8x128xf32>
    %636 = arith.addf %622, %635 : vector<8x8x128xf32>
    %c5_529 = arith.constant 5 : index
    %c8_530 = arith.constant 8 : index
    %c0_531 = arith.constant 0 : index
    %637 = vector.load %arg7[%c5_529, %c8_530, %c0_531] : memref<14x22x128xf32, #tpu.memory_space<vmem>>, vector<8x8x128xf32>
    %c5_532 = arith.constant 5 : index
    %c0_533 = arith.constant 0 : index
    %c0_534 = arith.constant 0 : index
    %638 = vector.load %arg4[%c5_532, %c0_533, %c0_534] : memref<7x7x128xf32, #tpu.memory_space<vmem>>, vector<1x1x128xf32>
    %639 = vector.shape_cast %638 : vector<1x1x128xf32> to vector<128xf32>
    %640 = vector.shape_cast %639 : vector<128xf32> to vector<1x1x128xf32>
    %641 = vector.broadcast %640 : vector<1x1x128xf32> to vector<8x8x128xf32>
    %642 = arith.mulf %637, %641 : vector<8x8x128xf32>
    %643 = arith.addf %629, %642 : vector<8x8x128xf32>
    %c5_535 = arith.constant 5 : index
    %c9_536 = arith.constant 9 : index
    %c0_537 = arith.constant 0 : index
    %644 = vector.load %arg7[%c5_535, %c9_536, %c0_537] : memref<14x22x128xf32, #tpu.memory_space<vmem>>, vector<8x8x128xf32>
    %c5_538 = arith.constant 5 : index
    %c1_539 = arith.constant 1 : index
    %c0_540 = arith.constant 0 : index
    %645 = vector.load %arg4[%c5_538, %c1_539, %c0_540] : memref<7x7x128xf32, #tpu.memory_space<vmem>>, vector<1x1x128xf32>
    %646 = vector.shape_cast %645 : vector<1x1x128xf32> to vector<128xf32>
    %647 = vector.shape_cast %646 : vector<128xf32> to vector<1x1x128xf32>
    %648 = vector.broadcast %647 : vector<1x1x128xf32> to vector<8x8x128xf32>
    %649 = arith.mulf %644, %648 : vector<8x8x128xf32>
    %650 = arith.addf %636, %649 : vector<8x8x128xf32>
    %c5_541 = arith.constant 5 : index
    %c10_542 = arith.constant 10 : index
    %c0_543 = arith.constant 0 : index
    %651 = vector.load %arg7[%c5_541, %c10_542, %c0_543] : memref<14x22x128xf32, #tpu.memory_space<vmem>>, vector<8x8x128xf32>
    %c5_544 = arith.constant 5 : index
    %c2_545 = arith.constant 2 : index
    %c0_546 = arith.constant 0 : index
    %652 = vector.load %arg4[%c5_544, %c2_545, %c0_546] : memref<7x7x128xf32, #tpu.memory_space<vmem>>, vector<1x1x128xf32>
    %653 = vector.shape_cast %652 : vector<1x1x128xf32> to vector<128xf32>
    %654 = vector.shape_cast %653 : vector<128xf32> to vector<1x1x128xf32>
    %655 = vector.broadcast %654 : vector<1x1x128xf32> to vector<8x8x128xf32>
    %656 = arith.mulf %651, %655 : vector<8x8x128xf32>
    %657 = arith.addf %643, %656 : vector<8x8x128xf32>
    %c5_547 = arith.constant 5 : index
    %c11_548 = arith.constant 11 : index
    %c0_549 = arith.constant 0 : index
    %658 = vector.load %arg7[%c5_547, %c11_548, %c0_549] : memref<14x22x128xf32, #tpu.memory_space<vmem>>, vector<8x8x128xf32>
    %c5_550 = arith.constant 5 : index
    %c3_551 = arith.constant 3 : index
    %c0_552 = arith.constant 0 : index
    %659 = vector.load %arg4[%c5_550, %c3_551, %c0_552] : memref<7x7x128xf32, #tpu.memory_space<vmem>>, vector<1x1x128xf32>
    %660 = vector.shape_cast %659 : vector<1x1x128xf32> to vector<128xf32>
    %661 = vector.shape_cast %660 : vector<128xf32> to vector<1x1x128xf32>
    %662 = vector.broadcast %661 : vector<1x1x128xf32> to vector<8x8x128xf32>
    %663 = arith.mulf %658, %662 : vector<8x8x128xf32>
    %664 = arith.addf %650, %663 : vector<8x8x128xf32>
    %c5_553 = arith.constant 5 : index
    %c12_554 = arith.constant 12 : index
    %c0_555 = arith.constant 0 : index
    %665 = vector.load %arg7[%c5_553, %c12_554, %c0_555] : memref<14x22x128xf32, #tpu.memory_space<vmem>>, vector<8x8x128xf32>
    %c5_556 = arith.constant 5 : index
    %c4_557 = arith.constant 4 : index
    %c0_558 = arith.constant 0 : index
    %666 = vector.load %arg4[%c5_556, %c4_557, %c0_558] : memref<7x7x128xf32, #tpu.memory_space<vmem>>, vector<1x1x128xf32>
    %667 = vector.shape_cast %666 : vector<1x1x128xf32> to vector<128xf32>
    %668 = vector.shape_cast %667 : vector<128xf32> to vector<1x1x128xf32>
    %669 = vector.broadcast %668 : vector<1x1x128xf32> to vector<8x8x128xf32>
    %670 = arith.mulf %665, %669 : vector<8x8x128xf32>
    %671 = arith.addf %657, %670 : vector<8x8x128xf32>
    %c5_559 = arith.constant 5 : index
    %c13_560 = arith.constant 13 : index
    %c0_561 = arith.constant 0 : index
    %672 = vector.load %arg7[%c5_559, %c13_560, %c0_561] : memref<14x22x128xf32, #tpu.memory_space<vmem>>, vector<8x8x128xf32>
    %c5_562 = arith.constant 5 : index
    %c5_563 = arith.constant 5 : index
    %c0_564 = arith.constant 0 : index
    %673 = vector.load %arg4[%c5_562, %c5_563, %c0_564] : memref<7x7x128xf32, #tpu.memory_space<vmem>>, vector<1x1x128xf32>
    %674 = vector.shape_cast %673 : vector<1x1x128xf32> to vector<128xf32>
    %675 = vector.shape_cast %674 : vector<128xf32> to vector<1x1x128xf32>
    %676 = vector.broadcast %675 : vector<1x1x128xf32> to vector<8x8x128xf32>
    %677 = arith.mulf %672, %676 : vector<8x8x128xf32>
    %678 = arith.addf %664, %677 : vector<8x8x128xf32>
    %c5_565 = arith.constant 5 : index
    %c14_566 = arith.constant 14 : index
    %c0_567 = arith.constant 0 : index
    %679 = vector.load %arg7[%c5_565, %c14_566, %c0_567] : memref<14x22x128xf32, #tpu.memory_space<vmem>>, vector<8x8x128xf32>
    %c5_568 = arith.constant 5 : index
    %c6_569 = arith.constant 6 : index
    %c0_570 = arith.constant 0 : index
    %680 = vector.load %arg4[%c5_568, %c6_569, %c0_570] : memref<7x7x128xf32, #tpu.memory_space<vmem>>, vector<1x1x128xf32>
    %681 = vector.shape_cast %680 : vector<1x1x128xf32> to vector<128xf32>
    %682 = vector.shape_cast %681 : vector<128xf32> to vector<1x1x128xf32>
    %683 = vector.broadcast %682 : vector<1x1x128xf32> to vector<8x8x128xf32>
    %684 = arith.mulf %679, %683 : vector<8x8x128xf32>
    %685 = arith.addf %671, %684 : vector<8x8x128xf32>
    %c6_571 = arith.constant 6 : index
    %c8_572 = arith.constant 8 : index
    %c0_573 = arith.constant 0 : index
    %686 = vector.load %arg7[%c6_571, %c8_572, %c0_573] : memref<14x22x128xf32, #tpu.memory_space<vmem>>, vector<8x8x128xf32>
    %c6_574 = arith.constant 6 : index
    %c0_575 = arith.constant 0 : index
    %c0_576 = arith.constant 0 : index
    %687 = vector.load %arg4[%c6_574, %c0_575, %c0_576] : memref<7x7x128xf32, #tpu.memory_space<vmem>>, vector<1x1x128xf32>
    %688 = vector.shape_cast %687 : vector<1x1x128xf32> to vector<128xf32>
    %689 = vector.shape_cast %688 : vector<128xf32> to vector<1x1x128xf32>
    %690 = vector.broadcast %689 : vector<1x1x128xf32> to vector<8x8x128xf32>
    %691 = arith.mulf %686, %690 : vector<8x8x128xf32>
    %692 = arith.addf %678, %691 : vector<8x8x128xf32>
    %c6_577 = arith.constant 6 : index
    %c9_578 = arith.constant 9 : index
    %c0_579 = arith.constant 0 : index
    %693 = vector.load %arg7[%c6_577, %c9_578, %c0_579] : memref<14x22x128xf32, #tpu.memory_space<vmem>>, vector<8x8x128xf32>
    %c6_580 = arith.constant 6 : index
    %c1_581 = arith.constant 1 : index
    %c0_582 = arith.constant 0 : index
    %694 = vector.load %arg4[%c6_580, %c1_581, %c0_582] : memref<7x7x128xf32, #tpu.memory_space<vmem>>, vector<1x1x128xf32>
    %695 = vector.shape_cast %694 : vector<1x1x128xf32> to vector<128xf32>
    %696 = vector.shape_cast %695 : vector<128xf32> to vector<1x1x128xf32>
    %697 = vector.broadcast %696 : vector<1x1x128xf32> to vector<8x8x128xf32>
    %698 = arith.mulf %693, %697 : vector<8x8x128xf32>
    %699 = arith.addf %685, %698 : vector<8x8x128xf32>
    %c6_583 = arith.constant 6 : index
    %c10_584 = arith.constant 10 : index
    %c0_585 = arith.constant 0 : index
    %700 = vector.load %arg7[%c6_583, %c10_584, %c0_585] : memref<14x22x128xf32, #tpu.memory_space<vmem>>, vector<8x8x128xf32>
    %c6_586 = arith.constant 6 : index
    %c2_587 = arith.constant 2 : index
    %c0_588 = arith.constant 0 : index
    %701 = vector.load %arg4[%c6_586, %c2_587, %c0_588] : memref<7x7x128xf32, #tpu.memory_space<vmem>>, vector<1x1x128xf32>
    %702 = vector.shape_cast %701 : vector<1x1x128xf32> to vector<128xf32>
    %703 = vector.shape_cast %702 : vector<128xf32> to vector<1x1x128xf32>
    %704 = vector.broadcast %703 : vector<1x1x128xf32> to vector<8x8x128xf32>
    %705 = arith.mulf %700, %704 : vector<8x8x128xf32>
    %706 = arith.addf %692, %705 : vector<8x8x128xf32>
    %c6_589 = arith.constant 6 : index
    %c11_590 = arith.constant 11 : index
    %c0_591 = arith.constant 0 : index
    %707 = vector.load %arg7[%c6_589, %c11_590, %c0_591] : memref<14x22x128xf32, #tpu.memory_space<vmem>>, vector<8x8x128xf32>
    %c6_592 = arith.constant 6 : index
    %c3_593 = arith.constant 3 : index
    %c0_594 = arith.constant 0 : index
    %708 = vector.load %arg4[%c6_592, %c3_593, %c0_594] : memref<7x7x128xf32, #tpu.memory_space<vmem>>, vector<1x1x128xf32>
    %709 = vector.shape_cast %708 : vector<1x1x128xf32> to vector<128xf32>
    %710 = vector.shape_cast %709 : vector<128xf32> to vector<1x1x128xf32>
    %711 = vector.broadcast %710 : vector<1x1x128xf32> to vector<8x8x128xf32>
    %712 = arith.mulf %707, %711 : vector<8x8x128xf32>
    %713 = arith.addf %699, %712 : vector<8x8x128xf32>
    %c6_595 = arith.constant 6 : index
    %c12_596 = arith.constant 12 : index
    %c0_597 = arith.constant 0 : index
    %714 = vector.load %arg7[%c6_595, %c12_596, %c0_597] : memref<14x22x128xf32, #tpu.memory_space<vmem>>, vector<8x8x128xf32>
    %c6_598 = arith.constant 6 : index
    %c4_599 = arith.constant 4 : index
    %c0_600 = arith.constant 0 : index
    %715 = vector.load %arg4[%c6_598, %c4_599, %c0_600] : memref<7x7x128xf32, #tpu.memory_space<vmem>>, vector<1x1x128xf32>
    %716 = vector.shape_cast %715 : vector<1x1x128xf32> to vector<128xf32>
    %717 = vector.shape_cast %716 : vector<128xf32> to vector<1x1x128xf32>
    %718 = vector.broadcast %717 : vector<1x1x128xf32> to vector<8x8x128xf32>
    %719 = arith.mulf %714, %718 : vector<8x8x128xf32>
    %720 = arith.addf %706, %719 : vector<8x8x128xf32>
    %c6_601 = arith.constant 6 : index
    %c13_602 = arith.constant 13 : index
    %c0_603 = arith.constant 0 : index
    %721 = vector.load %arg7[%c6_601, %c13_602, %c0_603] : memref<14x22x128xf32, #tpu.memory_space<vmem>>, vector<8x8x128xf32>
    %c6_604 = arith.constant 6 : index
    %c5_605 = arith.constant 5 : index
    %c0_606 = arith.constant 0 : index
    %722 = vector.load %arg4[%c6_604, %c5_605, %c0_606] : memref<7x7x128xf32, #tpu.memory_space<vmem>>, vector<1x1x128xf32>
    %723 = vector.shape_cast %722 : vector<1x1x128xf32> to vector<128xf32>
    %724 = vector.shape_cast %723 : vector<128xf32> to vector<1x1x128xf32>
    %725 = vector.broadcast %724 : vector<1x1x128xf32> to vector<8x8x128xf32>
    %726 = arith.mulf %721, %725 : vector<8x8x128xf32>
    %727 = arith.addf %713, %726 : vector<8x8x128xf32>
    %c6_607 = arith.constant 6 : index
    %c14_608 = arith.constant 14 : index
    %c0_609 = arith.constant 0 : index
    %728 = vector.load %arg7[%c6_607, %c14_608, %c0_609] : memref<14x22x128xf32, #tpu.memory_space<vmem>>, vector<8x8x128xf32>
    %c6_610 = arith.constant 6 : index
    %c6_611 = arith.constant 6 : index
    %c0_612 = arith.constant 0 : index
    %729 = vector.load %arg4[%c6_610, %c6_611, %c0_612] : memref<7x7x128xf32, #tpu.memory_space<vmem>>, vector<1x1x128xf32>
    %730 = vector.shape_cast %729 : vector<1x1x128xf32> to vector<128xf32>
    %731 = vector.shape_cast %730 : vector<128xf32> to vector<1x1x128xf32>
    %732 = vector.broadcast %731 : vector<1x1x128xf32> to vector<8x8x128xf32>
    %733 = arith.mulf %728, %732 : vector<8x8x128xf32>
    %734 = arith.addf %720, %733 : vector<8x8x128xf32>
    %735 = arith.addf %734, %727 : vector<8x8x128xf32>
    %736 = vector.shape_cast %29 : vector<128xf32> to vector<1x1x128xf32>
    %737 = vector.broadcast %736 : vector<1x1x128xf32> to vector<8x8x128xf32>
    %738 = arith.addf %735, %737 : vector<8x8x128xf32>
    %739 = arith.negf %738 : vector<8x8x128xf32>
    %740 = math.exp %739 : vector<8x8x128xf32>
    %cst_613 = arith.constant 1.000000e+00 : f32
    %741 = vector.broadcast %cst_613 : f32 to vector<8x8x128xf32>
    %742 = arith.addf %741, %740 : vector<8x8x128xf32>
    %743 = arith.divf %741, %742 : vector<8x8x128xf32>
    %c0_614 = arith.constant 0 : index
    %c0_615 = arith.constant 0 : index
    %c8_616 = arith.constant 8 : index
    %c0_617 = arith.constant 0 : index
    %744 = vector.load %arg2[%c0_614, %c0_615, %c8_616, %c0_617] : memref<1x8x16x128xf32, #tpu.memory_space<vmem>>, vector<1x8x8x128xf32>
    %745 = vector.shape_cast %744 : vector<1x8x8x128xf32> to vector<8x8x128xf32>
    %746 = arith.mulf %745, %743 : vector<8x8x128xf32>
    %c0_618 = arith.constant 0 : index
    %c0_619 = arith.constant 0 : index
    %c8_620 = arith.constant 8 : index
    %c0_621 = arith.constant 0 : index
    %747 = vector.load %arg6[%c0_618, %c0_619, %c8_620, %c0_621] : memref<1x8x16x128xf32, #tpu.memory_space<vmem>>, vector<1x8x8x128xf32>
    %748 = vector.shape_cast %747 : vector<1x8x8x128xf32> to vector<8x8x128xf32>
    %749 = vector.shape_cast %746 : vector<8x8x128xf32> to vector<1x8x8x128xf32>
    tpu.vector_store %arg6[%c0_618, %c0_619, %c8_620, %c0_621], %749 {strides = array<i32>} : memref<1x8x16x128xf32, #tpu.memory_space<vmem>>, vector<1x8x8x128xf32>,
    return
  }
  func.func @transform_0(%arg0: i32, %arg1: i32) -> (i32, i32, i32, i32) {
    %c0_i32 = arith.constant 0 : i32
    %c0_i32_0 = arith.constant 0 : i32
    %c0_i32_1 = arith.constant 0 : i32
    return %arg0, %arg1, %c0_i32, %c0_i32_0 : i32, i32, i32, i32
  }
  func.func @transform_2(%arg0: i32, %arg1: i32) -> (i32, i32, i32) {
    %c0_i32 = arith.constant 0 : i32
    %c0_i32_0 = arith.constant 0 : i32
    %c0_i32_1 = arith.constant 0 : i32
    %c0_i32_2 = arith.constant 0 : i32
    return %c0_i32, %c0_i32_0, %c0_i32_1 : i32, i32, i32
  }
  func.func @transform_3(%arg0: i32, %arg1: i32) -> (i32, i32) {
    %c0_i32 = arith.constant 0 : i32
    %c0_i32_0 = arith.constant 0 : i32
    %c0_i32_1 = arith.constant 0 : i32
    return %c0_i32, %c0_i32_0 : i32, i32
  }
  func.func @transform_4(%arg0: i32, %arg1: i32) -> (i32, i32, i32, i32) {
    %c0_i32 = arith.constant 0 : i32
    %c0_i32_0 = arith.constant 0 : i32
    %c0_i32_1 = arith.constant 0 : i32
    return %arg0, %arg1, %c0_i32, %c0_i32_0 : i32, i32, i32, i32
  }
}

</mosaic_0001>

<llo_original>
// kernel: tpu_custom_call.1
$region0: #{tpu_custom_call.1}
  #allocation0 [shape = 'u32[]', space=smem, size = 0x4, offset = 0x4, fixed_abs, tag = 'smem constant byte address 0x4 - core index']
  #allocation1 [shape = 'u32[144,128]{1,0:T(1,128)}', space=vmem, size = 0x12000, scoped, tag = 'internal scratch']
  #allocation2 [shape = 'f32[14,22,128]{2,1,0:T(8,128)}', space=vmem, size = 0x2a000, scoped, tag = 'scratch operand']
  #allocation3 [shape = 'f32[2,3,16,128]{3,2,1,0:T(8,128)}', space=vmem, size = 0xc000, scoped, tag = 'scratch operand']
  #allocation4 [shape = 's32[2]{0}', space=sflag, size = 0x8, scoped, tag = 'scratch operand']
  #allocation11 [shape = 's32[]', space=sflag, size = 0x4, offset = 0, fixed_abs, tag = 'sflag constant byte address 0x0 - dummy sync flag']
  #allocation12 [shape = 's32[]', space=sflag, size = 0x4, offset = 0, fixed_abs, tag = 'sflag constant byte address 0x0 - dummy sync flag']
  #allocation13 [shape = 'u32[]', space=smem, size = 0x4, offset = 0x44, fixed_abs, tag = 'smem constant byte address 0x44 - assertion arg 0']
  #allocation14 [shape = 'u32[]', space=smem, size = 0x4, offset = 0x48, fixed_abs, tag = 'smem constant byte address 0x48 - assertion arg 1']
  #allocation15 [shape = 's32[]', space=sflag, size = 0x4, offset = 0, fixed_abs, tag = 'sflag constant byte address 0x0 - dummy sync flag']
  #allocation16 [shape = 's32[]', space=sflag, size = 0x4, offset = 0, fixed_abs, tag = 'sflag constant byte address 0x0 - dummy sync flag']
  %s0 = inlined_call_operand.hbm [shape: f32[1,16,16,128], index: 0, kind: input, shape index: {}]
  %s1 = inlined_call_operand.hbm [shape: f32[1,16,16,128], index: 1, kind: input, shape index: {}]
  %s2 = inlined_call_operand.hbm [shape: f32[7,7,128], index: 2, kind: input, shape index: {}]
  %s3 = inlined_call_operand.vmem [shape: f32[1,128], index: 3, kind: input, shape index: {}]
  %s4 = inlined_call_operand.hbm [shape: f32[1,16,16,128], index: 4, kind: output, shape index: {}]
  %s5 = sld [smem:[#allocation0]]
  $region85: #{tpu_custom_call.1} parent=0
    _
  %s7 = ssub.s32 1, %s5
  %s8 = scalar_select 0, %s7, %s5
  $region1: #{tpu_custom_call.1} parent=0
    #allocation5 [shape = 'u8[131072]{0}', space=vmem, size = 0x20000, scoped, tag = 'input window, operand 0']
    #allocation6 [shape = 's32[2]{0}', space=sflag, size = 0x8, scoped, tag = 'scoped memory for tpu_custom_call.1']
    #allocation7 [shape = 's32[2]{0}', space=sflag, size = 0x8, scoped, tag = 'scoped memory for tpu_custom_call.1']
    #allocation8 [shape = 'u8[28672]{0}', space=vmem, size = 0x7000, scoped, tag = 'input window, operand 2, single buffered']
    #allocation9 [shape = 's32[1]{0}', space=sflag, size = 0x4, scoped, tag = 'scoped memory for tpu_custom_call.1']
    #allocation10 [shape = 'u8[131072]{0}', space=vmem, size = 0x20000, scoped, tag = 'output window, operand 0']
    %9 = vsyncpa [#allocation6], 0
    %s10 = scalar_lea.sflag [#allocation6], 1
    %11 = vsyncpa %s10, 0
    %12 = vsyncpa [#allocation9], 0
    %13 = vsyncpa [#allocation7], 0
    %s14 = scalar_lea.sflag [#allocation7], 1
    %15 = vsyncpa %s14, 0
    loop: start=0, step=1, limit=4
    $region2: #{tpu_custom_call.1} parent=1 // loop_pre_header
      _
    $region3: #{tpu_custom_call.1} parent=1 // loop_header
      %s17 = sphi 0, %s21
      %p18 = scmp.ge.s32.totalorder %s17, 4
      %s24 = sphi 0, %s36
      %s25 = sphi 0, %s32
      %s26 = sphi 0, %s24
      %s27 = sphi 0, %s25
      %s28 = sphi 0, %s26
      %s29 = sphi 0, %s27
      %s41 = sphi 0, %s43
      %s44 = sphi 0, %s41
      %s45 = sphi 0, %s44
      %s61 = sphi 0, %s45
      %s65 = sphi 0, %s65
      %s67 = sphi 0, %s65
      %s68 = sphi 0, %s67
      %s82 = sphi 0, %s68
      %s86 = sphi 0, %s86
      %s88 = sphi 0, %s86
      %s89 = sphi 0, %s88
      %s103 = sphi 0, %s89
      %s111 = sphi 0, %s113
      %s114 = sphi 0, %s111
      %s115 = sphi 0, %s114
      %s131 = sphi 0, %s115
    $region4: #{tpu_custom_call.1} parent=1 // loop_header_branch
      %20 = sbr.rel (%p18) target = $region8
    $region5: #{tpu_custom_call.1} parent=1 // loop_body
      %s22 = ssub.s32 %s17, 1
      %s23 = ssub.s32 %s17, 2
      %s30 = sadd.s32 1, %s25
      %p31 = scmp.ge.s32.totalorder %s30, 2
      %s32 = scalar_select %p31, 0, %s30
      %s33 = sadd.s32 1, %s24
      %s34 = scalar_select %p31, %s33, %s24
      %p35 = scmp.ge.s32.totalorder %s34, 1
      %s36 = scalar_select %p35, 0, %s34
      %s37 = ssub.s32 %s24, %s36
      %s38 = ssub.s32 %s25, %s32
      %s39 = sor.u32 %s37, %s38
      %p40 = scmp.eq.s32.totalorder %s39, 0
      %s42 = sadd.s32 %s41, 1
      %s43 = scalar_select %p40, %s41, %s42
      %p46 = pneg %p40
      %p47 = scmp.eq.s32.totalorder %s17, 1
      %p48 = por %p46, %p47
      %p49 = scmp.ne.s32.totalorder %s41, %s44
      %p50 = scmp.eq.s32.totalorder %s17, 0
      %p51 = por %p49, %p50
      %p52 = scmp.ne.s32.totalorder %s41, %s44
      %p53 = scmp.eq.s32.totalorder %s22, 1
      %p54 = por %p52, %p53
      %p55 = scmp.ne.s32.totalorder %s44, %s45
      %p56 = scmp.eq.s32.totalorder %s22, 0
      %p57 = por %p55, %p56
      %p58 = scmp.ne.s32.totalorder %s44, %s45
      %p59 = scmp.eq.s32.totalorder %s23, 1
      %p60 = por %p58, %p59
      %p62 = scmp.ne.s32.totalorder %s45, %s61
      %p63 = scmp.eq.s32.totalorder %s23, 0
      %p64 = por %p62, %p63
      %s66 = sadd.s32 %s65, 1
      %p69 = scmp.eq.s32.totalorder %s17, 1
      %p70 = scmp.ne.s32.totalorder %s65, %s67
      %p71 = scmp.eq.s32.totalorder %s17, 0
      %p72 = por %p70, %p71
      %p73 = scmp.ne.s32.totalorder %s65, %s67
      %p74 = scmp.eq.s32.totalorder %s22, 1
      %p75 = por %p73, %p74
      %p76 = scmp.ne.s32.totalorder %s67, %s68
      %p77 = scmp.eq.s32.totalorder %s22, 0
      %p78 = por %p76, %p77
      %p79 = scmp.ne.s32.totalorder %s67, %s68
      %p80 = scmp.eq.s32.totalorder %s23, 1
      %p81 = por %p79, %p80
      %p83 = scmp.ne.s32.totalorder %s68, %s82
      %p84 = scmp.eq.s32.totalorder %s23, 0
      %p85 = por %p83, %p84
      %s87 = sadd.s32 %s86, 1
      %p90 = scmp.eq.s32.totalorder %s17, 1
      %p91 = scmp.ne.s32.totalorder %s86, %s88
      %p92 = scmp.eq.s32.totalorder %s17, 0
      %p93 = por %p91, %p92
      %p94 = scmp.ne.s32.totalorder %s86, %s88
      %p95 = scmp.eq.s32.totalorder %s22, 1
      %p96 = por %p94, %p95
      %p97 = scmp.ne.s32.totalorder %s88, %s89
      %p98 = scmp.eq.s32.totalorder %s22, 0
      %p99 = por %p97, %p98
      %p100 = scmp.ne.s32.totalorder %s88, %s89
      %p101 = scmp.eq.s32.totalorder %s23, 1
      %p102 = por %p100, %p101
      %p104 = scmp.ne.s32.totalorder %s89, %s103
      %p105 = scmp.eq.s32.totalorder %s23, 0
      %p106 = por %p104, %p105
      %s107 = ssub.s32 %s24, %s36
      %s108 = ssub.s32 %s25, %s32
      %s109 = sor.u32 %s107, %s108
      %p110 = scmp.eq.s32.totalorder %s109, 0
      %s112 = sadd.s32 %s111, 1
      %s113 = scalar_select %p110, %s111, %s112
      %p116 = pneg %p110
      %p117 = scmp.eq.s32.totalorder %s17, 1
      %p118 = por %p116, %p117
      %p119 = scmp.ne.s32.totalorder %s111, %s114
      %p120 = scmp.eq.s32.totalorder %s17, 0
      %p121 = por %p119, %p120
      %p122 = scmp.ne.s32.totalorder %s111, %s114
      %p123 = scmp.eq.s32.totalorder %s22, 1
      %p124 = por %p122, %p123
      %p125 = scmp.ne.s32.totalorder %s114, %s115
      %p126 = scmp.eq.s32.totalorder %s22, 0
      %p127 = por %p125, %p126
      %p128 = scmp.ne.s32.totalorder %s114, %s115
      %p129 = scmp.eq.s32.totalorder %s23, 1
      %p130 = por %p128, %p129
      %p132 = scmp.ne.s32.totalorder %s115, %s131
      %p133 = scmp.eq.s32.totalorder %s23, 0
      %p134 = por %p132, %p133
      %p135 = scmp.le.s32.totalorder 1, %s17
      %p136 = scmp.lt.s32.totalorder %s17, 3
      %p137 = pnand %p135, %p136
      %p138 = pneg %p137
      // Predicated region
      $region9: #{tpu_custom_call.1} parent=5 // pred_check
        _
      $region10: #{tpu_custom_call.1} parent=5 // pred_check_branch
        %140 = sbr.rel (%p137) target = $region12
      $region11: #{tpu_custom_call.1} parent=5 // pred_region
        %s141 = ssub.s32 %s17, 1
        // Predicated region
        $region13: #{tpu_custom_call.1} parent=11 // pred_check
          %p142 = pneg %p78
        $region14: #{tpu_custom_call.1} parent=11 // pred_check_branch
          %144 = sbr.rel (%p142) target = $region16
        $region15: #{tpu_custom_call.1} parent=11 // pred_region
          %s146 = ssub.s32 896, 896
          %147 = vsyncadd [#allocation9], %s146
          %s148 = sshll.u32 [#allocation8], 4
          %s149 = int_to_ptr.vmem [resolvable:$true] %s148
          %154 = dma.hbm_to_vmem [thread:$0]  %s2, 896, %s149, [#allocation9], 128, 128, 8
        $region16: #{tpu_custom_call.1} parent=11 // pred_fallthru
          _
        // Predicated region
        $region17: #{tpu_custom_call.1} parent=11 // pred_check
          %p155 = pneg %p99
        $region18: #{tpu_custom_call.1} parent=11 // pred_check_branch
          %157 = sbr.rel (%p155) target = $region20
        $region19: #{tpu_custom_call.1} parent=11 // pred_region
          _
        $region20: #{tpu_custom_call.1} parent=11 // pred_fallthru
          _
      $region12: #{tpu_custom_call.1} parent=5 // pred_fallthru
        _
      %p158 = scmp.lt.s32.totalorder %s17, 2
      // Predicated region
      $region21: #{tpu_custom_call.1} parent=5 // pred_check
        %p159 = pneg %p158
      $region22: #{tpu_custom_call.1} parent=5 // pred_check_branch
        %161 = sbr.rel (%p159) target = $region24
      $region23: #{tpu_custom_call.1} parent=5 // pred_region
        // Predicated region
        $region25: #{tpu_custom_call.1} parent=23 // pred_check
          %p162 = pneg %p51
        $region26: #{tpu_custom_call.1} parent=23 // pred_check_branch
          %164 = sbr.rel (%p162) target = $region28
        $region27: #{tpu_custom_call.1} parent=23 // pred_region
          %s165 = sand.u32 %s41, 1
          %s166 = scalar_lea.sflag [#allocation6], %s165
          %s167 = sand.u32 %s41, 1
          %s168 = smul.addr %s167, 128
          %s169 = scalar_lea.vmem [#allocation5], %s168
          %s170 = smul.u32 8, %s25
          %s172 = ssub.s32 2048, 2048
          %173 = vsyncadd %s166, %s172
          %s174 = smul.addr %s170, 2
          %s175 = smul.addr %s24, 32
          %s176 = sadd.s32 %s174, %s175
          %s177 = smul.addr %s176, 128
          %s178 = scalar_lea.hbm %s0, %s177
          %s179 = sshll.u32 %s169, 4
          %s180 = int_to_ptr.vmem [resolvable:$true] %s179
          %185 = dma.hbm_to_vmem [thread:$0]  %s178, 2048, %s180, %s166, 128, 128, 8
        $region28: #{tpu_custom_call.1} parent=23 // pred_fallthru
          _
      $region24: #{tpu_custom_call.1} parent=5 // pred_fallthru
        _
      %p186 = scmp.le.s32.totalorder 1, %s17
      %p187 = scmp.lt.s32.totalorder %s17, 3
      %p188 = pnand %p186, %p187
      %p189 = pneg %p188
      // Predicated region
      $region29: #{tpu_custom_call.1} parent=5 // pred_check
        _
      $region30: #{tpu_custom_call.1} parent=5 // pred_check_branch
        %191 = sbr.rel (%p188) target = $region32
      $region31: #{tpu_custom_call.1} parent=5 // pred_region
        %s192 = ssub.s32 %s17, 1
        %s193 = sand.u32 %s44, 1
        %s194 = scalar_lea.sflag [#allocation6], %s193
        %s195 = sand.u32 %s44, 1
        %s196 = smul.addr %s195, 128
        %s197 = scalar_lea.vmem [#allocation5], %s196
        // Predicated region
        $region33: #{tpu_custom_call.1} parent=31 // pred_check
          %p198 = pneg %p57
        $region34: #{tpu_custom_call.1} parent=31 // pred_check_branch
          %200 = sbr.rel (%p198) target = $region36
        $region35: #{tpu_custom_call.1} parent=31 // pred_region
          %201 = dma.done %s194, 2048
        $region36: #{tpu_custom_call.1} parent=31 // pred_fallthru
          _
        // Predicated region
        $region37: #{tpu_custom_call.1} parent=31 // pred_check
          %p202 = pneg %p78
        $region38: #{tpu_custom_call.1} parent=31 // pred_check_branch
          %204 = sbr.rel (%p202) target = $region40
        $region39: #{tpu_custom_call.1} parent=31 // pred_region
          %205 = dma.done [#allocation9], 896
        $region40: #{tpu_custom_call.1} parent=31 // pred_fallthru
          _
        %s206 = sand.u32 %s44, 1
        %s207 = scalar_lea.sflag [#allocation6], %s206
        %s208 = sand.u32 %s44, 1
        %s209 = smul.addr %s208, 128
        %s210 = scalar_lea.vmem [#allocation5], %s209
        %p211 = pneg %p57
        %p212 = pneg %p54
        %p213 = pneg %p78
        %p214 = pneg %p75
        %p215 = pneg %p99
        %p216 = pneg %p96
        %p217 = pneg %p127
        %p218 = pneg %p124
        %s219 = sand.u32 %s114, 1
        %s220 = scalar_lea.sflag [#allocation7], %s219
        %s221 = sand.u32 %s114, 1
        %s222 = smul.addr %s221, 128
        %s223 = scalar_lea.vmem [#allocation10], %s222
        %s224 = smul.u32 8, %s27
        %s225 = smul.u32 8, %s27
        %s226 = smul.u32 %s27, 8
        %p227 = scmp.gt.s32.totalorder %s27, 0
        // Predicated region
        $region41: #{tpu_custom_call.1} parent=31 // pred_check
          %p228 = pneg %p227
        $region42: #{tpu_custom_call.1} parent=31 // pred_check_branch
          %230 = sbr.rel (%p228) target = $region44
        $region43: #{tpu_custom_call.1} parent=31 // pred_region
          %s231 = ssub.s32 %s226, 3
          %s232 = smul.u32 %s231, 16
          %s233 = smul.u32 %s26, 256
          %s234 = sadd.s32 %s232, %s233
          %s235 = smul.addr %s234, 16
          %s236 = scalar_lea.hbm %s1, %s235
          // Predicated region
          $region45: #{tpu_custom_call.1} parent=43 // pred_check
            _
          $region46: #{tpu_custom_call.1} parent=43 // pred_check_branch
            %238 = sbr.rel target = $region48
          $region47: #{tpu_custom_call.1} parent=43 // pred_region
            %239 = sst [smem:[#allocation13]] [#allocation12]
            %240 = sst [smem:[#allocation14]] [#allocation11]
          $region48: #{tpu_custom_call.1} parent=43 // pred_fallthru
            _
          %242 = shalt.err (0)
          %s244 = sshll.u32 [#allocation3], 4
          %s245 = int_to_ptr.vmem [resolvable:$true] %s244
          %247 = dma.hbm_to_vmem [thread:$0]  %s236, 768, %s245, [#allocation4]
        $region44: #{tpu_custom_call.1} parent=31 // pred_fallthru
          _
        %p248 = scmp.lt.s32.totalorder %s27, 1
        // Predicated region
        $region49: #{tpu_custom_call.1} parent=31 // pred_check
          %p249 = pneg %p248
        $region50: #{tpu_custom_call.1} parent=31 // pred_check_branch
          %251 = sbr.rel (%p249) target = $region52
        $region51: #{tpu_custom_call.1} parent=31 // pred_region
          %s252 = sadd.s32 %s226, 8
          %s253 = smul.u32 %s252, 16
          %s254 = smul.u32 %s26, 256
          %s255 = sadd.s32 %s253, %s254
          %s256 = smul.addr %s255, 16
          %s257 = scalar_lea.hbm %s1, %s256
          %s258 = scalar_lea.vmem [#allocation3], 48
          %s259 = scalar_lea.sflag [#allocation4], 1
          // Predicated region
          $region53: #{tpu_custom_call.1} parent=51 // pred_check
            _
          $region54: #{tpu_custom_call.1} parent=51 // pred_check_branch
            %261 = sbr.rel target = $region56
          $region55: #{tpu_custom_call.1} parent=51 // pred_region
            %262 = sst [smem:[#allocation13]] [#allocation16]
            %263 = sst [smem:[#allocation14]] [#allocation15]
          $region56: #{tpu_custom_call.1} parent=51 // pred_fallthru
            _
          %265 = shalt.err (0)
          %s267 = sshll.u32 %s258, 4
          %s268 = int_to_ptr.vmem [resolvable:$true] %s267
          %270 = dma.hbm_to_vmem [thread:$0]  %s257, 768, %s268, %s259
        $region52: #{tpu_custom_call.1} parent=31 // pred_fallthru
          _
        %271 = vst [vmem:[#allocation2] sm:$0x7] 0.0
        %272 = vst [vmem:[#allocation2 + $0x18] sm:$0x7] 0.0
        %273 = vst [vmem:[#allocation2 + $0x30] sm:$0x7] 0.0
        %274 = vst [vmem:[#allocation2 + $0x48] sm:$0x7] 0.0
        %275 = vst [vmem:[#allocation2 + $0x60] sm:$0x7] 0.0
        %276 = vst [vmem:[#allocation2 + $0x78] sm:$0x7] 0.0
        %277 = vst [vmem:[#allocation2 + $0x90] sm:$0x7] 0.0
        %278 = vst [vmem:[#allocation2 + $0xa8] sm:$0x7] 0.0
        %279 = vst [vmem:[#allocation2 + $0xc0] sm:$0x7] 0.0
        %280 = vst [vmem:[#allocation2 + $0xd8] sm:$0x7] 0.0
        %281 = vst [vmem:[#allocation2 + $0xf0] sm:$0x7] 0.0
        %282 = vst [vmem:[#allocation2 + $0x108] sm:$0x7] 0.0
        %283 = vst [vmem:[#allocation2 + $0x120] sm:$0x7] 0.0
        %284 = vst [vmem:[#allocation2 + $0x138] sm:$0x7] 0.0
        %285 = vst [vmem:[#allocation2 + $0x13] sm:$0x7] 0.0
        %286 = vst [vmem:[#allocation2 + $0x2b] sm:$0x7] 0.0
        %287 = vst [vmem:[#allocation2 + $0x43] sm:$0x7] 0.0
        %288 = vst [vmem:[#allocation2 + $0x5b] sm:$0x7] 0.0
        %289 = vst [vmem:[#allocation2 + $0x73] sm:$0x7] 0.0
        %290 = vst [vmem:[#allocation2 + $0x8b] sm:$0x7] 0.0
        %291 = vst [vmem:[#allocation2 + $0xa3] sm:$0x7] 0.0
        %292 = vst [vmem:[#allocation2 + $0xbb] sm:$0x7] 0.0
        %293 = vst [vmem:[#allocation2 + $0xd3] sm:$0x7] 0.0
        %294 = vst [vmem:[#allocation2 + $0xeb] sm:$0x7] 0.0
        %295 = vst [vmem:[#allocation2 + $0x103] sm:$0x7] 0.0
        %296 = vst [vmem:[#allocation2 + $0x11b] sm:$0x7] 0.0
        %297 = vst [vmem:[#allocation2 + $0x133] sm:$0x7] 0.0
        %298 = vst [vmem:[#allocation2 + $0x14b] sm:$0x7] 0.0
        %v299 = vld [vmem:[%s197] sm:$0xff]
        %v300 = vld [vmem:[%s197 + $0x8] sm:$0xff]
        %v301 = vld [vmem:[%s197 + $0x10] sm:$0xff]
        %v302 = vld [vmem:[%s197 + $0x18] sm:$0xff]
        %v303 = vld [vmem:[%s197 + $0x20] sm:$0xff]
        %v304 = vld [vmem:[%s197 + $0x28] sm:$0xff]
        %v305 = vld [vmem:[%s197 + $0x30] sm:$0xff]
        %v306 = vld [vmem:[%s197 + $0x38] sm:$0xff]
        %v307 = vld [vmem:[%s197 + $0x40] sm:$0xff]
        %v308 = vld [vmem:[%s197 + $0x48] sm:$0xff]
        %v309 = vld [vmem:[%s197 + $0x50] sm:$0xff]
        %v310 = vld [vmem:[%s197 + $0x58] sm:$0xff]
        %v311 = vld [vmem:[%s197 + $0x60] sm:$0xff]
        %v312 = vld [vmem:[%s197 + $0x68] sm:$0xff]
        %v313 = vld [vmem:[%s197 + $0x70] sm:$0xff]
        %v314 = vld [vmem:[%s197 + $0x78] sm:$0xff]
        %v315 = vmax.f32 %v299, 0.0
        %v316 = vmax.f32 %v300, 0.0
        %v317 = vmax.f32 %v301, 0.0
        %v318 = vmax.f32 %v302, 0.0
        %v319 = vmax.f32 %v303, 0.0
        %v320 = vmax.f32 %v304, 0.0
        %v321 = vmax.f32 %v305, 0.0
        %v322 = vmax.f32 %v306, 0.0
        %v323 = vmax.f32 %v307, 0.0
        %v324 = vmax.f32 %v308, 0.0
        %v325 = vmax.f32 %v309, 0.0
        %v326 = vmax.f32 %v310, 0.0
        %v327 = vmax.f32 %v311, 0.0
        %v328 = vmax.f32 %v312, 0.0
        %v329 = vmax.f32 %v313, 0.0
        %v330 = vmax.f32 %v314, 0.0
        %s331 = scalar_lea.vmem [#allocation2], 72
        %332 = vst [vmem:[%s331 + $0x3] sm:$0xff] %v315
        %333 = vst [vmem:[%s331 + $0xb] sm:$0xff] %v316
        %334 = vst [vmem:[%s331 + $0x1b] sm:$0xff] %v317
        %335 = vst [vmem:[%s331 + $0x23] sm:$0xff] %v318
        %336 = vst [vmem:[%s331 + $0x33] sm:$0xff] %v319
        %337 = vst [vmem:[%s331 + $0x3b] sm:$0xff] %v320
        %338 = vst [vmem:[%s331 + $0x4b] sm:$0xff] %v321
        %339 = vst [vmem:[%s331 + $0x53] sm:$0xff] %v322
        %340 = vst [vmem:[%s331 + $0x63] sm:$0xff] %v323
        %341 = vst [vmem:[%s331 + $0x6b] sm:$0xff] %v324
        %342 = vst [vmem:[%s331 + $0x7b] sm:$0xff] %v325
        %343 = vst [vmem:[%s331 + $0x83] sm:$0xff] %v326
        %344 = vst [vmem:[%s331 + $0x93] sm:$0xff] %v327
        %345 = vst [vmem:[%s331 + $0x9b] sm:$0xff] %v328
        %346 = vst [vmem:[%s331 + $0xab] sm:$0xff] %v329
        %347 = vst [vmem:[%s331 + $0xb3] sm:$0xff] %v330
        // Predicated region
        $region57: #{tpu_custom_call.1} parent=31 // pred_check
          %p348 = pneg %p227
        $region58: #{tpu_custom_call.1} parent=31 // pred_check_branch
          %350 = sbr.rel (%p348) target = $region60
        $region59: #{tpu_custom_call.1} parent=31 // pred_region
          %s351 = smul.u32 3, 16
          %s352 = smul.u32 %s351, 1
          %s353 = sshll.u32 %s352, 4
          %354 = dma.done [#allocation4], %s353
          %v355 = vld [vmem:[#allocation3] sm:$0xff]
          %v356 = vld [vmem:[#allocation3 + $0x8] sm:$0xff]
          %v357 = vld [vmem:[#allocation3 + $0x10] sm:$0xff]
          %v358 = vld [vmem:[#allocation3 + $0x18] sm:$0xff]
          %v359 = vld [vmem:[#allocation3 + $0x20] sm:$0xff]
          %v360 = vld [vmem:[#allocation3 + $0x28] sm:$0xff]
          %v361 = vmax.f32 %v355, 0.0
          %v362 = vmax.f32 %v356, 0.0
          %v363 = vmax.f32 %v357, 0.0
          %v364 = vmax.f32 %v358, 0.0
          %v365 = vmax.f32 %v359, 0.0
          %v366 = vmax.f32 %v360, 0.0
          %367 = vst [vmem:[#allocation2 + $0x3] sm:$0xff] %v361
          %368 = vst [vmem:[#allocation2 + $0xb] sm:$0xff] %v362
          %369 = vst [vmem:[#allocation2 + $0x1b] sm:$0xff] %v363
          %370 = vst [vmem:[#allocation2 + $0x23] sm:$0xff] %v364
          %371 = vst [vmem:[#allocation2 + $0x33] sm:$0xff] %v365
          %372 = vst [vmem:[#allocation2 + $0x3b] sm:$0xff] %v366
        $region60: #{tpu_custom_call.1} parent=31 // pred_fallthru
          _
        %p373 = scmp.eq.s32.totalorder %s27, 0
        // Predicated region
        $region61: #{tpu_custom_call.1} parent=31 // pred_check
          %p374 = pneg %p373
        $region62: #{tpu_custom_call.1} parent=31 // pred_check_branch
          %376 = sbr.rel (%p374) target = $region64
        $region63: #{tpu_custom_call.1} parent=31 // pred_region
          %377 = vst [vmem:[#allocation2 + $0x3] sm:$0xff] 0.0
          %378 = vst [vmem:[#allocation2 + $0xb] sm:$0xff] 0.0
          %379 = vst [vmem:[#allocation2 + $0x1b] sm:$0xff] 0.0
          %380 = vst [vmem:[#allocation2 + $0x23] sm:$0xff] 0.0
          %381 = vst [vmem:[#allocation2 + $0x33] sm:$0xff] 0.0
          %382 = vst [vmem:[#allocation2 + $0x3b] sm:$0xff] 0.0
        $region64: #{tpu_custom_call.1} parent=31 // pred_fallthru
          _
        // Predicated region
        $region65: #{tpu_custom_call.1} parent=31 // pred_check
          %p383 = pneg %p248
        $region66: #{tpu_custom_call.1} parent=31 // pred_check_branch
          %385 = sbr.rel (%p383) target = $region68
        $region67: #{tpu_custom_call.1} parent=31 // pred_region
          %s386 = scalar_lea.vmem [#allocation3], 48
          %s387 = scalar_lea.sflag [#allocation4], 1
          %s388 = smul.u32 3, 16
          %s389 = smul.u32 %s388, 1
          %s390 = sshll.u32 %s389, 4
          %391 = dma.done %s387, %s390
          %v392 = vld [vmem:[%s386] sm:$0xff]
          %v393 = vld [vmem:[%s386 + $0x8] sm:$0xff]
          %v394 = vld [vmem:[%s386 + $0x10] sm:$0xff]
          %v395 = vld [vmem:[%s386 + $0x18] sm:$0xff]
          %v396 = vld [vmem:[%s386 + $0x20] sm:$0xff]
          %v397 = vld [vmem:[%s386 + $0x28] sm:$0xff]
          %v398 = vmax.f32 %v392, 0.0
          %v399 = vmax.f32 %v393, 0.0
          %v400 = vmax.f32 %v394, 0.0
          %v401 = vmax.f32 %v395, 0.0
          %v402 = vmax.f32 %v396, 0.0
          %v403 = vmax.f32 %v397, 0.0
          %s404 = scalar_lea.vmem [#allocation2], 264
          %405 = vst [vmem:[%s404 + $0x3] sm:$0xff] %v398
          %406 = vst [vmem:[%s404 + $0xb] sm:$0xff] %v399
          %407 = vst [vmem:[%s404 + $0x1b] sm:$0xff] %v400
          %408 = vst [vmem:[%s404 + $0x23] sm:$0xff] %v401
          %409 = vst [vmem:[%s404 + $0x33] sm:$0xff] %v402
          %410 = vst [vmem:[%s404 + $0x3b] sm:$0xff] %v403
        $region68: #{tpu_custom_call.1} parent=31 // pred_fallthru
          _
        %p411 = scmp.eq.s32.totalorder %s27, 1
        // Predicated region
        $region69: #{tpu_custom_call.1} parent=31 // pred_check
          %p412 = pneg %p411
        $region70: #{tpu_custom_call.1} parent=31 // pred_check_branch
          %414 = sbr.rel (%p412) target = $region72
        $region71: #{tpu_custom_call.1} parent=31 // pred_region
          %s415 = scalar_lea.vmem [#allocation2], 264
          %416 = vst [vmem:[%s415 + $0x3] sm:$0xff] 0.0
          %417 = vst [vmem:[%s415 + $0xb] sm:$0xff] 0.0
          %418 = vst [vmem:[%s415 + $0x1b] sm:$0xff] 0.0
          %419 = vst [vmem:[%s415 + $0x23] sm:$0xff] 0.0
          %420 = vst [vmem:[%s415 + $0x33] sm:$0xff] 0.0
          %421 = vst [vmem:[%s415 + $0x3b] sm:$0xff] 0.0
        $region72: #{tpu_custom_call.1} parent=31 // pred_fallthru
          _
        %v422 = vld [vmem:[%s3] sm:$0x1]
        %v423 = vld [vmem:[#allocation2] sm:$0xff]
        %v424 = vld [vmem:[#allocation2 + $0x18] sm:$0xff]
        %v425 = vld [vmem:[#allocation2 + $0x30] sm:$0xff]
        %v426 = vld [vmem:[#allocation2 + $0x48] sm:$0xff]
        %v427 = vld [vmem:[#allocation2 + $0x60] sm:$0xff]
        %v428 = vld [vmem:[#allocation2 + $0x78] sm:$0xff]
        %v429 = vld [vmem:[#allocation2 + $0x90] sm:$0xff]
        %v430 = vld [vmem:[#allocation2 + $0xa8] sm:$0xff]
        %v431 = vld [vmem:[#allocation8] sm:$0x1]
        %v432 = vlaneseq
        %v433 = vshrl.u32 %v432, 7
        %v434 = vsub.s32 0, %v433
        %v435 = vrot.slane %v431, %v434
        %v436 = vmul.f32 %v423, %v435
        %v437 = vmul.f32 %v424, %v435
        %v438 = vmul.f32 %v425, %v435
        %v439 = vmul.f32 %v426, %v435
        %v440 = vmul.f32 %v427, %v435
        %v441 = vmul.f32 %v428, %v435
        %v442 = vmul.f32 %v429, %v435
        %v443 = vmul.f32 %v430, %v435
        %v444 = vadd.f32 %v436, 0.0
        %v445 = vadd.f32 %v437, 0.0
        %v446 = vadd.f32 %v438, 0.0
        %v447 = vadd.f32 %v439, 0.0
        %v448 = vadd.f32 %v440, 0.0
        %v449 = vadd.f32 %v441, 0.0
        %v450 = vadd.f32 %v442, 0.0
        %v451 = vadd.f32 %v443, 0.0
        %v452 = vld [vmem:[#allocation2 + $0x1] sm:$0xff]
        %v453 = vld [vmem:[#allocation2 + $0x19] sm:$0xff]
        %v454 = vld [vmem:[#allocation2 + $0x31] sm:$0xff]
        %v455 = vld [vmem:[#allocation2 + $0x49] sm:$0xff]
        %v456 = vld [vmem:[#allocation2 + $0x61] sm:$0xff]
        %v457 = vld [vmem:[#allocation2 + $0x79] sm:$0xff]
        %v458 = vld [vmem:[#allocation2 + $0x91] sm:$0xff]
        %v459 = vld [vmem:[#allocation2 + $0xa9] sm:$0xff]
        %v460 = vld [vmem:[#allocation8 + $0x1] sm:$0x1]
        %v461 = vlaneseq
        %v462 = vshrl.u32 %v461, 7
        %v463 = vsub.s32 0, %v462
        %v464 = vrot.slane %v460, %v463
        %v465 = vmul.f32 %v452, %v464
        %v466 = vmul.f32 %v453, %v464
        %v467 = vmul.f32 %v454, %v464
        %v468 = vmul.f32 %v455, %v464
        %v469 = vmul.f32 %v456, %v464
        %v470 = vmul.f32 %v457, %v464
        %v471 = vmul.f32 %v458, %v464
        %v472 = vmul.f32 %v459, %v464
        %v473 = vadd.f32 %v465, 0.0
        %v474 = vadd.f32 %v466, 0.0
        %v475 = vadd.f32 %v467, 0.0
        %v476 = vadd.f32 %v468, 0.0
        %v477 = vadd.f32 %v469, 0.0
        %v478 = vadd.f32 %v470, 0.0
        %v479 = vadd.f32 %v471, 0.0
        %v480 = vadd.f32 %v472, 0.0
        %v481 = vld [vmem:[#allocation2 + $0x2] sm:$0xff]
        %v482 = vld [vmem:[#allocation2 + $0x1a] sm:$0xff]
        %v483 = vld [vmem:[#allocation2 + $0x32] sm:$0xff]
        %v484 = vld [vmem:[#allocation2 + $0x4a] sm:$0xff]
        %v485 = vld [vmem:[#allocation2 + $0x62] sm:$0xff]
        %v486 = vld [vmem:[#allocation2 + $0x7a] sm:$0xff]
        %v487 = vld [vmem:[#allocation2 + $0x92] sm:$0xff]
        %v488 = vld [vmem:[#allocation2 + $0xaa] sm:$0xff]
        %v489 = vld [vmem:[#allocation8 + $0x2] sm:$0x1]
        %v490 = vlaneseq
        %v491 = vshrl.u32 %v490, 7
        %v492 = vsub.s32 0, %v491
        %v493 = vrot.slane %v489, %v492
        %v494 = vmul.f32 %v481, %v493
        %v495 = vmul.f32 %v482, %v493
        %v496 = vmul.f32 %v483, %v493
        %v497 = vmul.f32 %v484, %v493
        %v498 = vmul.f32 %v485, %v493
        %v499 = vmul.f32 %v486, %v493
        %v500 = vmul.f32 %v487, %v493
        %v501 = vmul.f32 %v488, %v493
        %v502 = vadd.f32 %v444, %v494
        %v503 = vadd.f32 %v445, %v495
        %v504 = vadd.f32 %v446, %v496
        %v505 = vadd.f32 %v447, %v497
        %v506 = vadd.f32 %v448, %v498
        %v507 = vadd.f32 %v449, %v499
        %v508 = vadd.f32 %v450, %v500
        %v509 = vadd.f32 %v451, %v501
        %v510 = vld [vmem:[#allocation2 + $0x3] sm:$0xff]
        %v511 = vld [vmem:[#allocation2 + $0x1b] sm:$0xff]
        %v512 = vld [vmem:[#allocation2 + $0x33] sm:$0xff]
        %v513 = vld [vmem:[#allocation2 + $0x4b] sm:$0xff]
        %v514 = vld [vmem:[#allocation2 + $0x63] sm:$0xff]
        %v515 = vld [vmem:[#allocation2 + $0x7b] sm:$0xff]
        %v516 = vld [vmem:[#allocation2 + $0x93] sm:$0xff]
        %v517 = vld [vmem:[#allocation2 + $0xab] sm:$0xff]
        %v518 = vld [vmem:[#allocation8 + $0x3] sm:$0x1]
        %v519 = vlaneseq
        %v520 = vshrl.u32 %v519, 7
        %v521 = vsub.s32 0, %v520
        %v522 = vrot.slane %v518, %v521
        %v523 = vmul.f32 %v510, %v522
        %v524 = vmul.f32 %v511, %v522
        %v525 = vmul.f32 %v512, %v522
        %v526 = vmul.f32 %v513, %v522
        %v527 = vmul.f32 %v514, %v522
        %v528 = vmul.f32 %v515, %v522
        %v529 = vmul.f32 %v516, %v522
        %v530 = vmul.f32 %v517, %v522
        %v531 = vadd.f32 %v473, %v523
        %v532 = vadd.f32 %v474, %v524
        %v533 = vadd.f32 %v475, %v525
        %v534 = vadd.f32 %v476, %v526
        %v535 = vadd.f32 %v477, %v527
        %v536 = vadd.f32 %v478, %v528
        %v537 = vadd.f32 %v479, %v529
        %v538 = vadd.f32 %v480, %v530
        %v539 = vld [vmem:[#allocation2 + $0x4] sm:$0xff]
        %v540 = vld [vmem:[#allocation2 + $0x1c] sm:$0xff]
        %v541 = vld [vmem:[#allocation2 + $0x34] sm:$0xff]
        %v542 = vld [vmem:[#allocation2 + $0x4c] sm:$0xff]
        %v543 = vld [vmem:[#allocation2 + $0x64] sm:$0xff]
        %v544 = vld [vmem:[#allocation2 + $0x7c] sm:$0xff]
        %v545 = vld [vmem:[#allocation2 + $0x94] sm:$0xff]
        %v546 = vld [vmem:[#allocation2 + $0xac] sm:$0xff]
        %v547 = vld [vmem:[#allocation8 + $0x4] sm:$0x1]
        %v548 = vlaneseq
        %v549 = vshrl.u32 %v548, 7
        %v550 = vsub.s32 0, %v549
        %v551 = vrot.slane %v547, %v550
        %v552 = vmul.f32 %v539, %v551
        %v553 = vmul.f32 %v540, %v551
        %v554 = vmul.f32 %v541, %v551
        %v555 = vmul.f32 %v542, %v551
        %v556 = vmul.f32 %v543, %v551
        %v557 = vmul.f32 %v544, %v551
        %v558 = vmul.f32 %v545, %v551
        %v559 = vmul.f32 %v546, %v551
        %v560 = vadd.f32 %v502, %v552
        %v561 = vadd.f32 %v503, %v553
        %v562 = vadd.f32 %v504, %v554
        %v563 = vadd.f32 %v505, %v555
        %v564 = vadd.f32 %v506, %v556
        %v565 = vadd.f32 %v507, %v557
        %v566 = vadd.f32 %v508, %v558
        %v567 = vadd.f32 %v509, %v559
        %v568 = vld [vmem:[#allocation2 + $0x5] sm:$0xff]
        %v569 = vld [vmem:[#allocation2 + $0x1d] sm:$0xff]
        %v570 = vld [vmem:[#allocation2 + $0x35] sm:$0xff]
        %v571 = vld [vmem:[#allocation2 + $0x4d] sm:$0xff]
        %v572 = vld [vmem:[#allocation2 + $0x65] sm:$0xff]
        %v573 = vld [vmem:[#allocation2 + $0x7d] sm:$0xff]
        %v574 = vld [vmem:[#allocation2 + $0x95] sm:$0xff]
        %v575 = vld [vmem:[#allocation2 + $0xad] sm:$0xff]
        %v576 = vld [vmem:[#allocation8 + $0x5] sm:$0x1]
        %v577 = vlaneseq
        %v578 = vshrl.u32 %v577, 7
        %v579 = vsub.s32 0, %v578
        %v580 = vrot.slane %v576, %v579
        %v581 = vmul.f32 %v568, %v580
        %v582 = vmul.f32 %v569, %v580
        %v583 = vmul.f32 %v570, %v580
        %v584 = vmul.f32 %v571, %v580
        %v585 = vmul.f32 %v572, %v580
        %v586 = vmul.f32 %v573, %v580
        %v587 = vmul.f32 %v574, %v580
        %v588 = vmul.f32 %v575, %v580
        %v589 = vadd.f32 %v531, %v581
        %v590 = vadd.f32 %v532, %v582
        %v591 = vadd.f32 %v533, %v583
        %v592 = vadd.f32 %v534, %v584
        %v593 = vadd.f32 %v535, %v585
        %v594 = vadd.f32 %v536, %v586
        %v595 = vadd.f32 %v537, %v587
        %v596 = vadd.f32 %v538, %v588
        %v597 = vld [vmem:[#allocation2 + $0x6] sm:$0xff]
        %v598 = vld [vmem:[#allocation2 + $0x1e] sm:$0xff]
        %v599 = vld [vmem:[#allocation2 + $0x36] sm:$0xff]
        %v600 = vld [vmem:[#allocation2 + $0x4e] sm:$0xff]
        %v601 = vld [vmem:[#allocation2 + $0x66] sm:$0xff]
        %v602 = vld [vmem:[#allocation2 + $0x7e] sm:$0xff]
        %v603 = vld [vmem:[#allocation2 + $0x96] sm:$0xff]
        %v604 = vld [vmem:[#allocation2 + $0xae] sm:$0xff]
        %v605 = vld [vmem:[#allocation8 + $0x6] sm:$0x1]
        %v606 = vlaneseq
        %v607 = vshrl.u32 %v606, 7
        %v608 = vsub.s32 0, %v607
        %v609 = vrot.slane %v605, %v608
        %v610 = vmul.f32 %v597, %v609
        %v611 = vmul.f32 %v598, %v609
        %v612 = vmul.f32 %v599, %v609
        %v613 = vmul.f32 %v600, %v609
        %v614 = vmul.f32 %v601, %v609
        %v615 = vmul.f32 %v602, %v609
        %v616 = vmul.f32 %v603, %v609
        %v617 = vmul.f32 %v604, %v609
        %v618 = vadd.f32 %v560, %v610
        %v619 = vadd.f32 %v561, %v611
        %v620 = vadd.f32 %v562, %v612
        %v621 = vadd.f32 %v563, %v613
        %v622 = vadd.f32 %v564, %v614
        %v623 = vadd.f32 %v565, %v615
        %v624 = vadd.f32 %v566, %v616
        %v625 = vadd.f32 %v567, %v617
        %s626 = scalar_lea.vmem [#allocation2], 24
        %v627 = vld [vmem:[%s626] sm:$0xff]
        %v628 = vld [vmem:[%s626 + $0x18] sm:$0xff]
        %v629 = vld [vmem:[%s626 + $0x30] sm:$0xff]
        %v630 = vld [vmem:[%s626 + $0x48] sm:$0xff]
        %v631 = vld [vmem:[%s626 + $0x60] sm:$0xff]
        %v632 = vld [vmem:[%s626 + $0x78] sm:$0xff]
        %v633 = vld [vmem:[%s626 + $0x90] sm:$0xff]
        %v634 = vld [vmem:[%s626 + $0xa8] sm:$0xff]
        %s635 = scalar_lea.vmem [#allocation8], 8
        %v636 = vld [vmem:[%s635] sm:$0x1]
        %v637 = vlaneseq
        %v638 = vshrl.u32 %v637, 7
        %v639 = vsub.s32 0, %v638
        %v640 = vrot.slane %v636, %v639
        %v641 = vmul.f32 %v627, %v640
        %v642 = vmul.f32 %v628, %v640
        %v643 = vmul.f32 %v629, %v640
        %v644 = vmul.f32 %v630, %v640
        %v645 = vmul.f32 %v631, %v640
        %v646 = vmul.f32 %v632, %v640
        %v647 = vmul.f32 %v633, %v640
        %v648 = vmul.f32 %v634, %v640
        %v649 = vadd.f32 %v589, %v641
        %v650 = vadd.f32 %v590, %v642
        %v651 = vadd.f32 %v591, %v643
        %v652 = vadd.f32 %v592, %v644
        %v653 = vadd.f32 %v593, %v645
        %v654 = vadd.f32 %v594, %v646
        %v655 = vadd.f32 %v595, %v647
        %v656 = vadd.f32 %v596, %v648
        %v657 = vld [vmem:[%s626 + $0x1] sm:$0xff]
        %v658 = vld [vmem:[%s626 + $0x19] sm:$0xff]
        %v659 = vld [vmem:[%s626 + $0x31] sm:$0xff]
        %v660 = vld [vmem:[%s626 + $0x49] sm:$0xff]
        %v661 = vld [vmem:[%s626 + $0x61] sm:$0xff]
        %v662 = vld [vmem:[%s626 + $0x79] sm:$0xff]
        %v663 = vld [vmem:[%s626 + $0x91] sm:$0xff]
        %v664 = vld [vmem:[%s626 + $0xa9] sm:$0xff]
        %v665 = vld [vmem:[%s635 + $0x1] sm:$0x1]
        %v666 = vlaneseq
        %v667 = vshrl.u32 %v666, 7
        %v668 = vsub.s32 0, %v667
        %v669 = vrot.slane %v665, %v668
        %v670 = vmul.f32 %v657, %v669
        %v671 = vmul.f32 %v658, %v669
        %v672 = vmul.f32 %v659, %v669
        %v673 = vmul.f32 %v660, %v669
        %v674 = vmul.f32 %v661, %v669
        %v675 = vmul.f32 %v662, %v669
        %v676 = vmul.f32 %v663, %v669
        %v677 = vmul.f32 %v664, %v669
        %v678 = vadd.f32 %v618, %v670
        %v679 = vadd.f32 %v619, %v671
        %v680 = vadd.f32 %v620, %v672
        %v681 = vadd.f32 %v621, %v673
        %v682 = vadd.f32 %v622, %v674
        %v683 = vadd.f32 %v623, %v675
        %v684 = vadd.f32 %v624, %v676
        %v685 = vadd.f32 %v625, %v677
        %v686 = vld [vmem:[%s626 + $0x2] sm:$0xff]
        %v687 = vld [vmem:[%s626 + $0x1a] sm:$0xff]
        %v688 = vld [vmem:[%s626 + $0x32] sm:$0xff]
        %v689 = vld [vmem:[%s626 + $0x4a] sm:$0xff]
        %v690 = vld [vmem:[%s626 + $0x62] sm:$0xff]
        %v691 = vld [vmem:[%s626 + $0x7a] sm:$0xff]
        %v692 = vld [vmem:[%s626 + $0x92] sm:$0xff]
        %v693 = vld [vmem:[%s626 + $0xaa] sm:$0xff]
        %v694 = vld [vmem:[%s635 + $0x2] sm:$0x1]
        %v695 = vlaneseq
        %v696 = vshrl.u32 %v695, 7
        %v697 = vsub.s32 0, %v696
        %v698 = vrot.slane %v694, %v697
        %v699 = vmul.f32 %v686, %v698
        %v700 = vmul.f32 %v687, %v698
        %v701 = vmul.f32 %v688, %v698
        %v702 = vmul.f32 %v689, %v698
        %v703 = vmul.f32 %v690, %v698
        %v704 = vmul.f32 %v691, %v698
        %v705 = vmul.f32 %v692, %v698
        %v706 = vmul.f32 %v693, %v698
        %v707 = vadd.f32 %v649, %v699
        %v708 = vadd.f32 %v650, %v700
        %v709 = vadd.f32 %v651, %v701
        %v710 = vadd.f32 %v652, %v702
        %v711 = vadd.f32 %v653, %v703
        %v712 = vadd.f32 %v654, %v704
        %v713 = vadd.f32 %v655, %v705
        %v714 = vadd.f32 %v656, %v706
        %v715 = vld [vmem:[%s626 + $0x3] sm:$0xff]
        %v716 = vld [vmem:[%s626 + $0x1b] sm:$0xff]
        %v717 = vld [vmem:[%s626 + $0x33] sm:$0xff]
        %v718 = vld [vmem:[%s626 + $0x4b] sm:$0xff]
        %v719 = vld [vmem:[%s626 + $0x63] sm:$0xff]
        %v720 = vld [vmem:[%s626 + $0x7b] sm:$0xff]
        %v721 = vld [vmem:[%s626 + $0x93] sm:$0xff]
        %v722 = vld [vmem:[%s626 + $0xab] sm:$0xff]
        %v723 = vld [vmem:[%s635 + $0x3] sm:$0x1]
        %v724 = vlaneseq
        %v725 = vshrl.u32 %v724, 7
        %v726 = vsub.s32 0, %v725
        %v727 = vrot.slane %v723, %v726
        %v728 = vmul.f32 %v715, %v727
        %v729 = vmul.f32 %v716, %v727
        %v730 = vmul.f32 %v717, %v727
        %v731 = vmul.f32 %v718, %v727
        %v732 = vmul.f32 %v719, %v727
        %v733 = vmul.f32 %v720, %v727
        %v734 = vmul.f32 %v721, %v727
        %v735 = vmul.f32 %v722, %v727
        %v736 = vadd.f32 %v678, %v728
        %v737 = vadd.f32 %v679, %v729
        %v738 = vadd.f32 %v680, %v730
        %v739 = vadd.f32 %v681, %v731
        %v740 = vadd.f32 %v682, %v732
        %v741 = vadd.f32 %v683, %v733
        %v742 = vadd.f32 %v684, %v734
        %v743 = vadd.f32 %v685, %v735
        %v744 = vld [vmem:[%s626 + $0x4] sm:$0xff]
        %v745 = vld [vmem:[%s626 + $0x1c] sm:$0xff]
        %v746 = vld [vmem:[%s626 + $0x34] sm:$0xff]
        %v747 = vld [vmem:[%s626 + $0x4c] sm:$0xff]
        %v748 = vld [vmem:[%s626 + $0x64] sm:$0xff]
        %v749 = vld [vmem:[%s626 + $0x7c] sm:$0xff]
        %v750 = vld [vmem:[%s626 + $0x94] sm:$0xff]
        %v751 = vld [vmem:[%s626 + $0xac] sm:$0xff]
        %v752 = vld [vmem:[%s635 + $0x4] sm:$0x1]
        %v753 = vlaneseq
        %v754 = vshrl.u32 %v753, 7
        %v755 = vsub.s32 0, %v754
        %v756 = vrot.slane %v752, %v755
        %v757 = vmul.f32 %v744, %v756
        %v758 = vmul.f32 %v745, %v756
        %v759 = vmul.f32 %v746, %v756
        %v760 = vmul.f32 %v747, %v756
        %v761 = vmul.f32 %v748, %v756
        %v762 = vmul.f32 %v749, %v756
        %v763 = vmul.f32 %v750, %v756
        %v764 = vmul.f32 %v751, %v756
        %v765 = vadd.f32 %v707, %v757
        %v766 = vadd.f32 %v708, %v758
        %v767 = vadd.f32 %v709, %v759
        %v768 = vadd.f32 %v710, %v760
        %v769 = vadd.f32 %v711, %v761
        %v770 = vadd.f32 %v712, %v762
        %v771 = vadd.f32 %v713, %v763
        %v772 = vadd.f32 %v714, %v764
        %v773 = vld [vmem:[%s626 + $0x5] sm:$0xff]
        %v774 = vld [vmem:[%s626 + $0x1d] sm:$0xff]
        %v775 = vld [vmem:[%s626 + $0x35] sm:$0xff]
        %v776 = vld [vmem:[%s626 + $0x4d] sm:$0xff]
        %v777 = vld [vmem:[%s626 + $0x65] sm:$0xff]
        %v778 = vld [vmem:[%s626 + $0x7d] sm:$0xff]
        %v779 = vld [vmem:[%s626 + $0x95] sm:$0xff]
        %v780 = vld [vmem:[%s626 + $0xad] sm:$0xff]
        %v781 = vld [vmem:[%s635 + $0x5] sm:$0x1]
        %v782 = vlaneseq
        %v783 = vshrl.u32 %v782, 7
        %v784 = vsub.s32 0, %v783
        %v785 = vrot.slane %v781, %v784
        %v786 = vmul.f32 %v773, %v785
        %v787 = vmul.f32 %v774, %v785
        %v788 = vmul.f32 %v775, %v785
        %v789 = vmul.f32 %v776, %v785
        %v790 = vmul.f32 %v777, %v785
        %v791 = vmul.f32 %v778, %v785
        %v792 = vmul.f32 %v779, %v785
        %v793 = vmul.f32 %v780, %v785
        %v794 = vadd.f32 %v736, %v786
        %v795 = vadd.f32 %v737, %v787
        %v796 = vadd.f32 %v738, %v788
        %v797 = vadd.f32 %v739, %v789
        %v798 = vadd.f32 %v740, %v790
        %v799 = vadd.f32 %v741, %v791
        %v800 = vadd.f32 %v742, %v792
        %v801 = vadd.f32 %v743, %v793
        %v802 = vld [vmem:[%s626 + $0x6] sm:$0xff]
        %v803 = vld [vmem:[%s626 + $0x1e] sm:$0xff]
        %v804 = vld [vmem:[%s626 + $0x36] sm:$0xff]
        %v805 = vld [vmem:[%s626 + $0x4e] sm:$0xff]
        %v806 = vld [vmem:[%s626 + $0x66] sm:$0xff]
        %v807 = vld [vmem:[%s626 + $0x7e] sm:$0xff]
        %v808 = vld [vmem:[%s626 + $0x96] sm:$0xff]
        %v809 = vld [vmem:[%s626 + $0xae] sm:$0xff]
        %v810 = vld [vmem:[%s635 + $0x6] sm:$0x1]
        %v811 = vlaneseq
        %v812 = vshrl.u32 %v811, 7
        %v813 = vsub.s32 0, %v812
        %v814 = vrot.slane %v810, %v813
        %v815 = vmul.f32 %v802, %v814
        %v816 = vmul.f32 %v803, %v814
        %v817 = vmul.f32 %v804, %v814
        %v818 = vmul.f32 %v805, %v814
        %v819 = vmul.f32 %v806, %v814
        %v820 = vmul.f32 %v807, %v814
        %v821 = vmul.f32 %v808, %v814
        %v822 = vmul.f32 %v809, %v814
        %v823 = vadd.f32 %v765, %v815
        %v824 = vadd.f32 %v766, %v816
        %v825 = vadd.f32 %v767, %v817
        %v826 = vadd.f32 %v768, %v818
        %v827 = vadd.f32 %v769, %v819
        %v828 = vadd.f32 %v770, %v820
        %v829 = vadd.f32 %v771, %v821
        %v830 = vadd.f32 %v772, %v822
        %s831 = scalar_lea.vmem [#allocation2], 48
        %v832 = vld [vmem:[%s831] sm:$0xff]
        %v833 = vld [vmem:[%s831 + $0x18] sm:$0xff]
        %v834 = vld [vmem:[%s831 + $0x30] sm:$0xff]
        %v835 = vld [vmem:[%s831 + $0x48] sm:$0xff]
        %v836 = vld [vmem:[%s831 + $0x60] sm:$0xff]
        %v837 = vld [vmem:[%s831 + $0x78] sm:$0xff]
        %v838 = vld [vmem:[%s831 + $0x90] sm:$0xff]
        %v839 = vld [vmem:[%s831 + $0xa8] sm:$0xff]
        %s840 = scalar_lea.vmem [#allocation8], 16
        %v841 = vld [vmem:[%s840] sm:$0x1]
        %v842 = vlaneseq
        %v843 = vshrl.u32 %v842, 7
        %v844 = vsub.s32 0, %v843
        %v845 = vrot.slane %v841, %v844
        %v846 = vmul.f32 %v832, %v845
        %v847 = vmul.f32 %v833, %v845
        %v848 = vmul.f32 %v834, %v845
        %v849 = vmul.f32 %v835, %v845
        %v850 = vmul.f32 %v836, %v845
        %v851 = vmul.f32 %v837, %v845
        %v852 = vmul.f32 %v838, %v845
        %v853 = vmul.f32 %v839, %v845
        %v854 = vadd.f32 %v794, %v846
        %v855 = vadd.f32 %v795, %v847
        %v856 = vadd.f32 %v796, %v848
        %v857 = vadd.f32 %v797, %v849
        %v858 = vadd.f32 %v798, %v850
        %v859 = vadd.f32 %v799, %v851
        %v860 = vadd.f32 %v800, %v852
        %v861 = vadd.f32 %v801, %v853
        %v862 = vld [vmem:[%s831 + $0x1] sm:$0xff]
        %v863 = vld [vmem:[%s831 + $0x19] sm:$0xff]
        %v864 = vld [vmem:[%s831 + $0x31] sm:$0xff]
        %v865 = vld [vmem:[%s831 + $0x49] sm:$0xff]
        %v866 = vld [vmem:[%s831 + $0x61] sm:$0xff]
        %v867 = vld [vmem:[%s831 + $0x79] sm:$0xff]
        %v868 = vld [vmem:[%s831 + $0x91] sm:$0xff]
        %v869 = vld [vmem:[%s831 + $0xa9] sm:$0xff]
        %v870 = vld [vmem:[%s840 + $0x1] sm:$0x1]
        %v871 = vlaneseq
        %v872 = vshrl.u32 %v871, 7
        %v873 = vsub.s32 0, %v872
        %v874 = vrot.slane %v870, %v873
        %v875 = vmul.f32 %v862, %v874
        %v876 = vmul.f32 %v863, %v874
        %v877 = vmul.f32 %v864, %v874
        %v878 = vmul.f32 %v865, %v874
        %v879 = vmul.f32 %v866, %v874
        %v880 = vmul.f32 %v867, %v874
        %v881 = vmul.f32 %v868, %v874
        %v882 = vmul.f32 %v869, %v874
        %v883 = vadd.f32 %v823, %v875
        %v884 = vadd.f32 %v824, %v876
        %v885 = vadd.f32 %v825, %v877
        %v886 = vadd.f32 %v826, %v878
        %v887 = vadd.f32 %v827, %v879
        %v888 = vadd.f32 %v828, %v880
        %v889 = vadd.f32 %v829, %v881
        %v890 = vadd.f32 %v830, %v882
        %v891 = vld [vmem:[%s831 + $0x2] sm:$0xff]
        %v892 = vld [vmem:[%s831 + $0x1a] sm:$0xff]
        %v893 = vld [vmem:[%s831 + $0x32] sm:$0xff]
        %v894 = vld [vmem:[%s831 + $0x4a] sm:$0xff]
        %v895 = vld [vmem:[%s831 + $0x62] sm:$0xff]
        %v896 = vld [vmem:[%s831 + $0x7a] sm:$0xff]
        %v897 = vld [vmem:[%s831 + $0x92] sm:$0xff]
        %v898 = vld [vmem:[%s831 + $0xaa] sm:$0xff]
        %v899 = vld [vmem:[%s840 + $0x2] sm:$0x1]
        %v900 = vlaneseq
        %v901 = vshrl.u32 %v900, 7
        %v902 = vsub.s32 0, %v901
        %v903 = vrot.slane %v899, %v902
        %v904 = vmul.f32 %v891, %v903
        %v905 = vmul.f32 %v892, %v903
        %v906 = vmul.f32 %v893, %v903
        %v907 = vmul.f32 %v894, %v903
        %v908 = vmul.f32 %v895, %v903
        %v909 = vmul.f32 %v896, %v903
        %v910 = vmul.f32 %v897, %v903
        %v911 = vmul.f32 %v898, %v903
        %v912 = vadd.f32 %v854, %v904
        %v913 = vadd.f32 %v855, %v905
        %v914 = vadd.f32 %v856, %v906
        %v915 = vadd.f32 %v857, %v907
        %v916 = vadd.f32 %v858, %v908
        %v917 = vadd.f32 %v859, %v909
        %v918 = vadd.f32 %v860, %v910
        %v919 = vadd.f32 %v861, %v911
        %v920 = vld [vmem:[%s831 + $0x3] sm:$0xff]
        %v921 = vld [vmem:[%s831 + $0x1b] sm:$0xff]
        %v922 = vld [vmem:[%s831 + $0x33] sm:$0xff]
        %v923 = vld [vmem:[%s831 + $0x4b] sm:$0xff]
        %v924 = vld [vmem:[%s831 + $0x63] sm:$0xff]
        %v925 = vld [vmem:[%s831 + $0x7b] sm:$0xff]
        %v926 = vld [vmem:[%s831 + $0x93] sm:$0xff]
        %v927 = vld [vmem:[%s831 + $0xab] sm:$0xff]
        %v928 = vld [vmem:[%s840 + $0x3] sm:$0x1]
        %v929 = vlaneseq
        %v930 = vshrl.u32 %v929, 7
        %v931 = vsub.s32 0, %v930
        %v932 = vrot.slane %v928, %v931
        %v933 = vmul.f32 %v920, %v932
        %v934 = vmul.f32 %v921, %v932
        %v935 = vmul.f32 %v922, %v932
        %v936 = vmul.f32 %v923, %v932
        %v937 = vmul.f32 %v924, %v932
        %v938 = vmul.f32 %v925, %v932
        %v939 = vmul.f32 %v926, %v932
        %v940 = vmul.f32 %v927, %v932
        %v941 = vadd.f32 %v883, %v933
        %v942 = vadd.f32 %v884, %v934
        %v943 = vadd.f32 %v885, %v935
        %v944 = vadd.f32 %v886, %v936
        %v945 = vadd.f32 %v887, %v937
        %v946 = vadd.f32 %v888, %v938
        %v947 = vadd.f32 %v889, %v939
        %v948 = vadd.f32 %v890, %v940
        %v949 = vld [vmem:[%s831 + $0x4] sm:$0xff]
        %v950 = vld [vmem:[%s831 + $0x1c] sm:$0xff]
        %v951 = vld [vmem:[%s831 + $0x34] sm:$0xff]
        %v952 = vld [vmem:[%s831 + $0x4c] sm:$0xff]
        %v953 = vld [vmem:[%s831 + $0x64] sm:$0xff]
        %v954 = vld [vmem:[%s831 + $0x7c] sm:$0xff]
        %v955 = vld [vmem:[%s831 + $0x94] sm:$0xff]
        %v956 = vld [vmem:[%s831 + $0xac] sm:$0xff]
        %v957 = vld [vmem:[%s840 + $0x4] sm:$0x1]
        %v958 = vlaneseq
        %v959 = vshrl.u32 %v958, 7
        %v960 = vsub.s32 0, %v959
        %v961 = vrot.slane %v957, %v960
        %v962 = vmul.f32 %v949, %v961
        %v963 = vmul.f32 %v950, %v961
        %v964 = vmul.f32 %v951, %v961
        %v965 = vmul.f32 %v952, %v961
        %v966 = vmul.f32 %v953, %v961
        %v967 = vmul.f32 %v954, %v961
        %v968 = vmul.f32 %v955, %v961
        %v969 = vmul.f32 %v956, %v961
        %v970 = vadd.f32 %v912, %v962
        %v971 = vadd.f32 %v913, %v963
        %v972 = vadd.f32 %v914, %v964
        %v973 = vadd.f32 %v915, %v965
        %v974 = vadd.f32 %v916, %v966
        %v975 = vadd.f32 %v917, %v967
        %v976 = vadd.f32 %v918, %v968
        %v977 = vadd.f32 %v919, %v969
        %v978 = vld [vmem:[%s831 + $0x5] sm:$0xff]
        %v979 = vld [vmem:[%s831 + $0x1d] sm:$0xff]
        %v980 = vld [vmem:[%s831 + $0x35] sm:$0xff]
        %v981 = vld [vmem:[%s831 + $0x4d] sm:$0xff]
        %v982 = vld [vmem:[%s831 + $0x65] sm:$0xff]
        %v983 = vld [vmem:[%s831 + $0x7d] sm:$0xff]
        %v984 = vld [vmem:[%s831 + $0x95] sm:$0xff]
        %v985 = vld [vmem:[%s831 + $0xad] sm:$0xff]
        %v986 = vld [vmem:[%s840 + $0x5] sm:$0x1]
        %v987 = vlaneseq
        %v988 = vshrl.u32 %v987, 7
        %v989 = vsub.s32 0, %v988
        %v990 = vrot.slane %v986, %v989
        %v991 = vmul.f32 %v978, %v990
        %v992 = vmul.f32 %v979, %v990
        %v993 = vmul.f32 %v980, %v990
        %v994 = vmul.f32 %v981, %v990
        %v995 = vmul.f32 %v982, %v990
        %v996 = vmul.f32 %v983, %v990
        %v997 = vmul.f32 %v984, %v990
        %v998 = vmul.f32 %v985, %v990
        %v999 = vadd.f32 %v941, %v991
        %v1000 = vadd.f32 %v942, %v992
        %v1001 = vadd.f32 %v943, %v993
        %v1002 = vadd.f32 %v944, %v994
        %v1003 = vadd.f32 %v945, %v995
        %v1004 = vadd.f32 %v946, %v996
        %v1005 = vadd.f32 %v947, %v997
        %v1006 = vadd.f32 %v948, %v998
        %v1007 = vld [vmem:[%s831 + $0x6] sm:$0xff]
        %v1008 = vld [vmem:[%s831 + $0x1e] sm:$0xff]
        %v1009 = vld [vmem:[%s831 + $0x36] sm:$0xff]
        %v1010 = vld [vmem:[%s831 + $0x4e] sm:$0xff]
        %v1011 = vld [vmem:[%s831 + $0x66] sm:$0xff]
        %v1012 = vld [vmem:[%s831 + $0x7e] sm:$0xff]
        %v1013 = vld [vmem:[%s831 + $0x96] sm:$0xff]
        %v1014 = vld [vmem:[%s831 + $0xae] sm:$0xff]
        %v1015 = vld [vmem:[%s840 + $0x6] sm:$0x1]
        %v1016 = vlaneseq
        %v1017 = vshrl.u32 %v1016, 7
        %v1018 = vsub.s32 0, %v1017
        %v1019 = vrot.slane %v1015, %v1018
        %v1020 = vmul.f32 %v1007, %v1019
        %v1021 = vmul.f32 %v1008, %v1019
        %v1022 = vmul.f32 %v1009, %v1019
        %v1023 = vmul.f32 %v1010, %v1019
        %v1024 = vmul.f32 %v1011, %v1019
        %v1025 = vmul.f32 %v1012, %v1019
        %v1026 = vmul.f32 %v1013, %v1019
        %v1027 = vmul.f32 %v1014, %v1019
        %v1028 = vadd.f32 %v970, %v1020
        %v1029 = vadd.f32 %v971, %v1021
        %v1030 = vadd.f32 %v972, %v1022
        %v1031 = vadd.f32 %v973, %v1023
        %v1032 = vadd.f32 %v974, %v1024
        %v1033 = vadd.f32 %v975, %v1025
        %v1034 = vadd.f32 %v976, %v1026
        %v1035 = vadd.f32 %v977, %v1027
        %v1036 = vld [vmem:[%s331] sm:$0xff]
        %v1037 = vld [vmem:[%s331 + $0x18] sm:$0xff]
        %v1038 = vld [vmem:[%s331 + $0x30] sm:$0xff]
        %v1039 = vld [vmem:[%s331 + $0x48] sm:$0xff]
        %v1040 = vld [vmem:[%s331 + $0x60] sm:$0xff]
        %v1041 = vld [vmem:[%s331 + $0x78] sm:$0xff]
        %v1042 = vld [vmem:[%s331 + $0x90] sm:$0xff]
        %v1043 = vld [vmem:[%s331 + $0xa8] sm:$0xff]
        %s1044 = scalar_lea.vmem [#allocation8], 24
        %v1045 = vld [vmem:[%s1044] sm:$0x1]
        %v1046 = vlaneseq
        %v1047 = vshrl.u32 %v1046, 7
        %v1048 = vsub.s32 0, %v1047
        %v1049 = vrot.slane %v1045, %v1048
        %v1050 = vmul.f32 %v1036, %v1049
        %v1051 = vmul.f32 %v1037, %v1049
        %v1052 = vmul.f32 %v1038, %v1049
        %v1053 = vmul.f32 %v1039, %v1049
        %v1054 = vmul.f32 %v1040, %v1049
        %v1055 = vmul.f32 %v1041, %v1049
        %v1056 = vmul.f32 %v1042, %v1049
        %v1057 = vmul.f32 %v1043, %v1049
        %v1058 = vadd.f32 %v999, %v1050
        %v1059 = vadd.f32 %v1000, %v1051
        %v1060 = vadd.f32 %v1001, %v1052
        %v1061 = vadd.f32 %v1002, %v1053
        %v1062 = vadd.f32 %v1003, %v1054
        %v1063 = vadd.f32 %v1004, %v1055
        %v1064 = vadd.f32 %v1005, %v1056
        %v1065 = vadd.f32 %v1006, %v1057
        %v1066 = vld [vmem:[%s331 + $0x1] sm:$0xff]
        %v1067 = vld [vmem:[%s331 + $0x19] sm:$0xff]
        %v1068 = vld [vmem:[%s331 + $0x31] sm:$0xff]
        %v1069 = vld [vmem:[%s331 + $0x49] sm:$0xff]
        %v1070 = vld [vmem:[%s331 + $0x61] sm:$0xff]
        %v1071 = vld [vmem:[%s331 + $0x79] sm:$0xff]
        %v1072 = vld [vmem:[%s331 + $0x91] sm:$0xff]
        %v1073 = vld [vmem:[%s331 + $0xa9] sm:$0xff]
        %v1074 = vld [vmem:[%s1044 + $0x1] sm:$0x1]
        %v1075 = vlaneseq
        %v1076 = vshrl.u32 %v1075, 7
        %v1077 = vsub.s32 0, %v1076
        %v1078 = vrot.slane %v1074, %v1077
        %v1079 = vmul.f32 %v1066, %v1078
        %v1080 = vmul.f32 %v1067, %v1078
        %v1081 = vmul.f32 %v1068, %v1078
        %v1082 = vmul.f32 %v1069, %v1078
        %v1083 = vmul.f32 %v1070, %v1078
        %v1084 = vmul.f32 %v1071, %v1078
        %v1085 = vmul.f32 %v1072, %v1078
        %v1086 = vmul.f32 %v1073, %v1078
        %v1087 = vadd.f32 %v1028, %v1079
        %v1088 = vadd.f32 %v1029, %v1080
        %v1089 = vadd.f32 %v1030, %v1081
        %v1090 = vadd.f32 %v1031, %v1082
        %v1091 = vadd.f32 %v1032, %v1083
        %v1092 = vadd.f32 %v1033, %v1084
        %v1093 = vadd.f32 %v1034, %v1085
        %v1094 = vadd.f32 %v1035, %v1086
        %v1095 = vld [vmem:[%s331 + $0x2] sm:$0xff]
        %v1096 = vld [vmem:[%s331 + $0x1a] sm:$0xff]
        %v1097 = vld [vmem:[%s331 + $0x32] sm:$0xff]
        %v1098 = vld [vmem:[%s331 + $0x4a] sm:$0xff]
        %v1099 = vld [vmem:[%s331 + $0x62] sm:$0xff]
        %v1100 = vld [vmem:[%s331 + $0x7a] sm:$0xff]
        %v1101 = vld [vmem:[%s331 + $0x92] sm:$0xff]
        %v1102 = vld [vmem:[%s331 + $0xaa] sm:$0xff]
        %v1103 = vld [vmem:[%s1044 + $0x2] sm:$0x1]
        %v1104 = vlaneseq
        %v1105 = vshrl.u32 %v1104, 7
        %v1106 = vsub.s32 0, %v1105
        %v1107 = vrot.slane %v1103, %v1106
        %v1108 = vmul.f32 %v1095, %v1107
        %v1109 = vmul.f32 %v1096, %v1107
        %v1110 = vmul.f32 %v1097, %v1107
        %v1111 = vmul.f32 %v1098, %v1107
        %v1112 = vmul.f32 %v1099, %v1107
        %v1113 = vmul.f32 %v1100, %v1107
        %v1114 = vmul.f32 %v1101, %v1107
        %v1115 = vmul.f32 %v1102, %v1107
        %v1116 = vadd.f32 %v1058, %v1108
        %v1117 = vadd.f32 %v1059, %v1109
        %v1118 = vadd.f32 %v1060, %v1110
        %v1119 = vadd.f32 %v1061, %v1111
        %v1120 = vadd.f32 %v1062, %v1112
        %v1121 = vadd.f32 %v1063, %v1113
        %v1122 = vadd.f32 %v1064, %v1114
        %v1123 = vadd.f32 %v1065, %v1115
        %v1124 = vld [vmem:[%s331 + $0x3] sm:$0xff]
        %v1125 = vld [vmem:[%s331 + $0x1b] sm:$0xff]
        %v1126 = vld [vmem:[%s331 + $0x33] sm:$0xff]
        %v1127 = vld [vmem:[%s331 + $0x4b] sm:$0xff]
        %v1128 = vld [vmem:[%s331 + $0x63] sm:$0xff]
        %v1129 = vld [vmem:[%s331 + $0x7b] sm:$0xff]
        %v1130 = vld [vmem:[%s331 + $0x93] sm:$0xff]
        %v1131 = vld [vmem:[%s331 + $0xab] sm:$0xff]
        %v1132 = vld [vmem:[%s1044 + $0x3] sm:$0x1]
        %v1133 = vlaneseq
        %v1134 = vshrl.u32 %v1133, 7
        %v1135 = vsub.s32 0, %v1134
        %v1136 = vrot.slane %v1132, %v1135
        %v1137 = vmul.f32 %v1124, %v1136
        %v1138 = vmul.f32 %v1125, %v1136
        %v1139 = vmul.f32 %v1126, %v1136
        %v1140 = vmul.f32 %v1127, %v1136
        %v1141 = vmul.f32 %v1128, %v1136
        %v1142 = vmul.f32 %v1129, %v1136
        %v1143 = vmul.f32 %v1130, %v1136
        %v1144 = vmul.f32 %v1131, %v1136
        %v1145 = vadd.f32 %v1087, %v1137
        %v1146 = vadd.f32 %v1088, %v1138
        %v1147 = vadd.f32 %v1089, %v1139
        %v1148 = vadd.f32 %v1090, %v1140
        %v1149 = vadd.f32 %v1091, %v1141
        %v1150 = vadd.f32 %v1092, %v1142
        %v1151 = vadd.f32 %v1093, %v1143
        %v1152 = vadd.f32 %v1094, %v1144
        %v1153 = vld [vmem:[%s331 + $0x4] sm:$0xff]
        %v1154 = vld [vmem:[%s331 + $0x1c] sm:$0xff]
        %v1155 = vld [vmem:[%s331 + $0x34] sm:$0xff]
        %v1156 = vld [vmem:[%s331 + $0x4c] sm:$0xff]
        %v1157 = vld [vmem:[%s331 + $0x64] sm:$0xff]
        %v1158 = vld [vmem:[%s331 + $0x7c] sm:$0xff]
        %v1159 = vld [vmem:[%s331 + $0x94] sm:$0xff]
        %v1160 = vld [vmem:[%s331 + $0xac] sm:$0xff]
        %v1161 = vld [vmem:[%s1044 + $0x4] sm:$0x1]
        %v1162 = vlaneseq
        %v1163 = vshrl.u32 %v1162, 7
        %v1164 = vsub.s32 0, %v1163
        %v1165 = vrot.slane %v1161, %v1164
        %v1166 = vmul.f32 %v1153, %v1165
        %v1167 = vmul.f32 %v1154, %v1165
        %v1168 = vmul.f32 %v1155, %v1165
        %v1169 = vmul.f32 %v1156, %v1165
        %v1170 = vmul.f32 %v1157, %v1165
        %v1171 = vmul.f32 %v1158, %v1165
        %v1172 = vmul.f32 %v1159, %v1165
        %v1173 = vmul.f32 %v1160, %v1165
        %v1174 = vadd.f32 %v1116, %v1166
        %v1175 = vadd.f32 %v1117, %v1167
        %v1176 = vadd.f32 %v1118, %v1168
        %v1177 = vadd.f32 %v1119, %v1169
        %v1178 = vadd.f32 %v1120, %v1170
        %v1179 = vadd.f32 %v1121, %v1171
        %v1180 = vadd.f32 %v1122, %v1172
        %v1181 = vadd.f32 %v1123, %v1173
        %v1182 = vld [vmem:[%s331 + $0x5] sm:$0xff]
        %v1183 = vld [vmem:[%s331 + $0x1d] sm:$0xff]
        %v1184 = vld [vmem:[%s331 + $0x35] sm:$0xff]
        %v1185 = vld [vmem:[%s331 + $0x4d] sm:$0xff]
        %v1186 = vld [vmem:[%s331 + $0x65] sm:$0xff]
        %v1187 = vld [vmem:[%s331 + $0x7d] sm:$0xff]
        %v1188 = vld [vmem:[%s331 + $0x95] sm:$0xff]
        %v1189 = vld [vmem:[%s331 + $0xad] sm:$0xff]
        %v1190 = vld [vmem:[%s1044 + $0x5] sm:$0x1]
        %v1191 = vlaneseq
        %v1192 = vshrl.u32 %v1191, 7
        %v1193 = vsub.s32 0, %v1192
        %v1194 = vrot.slane %v1190, %v1193
        %v1195 = vmul.f32 %v1182, %v1194
        %v1196 = vmul.f32 %v1183, %v1194
        %v1197 = vmul.f32 %v1184, %v1194
        %v1198 = vmul.f32 %v1185, %v1194
        %v1199 = vmul.f32 %v1186, %v1194
        %v1200 = vmul.f32 %v1187, %v1194
        %v1201 = vmul.f32 %v1188, %v1194
        %v1202 = vmul.f32 %v1189, %v1194
        %v1203 = vadd.f32 %v1145, %v1195
        %v1204 = vadd.f32 %v1146, %v1196
        %v1205 = vadd.f32 %v1147, %v1197
        %v1206 = vadd.f32 %v1148, %v1198
        %v1207 = vadd.f32 %v1149, %v1199
        %v1208 = vadd.f32 %v1150, %v1200
        %v1209 = vadd.f32 %v1151, %v1201
        %v1210 = vadd.f32 %v1152, %v1202
        %v1211 = vld [vmem:[%s331 + $0x6] sm:$0xff]
        %v1212 = vld [vmem:[%s331 + $0x1e] sm:$0xff]
        %v1213 = vld [vmem:[%s331 + $0x36] sm:$0xff]
        %v1214 = vld [vmem:[%s331 + $0x4e] sm:$0xff]
        %v1215 = vld [vmem:[%s331 + $0x66] sm:$0xff]
        %v1216 = vld [vmem:[%s331 + $0x7e] sm:$0xff]
        %v1217 = vld [vmem:[%s331 + $0x96] sm:$0xff]
        %v1218 = vld [vmem:[%s331 + $0xae] sm:$0xff]
        %v1219 = vld [vmem:[%s1044 + $0x6] sm:$0x1]
        %v1220 = vlaneseq
        %v1221 = vshrl.u32 %v1220, 7
        %v1222 = vsub.s32 0, %v1221
        %v1223 = vrot.slane %v1219, %v1222
        %v1224 = vmul.f32 %v1211, %v1223
        %v1225 = vmul.f32 %v1212, %v1223
        %v1226 = vmul.f32 %v1213, %v1223
        %v1227 = vmul.f32 %v1214, %v1223
        %v1228 = vmul.f32 %v1215, %v1223
        %v1229 = vmul.f32 %v1216, %v1223
        %v1230 = vmul.f32 %v1217, %v1223
        %v1231 = vmul.f32 %v1218, %v1223
        %v1232 = vadd.f32 %v1174, %v1224
        %v1233 = vadd.f32 %v1175, %v1225
        %v1234 = vadd.f32 %v1176, %v1226
        %v1235 = vadd.f32 %v1177, %v1227
        %v1236 = vadd.f32 %v1178, %v1228
        %v1237 = vadd.f32 %v1179, %v1229
        %v1238 = vadd.f32 %v1180, %v1230
        %v1239 = vadd.f32 %v1181, %v1231
        %s1240 = scalar_lea.vmem [#allocation2], 96
        %v1241 = vld [vmem:[%s1240] sm:$0xff]
        %v1242 = vld [vmem:[%s1240 + $0x18] sm:$0xff]
        %v1243 = vld [vmem:[%s1240 + $0x30] sm:$0xff]
        %v1244 = vld [vmem:[%s1240 + $0x48] sm:$0xff]
        %v1245 = vld [vmem:[%s1240 + $0x60] sm:$0xff]
        %v1246 = vld [vmem:[%s1240 + $0x78] sm:$0xff]
        %v1247 = vld [vmem:[%s1240 + $0x90] sm:$0xff]
        %v1248 = vld [vmem:[%s1240 + $0xa8] sm:$0xff]
        %s1249 = scalar_lea.vmem [#allocation8], 32
        %v1250 = vld [vmem:[%s1249] sm:$0x1]
        %v1251 = vlaneseq
        %v1252 = vshrl.u32 %v1251, 7
        %v1253 = vsub.s32 0, %v1252
        %v1254 = vrot.slane %v1250, %v1253
        %v1255 = vmul.f32 %v1241, %v1254
        %v1256 = vmul.f32 %v1242, %v1254
        %v1257 = vmul.f32 %v1243, %v1254
        %v1258 = vmul.f32 %v1244, %v1254
        %v1259 = vmul.f32 %v1245, %v1254
        %v1260 = vmul.f32 %v1246, %v1254
        %v1261 = vmul.f32 %v1247, %v1254
        %v1262 = vmul.f32 %v1248, %v1254
        %v1263 = vadd.f32 %v1203, %v1255
        %v1264 = vadd.f32 %v1204, %v1256
        %v1265 = vadd.f32 %v1205, %v1257
        %v1266 = vadd.f32 %v1206, %v1258
        %v1267 = vadd.f32 %v1207, %v1259
        %v1268 = vadd.f32 %v1208, %v1260
        %v1269 = vadd.f32 %v1209, %v1261
        %v1270 = vadd.f32 %v1210, %v1262
        %v1271 = vld [vmem:[%s1240 + $0x1] sm:$0xff]
        %v1272 = vld [vmem:[%s1240 + $0x19] sm:$0xff]
        %v1273 = vld [vmem:[%s1240 + $0x31] sm:$0xff]
        %v1274 = vld [vmem:[%s1240 + $0x49] sm:$0xff]
        %v1275 = vld [vmem:[%s1240 + $0x61] sm:$0xff]
        %v1276 = vld [vmem:[%s1240 + $0x79] sm:$0xff]
        %v1277 = vld [vmem:[%s1240 + $0x91] sm:$0xff]
        %v1278 = vld [vmem:[%s1240 + $0xa9] sm:$0xff]
        %v1279 = vld [vmem:[%s1249 + $0x1] sm:$0x1]
        %v1280 = vlaneseq
        %v1281 = vshrl.u32 %v1280, 7
        %v1282 = vsub.s32 0, %v1281
        %v1283 = vrot.slane %v1279, %v1282
        %v1284 = vmul.f32 %v1271, %v1283
        %v1285 = vmul.f32 %v1272, %v1283
        %v1286 = vmul.f32 %v1273, %v1283
        %v1287 = vmul.f32 %v1274, %v1283
        %v1288 = vmul.f32 %v1275, %v1283
        %v1289 = vmul.f32 %v1276, %v1283
        %v1290 = vmul.f32 %v1277, %v1283
        %v1291 = vmul.f32 %v1278, %v1283
        %v1292 = vadd.f32 %v1232, %v1284
        %v1293 = vadd.f32 %v1233, %v1285
        %v1294 = vadd.f32 %v1234, %v1286
        %v1295 = vadd.f32 %v1235, %v1287
        %v1296 = vadd.f32 %v1236, %v1288
        %v1297 = vadd.f32 %v1237, %v1289
        %v1298 = vadd.f32 %v1238, %v1290
        %v1299 = vadd.f32 %v1239, %v1291
        %v1300 = vld [vmem:[%s1240 + $0x2] sm:$0xff]
        %v1301 = vld [vmem:[%s1240 + $0x1a] sm:$0xff]
        %v1302 = vld [vmem:[%s1240 + $0x32] sm:$0xff]
        %v1303 = vld [vmem:[%s1240 + $0x4a] sm:$0xff]
        %v1304 = vld [vmem:[%s1240 + $0x62] sm:$0xff]
        %v1305 = vld [vmem:[%s1240 + $0x7a] sm:$0xff]
        %v1306 = vld [vmem:[%s1240 + $0x92] sm:$0xff]
        %v1307 = vld [vmem:[%s1240 + $0xaa] sm:$0xff]
        %v1308 = vld [vmem:[%s1249 + $0x2] sm:$0x1]
        %v1309 = vlaneseq
        %v1310 = vshrl.u32 %v1309, 7
        %v1311 = vsub.s32 0, %v1310
        %v1312 = vrot.slane %v1308, %v1311
        %v1313 = vmul.f32 %v1300, %v1312
        %v1314 = vmul.f32 %v1301, %v1312
        %v1315 = vmul.f32 %v1302, %v1312
        %v1316 = vmul.f32 %v1303, %v1312
        %v1317 = vmul.f32 %v1304, %v1312
        %v1318 = vmul.f32 %v1305, %v1312
        %v1319 = vmul.f32 %v1306, %v1312
        %v1320 = vmul.f32 %v1307, %v1312
        %v1321 = vadd.f32 %v1263, %v1313
        %v1322 = vadd.f32 %v1264, %v1314
        %v1323 = vadd.f32 %v1265, %v1315
        %v1324 = vadd.f32 %v1266, %v1316
        %v1325 = vadd.f32 %v1267, %v1317
        %v1326 = vadd.f32 %v1268, %v1318
        %v1327 = vadd.f32 %v1269, %v1319
        %v1328 = vadd.f32 %v1270, %v1320
        %v1329 = vld [vmem:[%s1240 + $0x3] sm:$0xff]
        %v1330 = vld [vmem:[%s1240 + $0x1b] sm:$0xff]
        %v1331 = vld [vmem:[%s1240 + $0x33] sm:$0xff]
        %v1332 = vld [vmem:[%s1240 + $0x4b] sm:$0xff]
        %v1333 = vld [vmem:[%s1240 + $0x63] sm:$0xff]
        %v1334 = vld [vmem:[%s1240 + $0x7b] sm:$0xff]
        %v1335 = vld [vmem:[%s1240 + $0x93] sm:$0xff]
        %v1336 = vld [vmem:[%s1240 + $0xab] sm:$0xff]
        %v1337 = vld [vmem:[%s1249 + $0x3] sm:$0x1]
        %v1338 = vlaneseq
        %v1339 = vshrl.u32 %v1338, 7
        %v1340 = vsub.s32 0, %v1339
        %v1341 = vrot.slane %v1337, %v1340
        %v1342 = vmul.f32 %v1329, %v1341
        %v1343 = vmul.f32 %v1330, %v1341
        %v1344 = vmul.f32 %v1331, %v1341
        %v1345 = vmul.f32 %v1332, %v1341
        %v1346 = vmul.f32 %v1333, %v1341
        %v1347 = vmul.f32 %v1334, %v1341
        %v1348 = vmul.f32 %v1335, %v1341
        %v1349 = vmul.f32 %v1336, %v1341
        %v1350 = vadd.f32 %v1292, %v1342
        %v1351 = vadd.f32 %v1293, %v1343
        %v1352 = vadd.f32 %v1294, %v1344
        %v1353 = vadd.f32 %v1295, %v1345
        %v1354 = vadd.f32 %v1296, %v1346
        %v1355 = vadd.f32 %v1297, %v1347
        %v1356 = vadd.f32 %v1298, %v1348
        %v1357 = vadd.f32 %v1299, %v1349
        %v1358 = vld [vmem:[%s1240 + $0x4] sm:$0xff]
        %v1359 = vld [vmem:[%s1240 + $0x1c] sm:$0xff]
        %v1360 = vld [vmem:[%s1240 + $0x34] sm:$0xff]
        %v1361 = vld [vmem:[%s1240 + $0x4c] sm:$0xff]
        %v1362 = vld [vmem:[%s1240 + $0x64] sm:$0xff]
        %v1363 = vld [vmem:[%s1240 + $0x7c] sm:$0xff]
        %v1364 = vld [vmem:[%s1240 + $0x94] sm:$0xff]
        %v1365 = vld [vmem:[%s1240 + $0xac] sm:$0xff]
        %v1366 = vld [vmem:[%s1249 + $0x4] sm:$0x1]
        %v1367 = vlaneseq
        %v1368 = vshrl.u32 %v1367, 7
        %v1369 = vsub.s32 0, %v1368
        %v1370 = vrot.slane %v1366, %v1369
        %v1371 = vmul.f32 %v1358, %v1370
        %v1372 = vmul.f32 %v1359, %v1370
        %v1373 = vmul.f32 %v1360, %v1370
        %v1374 = vmul.f32 %v1361, %v1370
        %v1375 = vmul.f32 %v1362, %v1370
        %v1376 = vmul.f32 %v1363, %v1370
        %v1377 = vmul.f32 %v1364, %v1370
        %v1378 = vmul.f32 %v1365, %v1370
        %v1379 = vadd.f32 %v1321, %v1371
        %v1380 = vadd.f32 %v1322, %v1372
        %v1381 = vadd.f32 %v1323, %v1373
        %v1382 = vadd.f32 %v1324, %v1374
        %v1383 = vadd.f32 %v1325, %v1375
        %v1384 = vadd.f32 %v1326, %v1376
        %v1385 = vadd.f32 %v1327, %v1377
        %v1386 = vadd.f32 %v1328, %v1378
        %v1387 = vld [vmem:[%s1240 + $0x5] sm:$0xff]
        %v1388 = vld [vmem:[%s1240 + $0x1d] sm:$0xff]
        %v1389 = vld [vmem:[%s1240 + $0x35] sm:$0xff]
        %v1390 = vld [vmem:[%s1240 + $0x4d] sm:$0xff]
        %v1391 = vld [vmem:[%s1240 + $0x65] sm:$0xff]
        %v1392 = vld [vmem:[%s1240 + $0x7d] sm:$0xff]
        %v1393 = vld [vmem:[%s1240 + $0x95] sm:$0xff]
        %v1394 = vld [vmem:[%s1240 + $0xad] sm:$0xff]
        %v1395 = vld [vmem:[%s1249 + $0x5] sm:$0x1]
        %v1396 = vlaneseq
        %v1397 = vshrl.u32 %v1396, 7
        %v1398 = vsub.s32 0, %v1397
        %v1399 = vrot.slane %v1395, %v1398
        %v1400 = vmul.f32 %v1387, %v1399
        %v1401 = vmul.f32 %v1388, %v1399
        %v1402 = vmul.f32 %v1389, %v1399
        %v1403 = vmul.f32 %v1390, %v1399
        %v1404 = vmul.f32 %v1391, %v1399
        %v1405 = vmul.f32 %v1392, %v1399
        %v1406 = vmul.f32 %v1393, %v1399
        %v1407 = vmul.f32 %v1394, %v1399
        %v1408 = vadd.f32 %v1350, %v1400
        %v1409 = vadd.f32 %v1351, %v1401
        %v1410 = vadd.f32 %v1352, %v1402
        %v1411 = vadd.f32 %v1353, %v1403
        %v1412 = vadd.f32 %v1354, %v1404
        %v1413 = vadd.f32 %v1355, %v1405
        %v1414 = vadd.f32 %v1356, %v1406
        %v1415 = vadd.f32 %v1357, %v1407
        %v1416 = vld [vmem:[%s1240 + $0x6] sm:$0xff]
        %v1417 = vld [vmem:[%s1240 + $0x1e] sm:$0xff]
        %v1418 = vld [vmem:[%s1240 + $0x36] sm:$0xff]
        %v1419 = vld [vmem:[%s1240 + $0x4e] sm:$0xff]
        %v1420 = vld [vmem:[%s1240 + $0x66] sm:$0xff]
        %v1421 = vld [vmem:[%s1240 + $0x7e] sm:$0xff]
        %v1422 = vld [vmem:[%s1240 + $0x96] sm:$0xff]
        %v1423 = vld [vmem:[%s1240 + $0xae] sm:$0xff]
        %v1424 = vld [vmem:[%s1249 + $0x6] sm:$0x1]
        %v1425 = vlaneseq
        %v1426 = vshrl.u32 %v1425, 7
        %v1427 = vsub.s32 0, %v1426
        %v1428 = vrot.slane %v1424, %v1427
        %v1429 = vmul.f32 %v1416, %v1428
        %v1430 = vmul.f32 %v1417, %v1428
        %v1431 = vmul.f32 %v1418, %v1428
        %v1432 = vmul.f32 %v1419, %v1428
        %v1433 = vmul.f32 %v1420, %v1428
        %v1434 = vmul.f32 %v1421, %v1428
        %v1435 = vmul.f32 %v1422, %v1428
        %v1436 = vmul.f32 %v1423, %v1428
        %v1437 = vadd.f32 %v1379, %v1429
        %v1438 = vadd.f32 %v1380, %v1430
        %v1439 = vadd.f32 %v1381, %v1431
        %v1440 = vadd.f32 %v1382, %v1432
        %v1441 = vadd.f32 %v1383, %v1433
        %v1442 = vadd.f32 %v1384, %v1434
        %v1443 = vadd.f32 %v1385, %v1435
        %v1444 = vadd.f32 %v1386, %v1436
        %s1445 = scalar_lea.vmem [#allocation2], 120
        %v1446 = vld [vmem:[%s1445] sm:$0xff]
        %v1447 = vld [vmem:[%s1445 + $0x18] sm:$0xff]
        %v1448 = vld [vmem:[%s1445 + $0x30] sm:$0xff]
        %v1449 = vld [vmem:[%s1445 + $0x48] sm:$0xff]
        %v1450 = vld [vmem:[%s1445 + $0x60] sm:$0xff]
        %v1451 = vld [vmem:[%s1445 + $0x78] sm:$0xff]
        %v1452 = vld [vmem:[%s1445 + $0x90] sm:$0xff]
        %v1453 = vld [vmem:[%s1445 + $0xa8] sm:$0xff]
        %s1454 = scalar_lea.vmem [#allocation8], 40
        %v1455 = vld [vmem:[%s1454] sm:$0x1]
        %v1456 = vlaneseq
        %v1457 = vshrl.u32 %v1456, 7
        %v1458 = vsub.s32 0, %v1457
        %v1459 = vrot.slane %v1455, %v1458
        %v1460 = vmul.f32 %v1446, %v1459
        %v1461 = vmul.f32 %v1447, %v1459
        %v1462 = vmul.f32 %v1448, %v1459
        %v1463 = vmul.f32 %v1449, %v1459
        %v1464 = vmul.f32 %v1450, %v1459
        %v1465 = vmul.f32 %v1451, %v1459
        %v1466 = vmul.f32 %v1452, %v1459
        %v1467 = vmul.f32 %v1453, %v1459
        %v1468 = vadd.f32 %v1408, %v1460
        %v1469 = vadd.f32 %v1409, %v1461
        %v1470 = vadd.f32 %v1410, %v1462
        %v1471 = vadd.f32 %v1411, %v1463
        %v1472 = vadd.f32 %v1412, %v1464
        %v1473 = vadd.f32 %v1413, %v1465
        %v1474 = vadd.f32 %v1414, %v1466
        %v1475 = vadd.f32 %v1415, %v1467
        %v1476 = vld [vmem:[%s1445 + $0x1] sm:$0xff]
        %v1477 = vld [vmem:[%s1445 + $0x19] sm:$0xff]
        %v1478 = vld [vmem:[%s1445 + $0x31] sm:$0xff]
        %v1479 = vld [vmem:[%s1445 + $0x49] sm:$0xff]
        %v1480 = vld [vmem:[%s1445 + $0x61] sm:$0xff]
        %v1481 = vld [vmem:[%s1445 + $0x79] sm:$0xff]
        %v1482 = vld [vmem:[%s1445 + $0x91] sm:$0xff]
        %v1483 = vld [vmem:[%s1445 + $0xa9] sm:$0xff]
        %v1484 = vld [vmem:[%s1454 + $0x1] sm:$0x1]
        %v1485 = vlaneseq
        %v1486 = vshrl.u32 %v1485, 7
        %v1487 = vsub.s32 0, %v1486
        %v1488 = vrot.slane %v1484, %v1487
        %v1489 = vmul.f32 %v1476, %v1488
        %v1490 = vmul.f32 %v1477, %v1488
        %v1491 = vmul.f32 %v1478, %v1488
        %v1492 = vmul.f32 %v1479, %v1488
        %v1493 = vmul.f32 %v1480, %v1488
        %v1494 = vmul.f32 %v1481, %v1488
        %v1495 = vmul.f32 %v1482, %v1488
        %v1496 = vmul.f32 %v1483, %v1488
        %v1497 = vadd.f32 %v1437, %v1489
        %v1498 = vadd.f32 %v1438, %v1490
        %v1499 = vadd.f32 %v1439, %v1491
        %v1500 = vadd.f32 %v1440, %v1492
        %v1501 = vadd.f32 %v1441, %v1493
        %v1502 = vadd.f32 %v1442, %v1494
        %v1503 = vadd.f32 %v1443, %v1495
        %v1504 = vadd.f32 %v1444, %v1496
        %v1505 = vld [vmem:[%s1445 + $0x2] sm:$0xff]
        %v1506 = vld [vmem:[%s1445 + $0x1a] sm:$0xff]
        %v1507 = vld [vmem:[%s1445 + $0x32] sm:$0xff]
        %v1508 = vld [vmem:[%s1445 + $0x4a] sm:$0xff]
        %v1509 = vld [vmem:[%s1445 + $0x62] sm:$0xff]
        %v1510 = vld [vmem:[%s1445 + $0x7a] sm:$0xff]
        %v1511 = vld [vmem:[%s1445 + $0x92] sm:$0xff]
        %v1512 = vld [vmem:[%s1445 + $0xaa] sm:$0xff]
        %v1513 = vld [vmem:[%s1454 + $0x2] sm:$0x1]
        %v1514 = vlaneseq
        %v1515 = vshrl.u32 %v1514, 7
        %v1516 = vsub.s32 0, %v1515
        %v1517 = vrot.slane %v1513, %v1516
        %v1518 = vmul.f32 %v1505, %v1517
        %v1519 = vmul.f32 %v1506, %v1517
        %v1520 = vmul.f32 %v1507, %v1517
        %v1521 = vmul.f32 %v1508, %v1517
        %v1522 = vmul.f32 %v1509, %v1517
        %v1523 = vmul.f32 %v1510, %v1517
        %v1524 = vmul.f32 %v1511, %v1517
        %v1525 = vmul.f32 %v1512, %v1517
        %v1526 = vadd.f32 %v1468, %v1518
        %v1527 = vadd.f32 %v1469, %v1519
        %v1528 = vadd.f32 %v1470, %v1520
        %v1529 = vadd.f32 %v1471, %v1521
        %v1530 = vadd.f32 %v1472, %v1522
        %v1531 = vadd.f32 %v1473, %v1523
        %v1532 = vadd.f32 %v1474, %v1524
        %v1533 = vadd.f32 %v1475, %v1525
        %v1534 = vld [vmem:[%s1445 + $0x3] sm:$0xff]
        %v1535 = vld [vmem:[%s1445 + $0x1b] sm:$0xff]
        %v1536 = vld [vmem:[%s1445 + $0x33] sm:$0xff]
        %v1537 = vld [vmem:[%s1445 + $0x4b] sm:$0xff]
        %v1538 = vld [vmem:[%s1445 + $0x63] sm:$0xff]
        %v1539 = vld [vmem:[%s1445 + $0x7b] sm:$0xff]
        %v1540 = vld [vmem:[%s1445 + $0x93] sm:$0xff]
        %v1541 = vld [vmem:[%s1445 + $0xab] sm:$0xff]
        %v1542 = vld [vmem:[%s1454 + $0x3] sm:$0x1]
        %v1543 = vlaneseq
        %v1544 = vshrl.u32 %v1543, 7
        %v1545 = vsub.s32 0, %v1544
        %v1546 = vrot.slane %v1542, %v1545
        %v1547 = vmul.f32 %v1534, %v1546
        %v1548 = vmul.f32 %v1535, %v1546
        %v1549 = vmul.f32 %v1536, %v1546
        %v1550 = vmul.f32 %v1537, %v1546
        %v1551 = vmul.f32 %v1538, %v1546
        %v1552 = vmul.f32 %v1539, %v1546
        %v1553 = vmul.f32 %v1540, %v1546
        %v1554 = vmul.f32 %v1541, %v1546
        %v1555 = vadd.f32 %v1497, %v1547
        %v1556 = vadd.f32 %v1498, %v1548
        %v1557 = vadd.f32 %v1499, %v1549
        %v1558 = vadd.f32 %v1500, %v1550
        %v1559 = vadd.f32 %v1501, %v1551
        %v1560 = vadd.f32 %v1502, %v1552
        %v1561 = vadd.f32 %v1503, %v1553
        %v1562 = vadd.f32 %v1504, %v1554
        %v1563 = vld [vmem:[%s1445 + $0x4] sm:$0xff]
        %v1564 = vld [vmem:[%s1445 + $0x1c] sm:$0xff]
        %v1565 = vld [vmem:[%s1445 + $0x34] sm:$0xff]
        %v1566 = vld [vmem:[%s1445 + $0x4c] sm:$0xff]
        %v1567 = vld [vmem:[%s1445 + $0x64] sm:$0xff]
        %v1568 = vld [vmem:[%s1445 + $0x7c] sm:$0xff]
        %v1569 = vld [vmem:[%s1445 + $0x94] sm:$0xff]
        %v1570 = vld [vmem:[%s1445 + $0xac] sm:$0xff]
        %v1571 = vld [vmem:[%s1454 + $0x4] sm:$0x1]
        %v1572 = vlaneseq
        %v1573 = vshrl.u32 %v1572, 7
        %v1574 = vsub.s32 0, %v1573
        %v1575 = vrot.slane %v1571, %v1574
        %v1576 = vmul.f32 %v1563, %v1575
        %v1577 = vmul.f32 %v1564, %v1575
        %v1578 = vmul.f32 %v1565, %v1575
        %v1579 = vmul.f32 %v1566, %v1575
        %v1580 = vmul.f32 %v1567, %v1575
        %v1581 = vmul.f32 %v1568, %v1575
        %v1582 = vmul.f32 %v1569, %v1575
        %v1583 = vmul.f32 %v1570, %v1575
        %v1584 = vadd.f32 %v1526, %v1576
        %v1585 = vadd.f32 %v1527, %v1577
        %v1586 = vadd.f32 %v1528, %v1578
        %v1587 = vadd.f32 %v1529, %v1579
        %v1588 = vadd.f32 %v1530, %v1580
        %v1589 = vadd.f32 %v1531, %v1581
        %v1590 = vadd.f32 %v1532, %v1582
        %v1591 = vadd.f32 %v1533, %v1583
        %v1592 = vld [vmem:[%s1445 + $0x5] sm:$0xff]
        %v1593 = vld [vmem:[%s1445 + $0x1d] sm:$0xff]
        %v1594 = vld [vmem:[%s1445 + $0x35] sm:$0xff]
        %v1595 = vld [vmem:[%s1445 + $0x4d] sm:$0xff]
        %v1596 = vld [vmem:[%s1445 + $0x65] sm:$0xff]
        %v1597 = vld [vmem:[%s1445 + $0x7d] sm:$0xff]
        %v1598 = vld [vmem:[%s1445 + $0x95] sm:$0xff]
        %v1599 = vld [vmem:[%s1445 + $0xad] sm:$0xff]
        %v1600 = vld [vmem:[%s1454 + $0x5] sm:$0x1]
        %v1601 = vlaneseq
        %v1602 = vshrl.u32 %v1601, 7
        %v1603 = vsub.s32 0, %v1602
        %v1604 = vrot.slane %v1600, %v1603
        %v1605 = vmul.f32 %v1592, %v1604
        %v1606 = vmul.f32 %v1593, %v1604
        %v1607 = vmul.f32 %v1594, %v1604
        %v1608 = vmul.f32 %v1595, %v1604
        %v1609 = vmul.f32 %v1596, %v1604
        %v1610 = vmul.f32 %v1597, %v1604
        %v1611 = vmul.f32 %v1598, %v1604
        %v1612 = vmul.f32 %v1599, %v1604
        %v1613 = vadd.f32 %v1555, %v1605
        %v1614 = vadd.f32 %v1556, %v1606
        %v1615 = vadd.f32 %v1557, %v1607
        %v1616 = vadd.f32 %v1558, %v1608
        %v1617 = vadd.f32 %v1559, %v1609
        %v1618 = vadd.f32 %v1560, %v1610
        %v1619 = vadd.f32 %v1561, %v1611
        %v1620 = vadd.f32 %v1562, %v1612
        %v1621 = vld [vmem:[%s1445 + $0x6] sm:$0xff]
        %v1622 = vld [vmem:[%s1445 + $0x1e] sm:$0xff]
        %v1623 = vld [vmem:[%s1445 + $0x36] sm:$0xff]
        %v1624 = vld [vmem:[%s1445 + $0x4e] sm:$0xff]
        %v1625 = vld [vmem:[%s1445 + $0x66] sm:$0xff]
        %v1626 = vld [vmem:[%s1445 + $0x7e] sm:$0xff]
        %v1627 = vld [vmem:[%s1445 + $0x96] sm:$0xff]
        %v1628 = vld [vmem:[%s1445 + $0xae] sm:$0xff]
        %v1629 = vld [vmem:[%s1454 + $0x6] sm:$0x1]
        %v1630 = vlaneseq
        %v1631 = vshrl.u32 %v1630, 7
        %v1632 = vsub.s32 0, %v1631
        %v1633 = vrot.slane %v1629, %v1632
        %v1634 = vmul.f32 %v1621, %v1633
        %v1635 = vmul.f32 %v1622, %v1633
        %v1636 = vmul.f32 %v1623, %v1633
        %v1637 = vmul.f32 %v1624, %v1633
        %v1638 = vmul.f32 %v1625, %v1633
        %v1639 = vmul.f32 %v1626, %v1633
        %v1640 = vmul.f32 %v1627, %v1633
        %v1641 = vmul.f32 %v1628, %v1633
        %v1642 = vadd.f32 %v1584, %v1634
        %v1643 = vadd.f32 %v1585, %v1635
        %v1644 = vadd.f32 %v1586, %v1636
        %v1645 = vadd.f32 %v1587, %v1637
        %v1646 = vadd.f32 %v1588, %v1638
        %v1647 = vadd.f32 %v1589, %v1639
        %v1648 = vadd.f32 %v1590, %v1640
        %v1649 = vadd.f32 %v1591, %v1641
        %s1650 = scalar_lea.vmem [#allocation2], 144
        %v1651 = vld [vmem:[%s1650] sm:$0xff]
        %v1652 = vld [vmem:[%s1650 + $0x18] sm:$0xff]
        %v1653 = vld [vmem:[%s1650 + $0x30] sm:$0xff]
        %v1654 = vld [vmem:[%s1650 + $0x48] sm:$0xff]
        %v1655 = vld [vmem:[%s1650 + $0x60] sm:$0xff]
        %v1656 = vld [vmem:[%s1650 + $0x78] sm:$0xff]
        %v1657 = vld [vmem:[%s1650 + $0x90] sm:$0xff]
        %v1658 = vld [vmem:[%s1650 + $0xa8] sm:$0xff]
        %s1659 = scalar_lea.vmem [#allocation8], 48
        %v1660 = vld [vmem:[%s1659] sm:$0x1]
        %v1661 = vlaneseq
        %v1662 = vshrl.u32 %v1661, 7
        %v1663 = vsub.s32 0, %v1662
        %v1664 = vrot.slane %v1660, %v1663
        %v1665 = vmul.f32 %v1651, %v1664
        %v1666 = vmul.f32 %v1652, %v1664
        %v1667 = vmul.f32 %v1653, %v1664
        %v1668 = vmul.f32 %v1654, %v1664
        %v1669 = vmul.f32 %v1655, %v1664
        %v1670 = vmul.f32 %v1656, %v1664
        %v1671 = vmul.f32 %v1657, %v1664
        %v1672 = vmul.f32 %v1658, %v1664
        %v1673 = vadd.f32 %v1613, %v1665
        %v1674 = vadd.f32 %v1614, %v1666
        %v1675 = vadd.f32 %v1615, %v1667
        %v1676 = vadd.f32 %v1616, %v1668
        %v1677 = vadd.f32 %v1617, %v1669
        %v1678 = vadd.f32 %v1618, %v1670
        %v1679 = vadd.f32 %v1619, %v1671
        %v1680 = vadd.f32 %v1620, %v1672
        %v1681 = vld [vmem:[%s1650 + $0x1] sm:$0xff]
        %v1682 = vld [vmem:[%s1650 + $0x19] sm:$0xff]
        %v1683 = vld [vmem:[%s1650 + $0x31] sm:$0xff]
        %v1684 = vld [vmem:[%s1650 + $0x49] sm:$0xff]
        %v1685 = vld [vmem:[%s1650 + $0x61] sm:$0xff]
        %v1686 = vld [vmem:[%s1650 + $0x79] sm:$0xff]
        %v1687 = vld [vmem:[%s1650 + $0x91] sm:$0xff]
        %v1688 = vld [vmem:[%s1650 + $0xa9] sm:$0xff]
        %v1689 = vld [vmem:[%s1659 + $0x1] sm:$0x1]
        %v1690 = vlaneseq
        %v1691 = vshrl.u32 %v1690, 7
        %v1692 = vsub.s32 0, %v1691
        %v1693 = vrot.slane %v1689, %v1692
        %v1694 = vmul.f32 %v1681, %v1693
        %v1695 = vmul.f32 %v1682, %v1693
        %v1696 = vmul.f32 %v1683, %v1693
        %v1697 = vmul.f32 %v1684, %v1693
        %v1698 = vmul.f32 %v1685, %v1693
        %v1699 = vmul.f32 %v1686, %v1693
        %v1700 = vmul.f32 %v1687, %v1693
        %v1701 = vmul.f32 %v1688, %v1693
        %v1702 = vadd.f32 %v1642, %v1694
        %v1703 = vadd.f32 %v1643, %v1695
        %v1704 = vadd.f32 %v1644, %v1696
        %v1705 = vadd.f32 %v1645, %v1697
        %v1706 = vadd.f32 %v1646, %v1698
        %v1707 = vadd.f32 %v1647, %v1699
        %v1708 = vadd.f32 %v1648, %v1700
        %v1709 = vadd.f32 %v1649, %v1701
        %v1710 = vld [vmem:[%s1650 + $0x2] sm:$0xff]
        %v1711 = vld [vmem:[%s1650 + $0x1a] sm:$0xff]
        %v1712 = vld [vmem:[%s1650 + $0x32] sm:$0xff]
        %v1713 = vld [vmem:[%s1650 + $0x4a] sm:$0xff]
        %v1714 = vld [vmem:[%s1650 + $0x62] sm:$0xff]
        %v1715 = vld [vmem:[%s1650 + $0x7a] sm:$0xff]
        %v1716 = vld [vmem:[%s1650 + $0x92] sm:$0xff]
        %v1717 = vld [vmem:[%s1650 + $0xaa] sm:$0xff]
        %v1718 = vld [vmem:[%s1659 + $0x2] sm:$0x1]
        %v1719 = vlaneseq
        %v1720 = vshrl.u32 %v1719, 7
        %v1721 = vsub.s32 0, %v1720
        %v1722 = vrot.slane %v1718, %v1721
        %v1723 = vmul.f32 %v1710, %v1722
        %v1724 = vmul.f32 %v1711, %v1722
        %v1725 = vmul.f32 %v1712, %v1722
        %v1726 = vmul.f32 %v1713, %v1722
        %v1727 = vmul.f32 %v1714, %v1722
        %v1728 = vmul.f32 %v1715, %v1722
        %v1729 = vmul.f32 %v1716, %v1722
        %v1730 = vmul.f32 %v1717, %v1722
        %v1731 = vadd.f32 %v1673, %v1723
        %v1732 = vadd.f32 %v1674, %v1724
        %v1733 = vadd.f32 %v1675, %v1725
        %v1734 = vadd.f32 %v1676, %v1726
        %v1735 = vadd.f32 %v1677, %v1727
        %v1736 = vadd.f32 %v1678, %v1728
        %v1737 = vadd.f32 %v1679, %v1729
        %v1738 = vadd.f32 %v1680, %v1730
        %v1739 = vld [vmem:[%s1650 + $0x3] sm:$0xff]
        %v1740 = vld [vmem:[%s1650 + $0x1b] sm:$0xff]
        %v1741 = vld [vmem:[%s1650 + $0x33] sm:$0xff]
        %v1742 = vld [vmem:[%s1650 + $0x4b] sm:$0xff]
        %v1743 = vld [vmem:[%s1650 + $0x63] sm:$0xff]
        %v1744 = vld [vmem:[%s1650 + $0x7b] sm:$0xff]
        %v1745 = vld [vmem:[%s1650 + $0x93] sm:$0xff]
        %v1746 = vld [vmem:[%s1650 + $0xab] sm:$0xff]
        %v1747 = vld [vmem:[%s1659 + $0x3] sm:$0x1]
        %v1748 = vlaneseq
        %v1749 = vshrl.u32 %v1748, 7
        %v1750 = vsub.s32 0, %v1749
        %v1751 = vrot.slane %v1747, %v1750
        %v1752 = vmul.f32 %v1739, %v1751
        %v1753 = vmul.f32 %v1740, %v1751
        %v1754 = vmul.f32 %v1741, %v1751
        %v1755 = vmul.f32 %v1742, %v1751
        %v1756 = vmul.f32 %v1743, %v1751
        %v1757 = vmul.f32 %v1744, %v1751
        %v1758 = vmul.f32 %v1745, %v1751
        %v1759 = vmul.f32 %v1746, %v1751
        %v1760 = vadd.f32 %v1702, %v1752
        %v1761 = vadd.f32 %v1703, %v1753
        %v1762 = vadd.f32 %v1704, %v1754
        %v1763 = vadd.f32 %v1705, %v1755
        %v1764 = vadd.f32 %v1706, %v1756
        %v1765 = vadd.f32 %v1707, %v1757
        %v1766 = vadd.f32 %v1708, %v1758
        %v1767 = vadd.f32 %v1709, %v1759
        %v1768 = vld [vmem:[%s1650 + $0x4] sm:$0xff]
        %v1769 = vld [vmem:[%s1650 + $0x1c] sm:$0xff]
        %v1770 = vld [vmem:[%s1650 + $0x34] sm:$0xff]
        %v1771 = vld [vmem:[%s1650 + $0x4c] sm:$0xff]
        %v1772 = vld [vmem:[%s1650 + $0x64] sm:$0xff]
        %v1773 = vld [vmem:[%s1650 + $0x7c] sm:$0xff]
        %v1774 = vld [vmem:[%s1650 + $0x94] sm:$0xff]
        %v1775 = vld [vmem:[%s1650 + $0xac] sm:$0xff]
        %v1776 = vld [vmem:[%s1659 + $0x4] sm:$0x1]
        %v1777 = vlaneseq
        %v1778 = vshrl.u32 %v1777, 7
        %v1779 = vsub.s32 0, %v1778
        %v1780 = vrot.slane %v1776, %v1779
        %v1781 = vmul.f32 %v1768, %v1780
        %v1782 = vmul.f32 %v1769, %v1780
        %v1783 = vmul.f32 %v1770, %v1780
        %v1784 = vmul.f32 %v1771, %v1780
        %v1785 = vmul.f32 %v1772, %v1780
        %v1786 = vmul.f32 %v1773, %v1780
        %v1787 = vmul.f32 %v1774, %v1780
        %v1788 = vmul.f32 %v1775, %v1780
        %v1789 = vadd.f32 %v1731, %v1781
        %v1790 = vadd.f32 %v1732, %v1782
        %v1791 = vadd.f32 %v1733, %v1783
        %v1792 = vadd.f32 %v1734, %v1784
        %v1793 = vadd.f32 %v1735, %v1785
        %v1794 = vadd.f32 %v1736, %v1786
        %v1795 = vadd.f32 %v1737, %v1787
        %v1796 = vadd.f32 %v1738, %v1788
        %v1797 = vld [vmem:[%s1650 + $0x5] sm:$0xff]
        %v1798 = vld [vmem:[%s1650 + $0x1d] sm:$0xff]
        %v1799 = vld [vmem:[%s1650 + $0x35] sm:$0xff]
        %v1800 = vld [vmem:[%s1650 + $0x4d] sm:$0xff]
        %v1801 = vld [vmem:[%s1650 + $0x65] sm:$0xff]
        %v1802 = vld [vmem:[%s1650 + $0x7d] sm:$0xff]
        %v1803 = vld [vmem:[%s1650 + $0x95] sm:$0xff]
        %v1804 = vld [vmem:[%s1650 + $0xad] sm:$0xff]
        %v1805 = vld [vmem:[%s1659 + $0x5] sm:$0x1]
        %v1806 = vlaneseq
        %v1807 = vshrl.u32 %v1806, 7
        %v1808 = vsub.s32 0, %v1807
        %v1809 = vrot.slane %v1805, %v1808
        %v1810 = vmul.f32 %v1797, %v1809
        %v1811 = vmul.f32 %v1798, %v1809
        %v1812 = vmul.f32 %v1799, %v1809
        %v1813 = vmul.f32 %v1800, %v1809
        %v1814 = vmul.f32 %v1801, %v1809
        %v1815 = vmul.f32 %v1802, %v1809
        %v1816 = vmul.f32 %v1803, %v1809
        %v1817 = vmul.f32 %v1804, %v1809
        %v1818 = vadd.f32 %v1760, %v1810
        %v1819 = vadd.f32 %v1761, %v1811
        %v1820 = vadd.f32 %v1762, %v1812
        %v1821 = vadd.f32 %v1763, %v1813
        %v1822 = vadd.f32 %v1764, %v1814
        %v1823 = vadd.f32 %v1765, %v1815
        %v1824 = vadd.f32 %v1766, %v1816
        %v1825 = vadd.f32 %v1767, %v1817
        %v1826 = vld [vmem:[%s1650 + $0x6] sm:$0xff]
        %v1827 = vld [vmem:[%s1650 + $0x1e] sm:$0xff]
        %v1828 = vld [vmem:[%s1650 + $0x36] sm:$0xff]
        %v1829 = vld [vmem:[%s1650 + $0x4e] sm:$0xff]
        %v1830 = vld [vmem:[%s1650 + $0x66] sm:$0xff]
        %v1831 = vld [vmem:[%s1650 + $0x7e] sm:$0xff]
        %v1832 = vld [vmem:[%s1650 + $0x96] sm:$0xff]
        %v1833 = vld [vmem:[%s1650 + $0xae] sm:$0xff]
        %v1834 = vld [vmem:[%s1659 + $0x6] sm:$0x1]
        %v1835 = vlaneseq
        %v1836 = vshrl.u32 %v1835, 7
        %v1837 = vsub.s32 0, %v1836
        %v1838 = vrot.slane %v1834, %v1837
        %v1839 = vmul.f32 %v1826, %v1838
        %v1840 = vmul.f32 %v1827, %v1838
        %v1841 = vmul.f32 %v1828, %v1838
        %v1842 = vmul.f32 %v1829, %v1838
        %v1843 = vmul.f32 %v1830, %v1838
        %v1844 = vmul.f32 %v1831, %v1838
        %v1845 = vmul.f32 %v1832, %v1838
        %v1846 = vmul.f32 %v1833, %v1838
        %v1847 = vadd.f32 %v1789, %v1839
        %v1848 = vadd.f32 %v1790, %v1840
        %v1849 = vadd.f32 %v1791, %v1841
        %v1850 = vadd.f32 %v1792, %v1842
        %v1851 = vadd.f32 %v1793, %v1843
        %v1852 = vadd.f32 %v1794, %v1844
        %v1853 = vadd.f32 %v1795, %v1845
        %v1854 = vadd.f32 %v1796, %v1846
        %v1855 = vadd.f32 %v1847, %v1818
        %v1856 = vadd.f32 %v1848, %v1819
        %v1857 = vadd.f32 %v1849, %v1820
        %v1858 = vadd.f32 %v1850, %v1821
        %v1859 = vadd.f32 %v1851, %v1822
        %v1860 = vadd.f32 %v1852, %v1823
        %v1861 = vadd.f32 %v1853, %v1824
        %v1862 = vadd.f32 %v1854, %v1825
        %v1864 = vlaneseq
        %v1865 = vshrl.u32 %v1864, 7
        %v1866 = vsub.s32 0, %v1865
        %v1867 = vrot.slane %v422, %v1866
        %v1869 = vadd.f32 %v1855, %v1867
        %v1870 = vadd.f32 %v1856, %v1867
        %v1871 = vadd.f32 %v1857, %v1867
        %v1872 = vadd.f32 %v1858, %v1867
        %v1873 = vadd.f32 %v1859, %v1867
        %v1874 = vadd.f32 %v1860, %v1867
        %v1875 = vadd.f32 %v1861, %v1867
        %v1876 = vadd.f32 %v1862, %v1867
        %v1877 = vxor.u32 %v1869, 2147483648
        %v1878 = vxor.u32 %v1870, 2147483648
        %v1879 = vxor.u32 %v1871, 2147483648
        %v1880 = vxor.u32 %v1872, 2147483648
        %v1881 = vxor.u32 %v1873, 2147483648
        %v1882 = vxor.u32 %v1874, 2147483648
        %v1883 = vxor.u32 %v1875, 2147483648
        %v1884 = vxor.u32 %v1876, 2147483648
        %v1885 = vmul.f32 %v1877, 1.442695
        %v1886 = vpow.pop %v1885
        %v1887 = vmul.f32 %v1878, 1.442695
        %v1888 = vpow.pop %v1887
        %v1889 = vmul.f32 %v1879, 1.442695
        %v1890 = vpow.pop %v1889
        %v1891 = vmul.f32 %v1880, 1.442695
        %v1892 = vpow.pop %v1891
        %v1893 = vmul.f32 %v1881, 1.442695
        %v1894 = vpow.pop %v1893
        %v1895 = vmul.f32 %v1882, 1.442695
        %v1896 = vpow.pop %v1895
        %v1897 = vmul.f32 %v1883, 1.442695
        %v1898 = vpow.pop %v1897
        %v1899 = vmul.f32 %v1884, 1.442695
        %v1900 = vpow.pop %v1899
        %v1901 = vadd.f32 %v1886, 1.0
        %v1902 = vadd.f32 %v1888, 1.0
        %v1903 = vadd.f32 %v1890, 1.0
        %v1904 = vadd.f32 %v1892, 1.0
        %v1905 = vadd.f32 %v1894, 1.0
        %v1906 = vadd.f32 %v1896, 1.0
        %v1907 = vadd.f32 %v1898, 1.0
        %v1908 = vadd.f32 %v1900, 1.0
        %v1909 = vrcp.pop %v1901
        %v1910 = vmul.f32 1.0, %v1909
        %v1911 = vrcp.pop %v1902
        %v1912 = vmul.f32 1.0, %v1911
        %v1913 = vrcp.pop %v1903
        %v1914 = vmul.f32 1.0, %v1913
        %v1915 = vrcp.pop %v1904
        %v1916 = vmul.f32 1.0, %v1915
        %v1917 = vrcp.pop %v1905
        %v1918 = vmul.f32 1.0, %v1917
        %v1919 = vrcp.pop %v1906
        %v1920 = vmul.f32 1.0, %v1919
        %v1921 = vrcp.pop %v1907
        %v1922 = vmul.f32 1.0, %v1921
        %v1923 = vrcp.pop %v1908
        %v1924 = vmul.f32 1.0, %v1923
        %v1925 = vld [vmem:[%s197] sm:$0xff]
        %v1926 = vld [vmem:[%s197 + $0x10] sm:$0xff]
        %v1927 = vld [vmem:[%s197 + $0x20] sm:$0xff]
        %v1928 = vld [vmem:[%s197 + $0x30] sm:$0xff]
        %v1929 = vld [vmem:[%s197 + $0x40] sm:$0xff]
        %v1930 = vld [vmem:[%s197 + $0x50] sm:$0xff]
        %v1931 = vld [vmem:[%s197 + $0x60] sm:$0xff]
        %v1932 = vld [vmem:[%s197 + $0x70] sm:$0xff]
        %v1933 = vmul.f32 %v1925, %v1910
        %v1934 = vmul.f32 %v1926, %v1912
        %v1935 = vmul.f32 %v1927, %v1914
        %v1936 = vmul.f32 %v1928, %v1916
        %v1937 = vmul.f32 %v1929, %v1918
        %v1938 = vmul.f32 %v1930, %v1920
        %v1939 = vmul.f32 %v1931, %v1922
        %v1940 = vmul.f32 %v1932, %v1924
        %1941 = vst [vmem:[%s223] sm:$0xff] %v1933
        %1942 = vst [vmem:[%s223 + $0x10] sm:$0xff] %v1934
        %1943 = vst [vmem:[%s223 + $0x20] sm:$0xff] %v1935
        %1944 = vst [vmem:[%s223 + $0x30] sm:$0xff] %v1936
        %1945 = vst [vmem:[%s223 + $0x40] sm:$0xff] %v1937
        %1946 = vst [vmem:[%s223 + $0x50] sm:$0xff] %v1938
        %1947 = vst [vmem:[%s223 + $0x60] sm:$0xff] %v1939
        %1948 = vst [vmem:[%s223 + $0x70] sm:$0xff] %v1940
        %v1949 = vld [vmem:[#allocation2 + $0x8] sm:$0xff]
        %v1950 = vld [vmem:[#allocation2 + $0x20] sm:$0xff]
        %v1951 = vld [vmem:[#allocation2 + $0x38] sm:$0xff]
        %v1952 = vld [vmem:[#allocation2 + $0x50] sm:$0xff]
        %v1953 = vld [vmem:[#allocation2 + $0x68] sm:$0xff]
        %v1954 = vld [vmem:[#allocation2 + $0x80] sm:$0xff]
        %v1955 = vld [vmem:[#allocation2 + $0x98] sm:$0xff]
        %v1956 = vld [vmem:[#allocation2 + $0xb0] sm:$0xff]
        %v1957 = vld [vmem:[#allocation8] sm:$0x1]
        %v1958 = vlaneseq
        %v1959 = vshrl.u32 %v1958, 7
        %v1960 = vsub.s32 0, %v1959
        %v1961 = vrot.slane %v1957, %v1960
        %v1962 = vmul.f32 %v1949, %v1961
        %v1963 = vmul.f32 %v1950, %v1961
        %v1964 = vmul.f32 %v1951, %v1961
        %v1965 = vmul.f32 %v1952, %v1961
        %v1966 = vmul.f32 %v1953, %v1961
        %v1967 = vmul.f32 %v1954, %v1961
        %v1968 = vmul.f32 %v1955, %v1961
        %v1969 = vmul.f32 %v1956, %v1961
        %v1970 = vadd.f32 %v1962, 0.0
        %v1971 = vadd.f32 %v1963, 0.0
        %v1972 = vadd.f32 %v1964, 0.0
        %v1973 = vadd.f32 %v1965, 0.0
        %v1974 = vadd.f32 %v1966, 0.0
        %v1975 = vadd.f32 %v1967, 0.0
        %v1976 = vadd.f32 %v1968, 0.0
        %v1977 = vadd.f32 %v1969, 0.0
        %v1978 = vld [vmem:[#allocation2 + $0x9] sm:$0xff]
        %v1979 = vld [vmem:[#allocation2 + $0x21] sm:$0xff]
        %v1980 = vld [vmem:[#allocation2 + $0x39] sm:$0xff]
        %v1981 = vld [vmem:[#allocation2 + $0x51] sm:$0xff]
        %v1982 = vld [vmem:[#allocation2 + $0x69] sm:$0xff]
        %v1983 = vld [vmem:[#allocation2 + $0x81] sm:$0xff]
        %v1984 = vld [vmem:[#allocation2 + $0x99] sm:$0xff]
        %v1985 = vld [vmem:[#allocation2 + $0xb1] sm:$0xff]
        %v1986 = vld [vmem:[#allocation8 + $0x1] sm:$0x1]
        %v1987 = vlaneseq
        %v1988 = vshrl.u32 %v1987, 7
        %v1989 = vsub.s32 0, %v1988
        %v1990 = vrot.slane %v1986, %v1989
        %v1991 = vmul.f32 %v1978, %v1990
        %v1992 = vmul.f32 %v1979, %v1990
        %v1993 = vmul.f32 %v1980, %v1990
        %v1994 = vmul.f32 %v1981, %v1990
        %v1995 = vmul.f32 %v1982, %v1990
        %v1996 = vmul.f32 %v1983, %v1990
        %v1997 = vmul.f32 %v1984, %v1990
        %v1998 = vmul.f32 %v1985, %v1990
        %v1999 = vadd.f32 %v1991, 0.0
        %v2000 = vadd.f32 %v1992, 0.0
        %v2001 = vadd.f32 %v1993, 0.0
        %v2002 = vadd.f32 %v1994, 0.0
        %v2003 = vadd.f32 %v1995, 0.0
        %v2004 = vadd.f32 %v1996, 0.0
        %v2005 = vadd.f32 %v1997, 0.0
        %v2006 = vadd.f32 %v1998, 0.0
        %v2007 = vld [vmem:[#allocation2 + $0xa] sm:$0xff]
        %v2008 = vld [vmem:[#allocation2 + $0x22] sm:$0xff]
        %v2009 = vld [vmem:[#allocation2 + $0x3a] sm:$0xff]
        %v2010 = vld [vmem:[#allocation2 + $0x52] sm:$0xff]
        %v2011 = vld [vmem:[#allocation2 + $0x6a] sm:$0xff]
        %v2012 = vld [vmem:[#allocation2 + $0x82] sm:$0xff]
        %v2013 = vld [vmem:[#allocation2 + $0x9a] sm:$0xff]
        %v2014 = vld [vmem:[#allocation2 + $0xb2] sm:$0xff]
        %v2015 = vld [vmem:[#allocation8 + $0x2] sm:$0x1]
        %v2016 = vlaneseq
        %v2017 = vshrl.u32 %v2016, 7
        %v2018 = vsub.s32 0, %v2017
        %v2019 = vrot.slane %v2015, %v2018
        %v2020 = vmul.f32 %v2007, %v2019
        %v2021 = vmul.f32 %v2008, %v2019
        %v2022 = vmul.f32 %v2009, %v2019
        %v2023 = vmul.f32 %v2010, %v2019
        %v2024 = vmul.f32 %v2011, %v2019
        %v2025 = vmul.f32 %v2012, %v2019
        %v2026 = vmul.f32 %v2013, %v2019
        %v2027 = vmul.f32 %v2014, %v2019
        %v2028 = vadd.f32 %v1970, %v2020
        %v2029 = vadd.f32 %v1971, %v2021
        %v2030 = vadd.f32 %v1972, %v2022
        %v2031 = vadd.f32 %v1973, %v2023
        %v2032 = vadd.f32 %v1974, %v2024
        %v2033 = vadd.f32 %v1975, %v2025
        %v2034 = vadd.f32 %v1976, %v2026
        %v2035 = vadd.f32 %v1977, %v2027
        %v2036 = vld [vmem:[#allocation2 + $0xb] sm:$0xff]
        %v2037 = vld [vmem:[#allocation2 + $0x23] sm:$0xff]
        %v2038 = vld [vmem:[#allocation2 + $0x3b] sm:$0xff]
        %v2039 = vld [vmem:[#allocation2 + $0x53] sm:$0xff]
        %v2040 = vld [vmem:[#allocation2 + $0x6b] sm:$0xff]
        %v2041 = vld [vmem:[#allocation2 + $0x83] sm:$0xff]
        %v2042 = vld [vmem:[#allocation2 + $0x9b] sm:$0xff]
        %v2043 = vld [vmem:[#allocation2 + $0xb3] sm:$0xff]
        %v2044 = vld [vmem:[#allocation8 + $0x3] sm:$0x1]
        %v2045 = vlaneseq
        %v2046 = vshrl.u32 %v2045, 7
        %v2047 = vsub.s32 0, %v2046
        %v2048 = vrot.slane %v2044, %v2047
        %v2049 = vmul.f32 %v2036, %v2048
        %v2050 = vmul.f32 %v2037, %v2048
        %v2051 = vmul.f32 %v2038, %v2048
        %v2052 = vmul.f32 %v2039, %v2048
        %v2053 = vmul.f32 %v2040, %v2048
        %v2054 = vmul.f32 %v2041, %v2048
        %v2055 = vmul.f32 %v2042, %v2048
        %v2056 = vmul.f32 %v2043, %v2048
        %v2057 = vadd.f32 %v1999, %v2049
        %v2058 = vadd.f32 %v2000, %v2050
        %v2059 = vadd.f32 %v2001, %v2051
        %v2060 = vadd.f32 %v2002, %v2052
        %v2061 = vadd.f32 %v2003, %v2053
        %v2062 = vadd.f32 %v2004, %v2054
        %v2063 = vadd.f32 %v2005, %v2055
        %v2064 = vadd.f32 %v2006, %v2056
        %v2065 = vld [vmem:[#allocation2 + $0xc] sm:$0xff]
        %v2066 = vld [vmem:[#allocation2 + $0x24] sm:$0xff]
        %v2067 = vld [vmem:[#allocation2 + $0x3c] sm:$0xff]
        %v2068 = vld [vmem:[#allocation2 + $0x54] sm:$0xff]
        %v2069 = vld [vmem:[#allocation2 + $0x6c] sm:$0xff]
        %v2070 = vld [vmem:[#allocation2 + $0x84] sm:$0xff]
        %v2071 = vld [vmem:[#allocation2 + $0x9c] sm:$0xff]
        %v2072 = vld [vmem:[#allocation2 + $0xb4] sm:$0xff]
        %v2073 = vld [vmem:[#allocation8 + $0x4] sm:$0x1]
        %v2074 = vlaneseq
        %v2075 = vshrl.u32 %v2074, 7
        %v2076 = vsub.s32 0, %v2075
        %v2077 = vrot.slane %v2073, %v2076
        %v2078 = vmul.f32 %v2065, %v2077
        %v2079 = vmul.f32 %v2066, %v2077
        %v2080 = vmul.f32 %v2067, %v2077
        %v2081 = vmul.f32 %v2068, %v2077
        %v2082 = vmul.f32 %v2069, %v2077
        %v2083 = vmul.f32 %v2070, %v2077
        %v2084 = vmul.f32 %v2071, %v2077
        %v2085 = vmul.f32 %v2072, %v2077
        %v2086 = vadd.f32 %v2028, %v2078
        %v2087 = vadd.f32 %v2029, %v2079
        %v2088 = vadd.f32 %v2030, %v2080
        %v2089 = vadd.f32 %v2031, %v2081
        %v2090 = vadd.f32 %v2032, %v2082
        %v2091 = vadd.f32 %v2033, %v2083
        %v2092 = vadd.f32 %v2034, %v2084
        %v2093 = vadd.f32 %v2035, %v2085
        %v2094 = vld [vmem:[#allocation2 + $0xd] sm:$0xff]
        %v2095 = vld [vmem:[#allocation2 + $0x25] sm:$0xff]
        %v2096 = vld [vmem:[#allocation2 + $0x3d] sm:$0xff]
        %v2097 = vld [vmem:[#allocation2 + $0x55] sm:$0xff]
        %v2098 = vld [vmem:[#allocation2 + $0x6d] sm:$0xff]
        %v2099 = vld [vmem:[#allocation2 + $0x85] sm:$0xff]
        %v2100 = vld [vmem:[#allocation2 + $0x9d] sm:$0xff]
        %v2101 = vld [vmem:[#allocation2 + $0xb5] sm:$0xff]
        %v2102 = vld [vmem:[#allocation8 + $0x5] sm:$0x1]
        %v2103 = vlaneseq
        %v2104 = vshrl.u32 %v2103, 7
        %v2105 = vsub.s32 0, %v2104
        %v2106 = vrot.slane %v2102, %v2105
        %v2107 = vmul.f32 %v2094, %v2106
        %v2108 = vmul.f32 %v2095, %v2106
        %v2109 = vmul.f32 %v2096, %v2106
        %v2110 = vmul.f32 %v2097, %v2106
        %v2111 = vmul.f32 %v2098, %v2106
        %v2112 = vmul.f32 %v2099, %v2106
        %v2113 = vmul.f32 %v2100, %v2106
        %v2114 = vmul.f32 %v2101, %v2106
        %v2115 = vadd.f32 %v2057, %v2107
        %v2116 = vadd.f32 %v2058, %v2108
        %v2117 = vadd.f32 %v2059, %v2109
        %v2118 = vadd.f32 %v2060, %v2110
        %v2119 = vadd.f32 %v2061, %v2111
        %v2120 = vadd.f32 %v2062, %v2112
        %v2121 = vadd.f32 %v2063, %v2113
        %v2122 = vadd.f32 %v2064, %v2114
        %v2123 = vld [vmem:[#allocation2 + $0xe] sm:$0xff]
        %v2124 = vld [vmem:[#allocation2 + $0x26] sm:$0xff]
        %v2125 = vld [vmem:[#allocation2 + $0x3e] sm:$0xff]
        %v2126 = vld [vmem:[#allocation2 + $0x56] sm:$0xff]
        %v2127 = vld [vmem:[#allocation2 + $0x6e] sm:$0xff]
        %v2128 = vld [vmem:[#allocation2 + $0x86] sm:$0xff]
        %v2129 = vld [vmem:[#allocation2 + $0x9e] sm:$0xff]
        %v2130 = vld [vmem:[#allocation2 + $0xb6] sm:$0xff]
        %v2131 = vld [vmem:[#allocation8 + $0x6] sm:$0x1]
        %v2132 = vlaneseq
        %v2133 = vshrl.u32 %v2132, 7
        %v2134 = vsub.s32 0, %v2133
        %v2135 = vrot.slane %v2131, %v2134
        %v2136 = vmul.f32 %v2123, %v2135
        %v2137 = vmul.f32 %v2124, %v2135
        %v2138 = vmul.f32 %v2125, %v2135
        %v2139 = vmul.f32 %v2126, %v2135
        %v2140 = vmul.f32 %v2127, %v2135
        %v2141 = vmul.f32 %v2128, %v2135
        %v2142 = vmul.f32 %v2129, %v2135
        %v2143 = vmul.f32 %v2130, %v2135
        %v2144 = vadd.f32 %v2086, %v2136
        %v2145 = vadd.f32 %v2087, %v2137
        %v2146 = vadd.f32 %v2088, %v2138
        %v2147 = vadd.f32 %v2089, %v2139
        %v2148 = vadd.f32 %v2090, %v2140
        %v2149 = vadd.f32 %v2091, %v2141
        %v2150 = vadd.f32 %v2092, %v2142
        %v2151 = vadd.f32 %v2093, %v2143
        %v2152 = vld [vmem:[%s626 + $0x8] sm:$0xff]
        %v2153 = vld [vmem:[%s626 + $0x20] sm:$0xff]
        %v2154 = vld [vmem:[%s626 + $0x38] sm:$0xff]
        %v2155 = vld [vmem:[%s626 + $0x50] sm:$0xff]
        %v2156 = vld [vmem:[%s626 + $0x68] sm:$0xff]
        %v2157 = vld [vmem:[%s626 + $0x80] sm:$0xff]
        %v2158 = vld [vmem:[%s626 + $0x98] sm:$0xff]
        %v2159 = vld [vmem:[%s626 + $0xb0] sm:$0xff]
        %v2160 = vld [vmem:[%s635] sm:$0x1]
        %v2161 = vlaneseq
        %v2162 = vshrl.u32 %v2161, 7
        %v2163 = vsub.s32 0, %v2162
        %v2164 = vrot.slane %v2160, %v2163
        %v2165 = vmul.f32 %v2152, %v2164
        %v2166 = vmul.f32 %v2153, %v2164
        %v2167 = vmul.f32 %v2154, %v2164
        %v2168 = vmul.f32 %v2155, %v2164
        %v2169 = vmul.f32 %v2156, %v2164
        %v2170 = vmul.f32 %v2157, %v2164
        %v2171 = vmul.f32 %v2158, %v2164
        %v2172 = vmul.f32 %v2159, %v2164
        %v2173 = vadd.f32 %v2115, %v2165
        %v2174 = vadd.f32 %v2116, %v2166
        %v2175 = vadd.f32 %v2117, %v2167
        %v2176 = vadd.f32 %v2118, %v2168
        %v2177 = vadd.f32 %v2119, %v2169
        %v2178 = vadd.f32 %v2120, %v2170
        %v2179 = vadd.f32 %v2121, %v2171
        %v2180 = vadd.f32 %v2122, %v2172
        %v2181 = vld [vmem:[%s626 + $0x9] sm:$0xff]
        %v2182 = vld [vmem:[%s626 + $0x21] sm:$0xff]
        %v2183 = vld [vmem:[%s626 + $0x39] sm:$0xff]
        %v2184 = vld [vmem:[%s626 + $0x51] sm:$0xff]
        %v2185 = vld [vmem:[%s626 + $0x69] sm:$0xff]
        %v2186 = vld [vmem:[%s626 + $0x81] sm:$0xff]
        %v2187 = vld [vmem:[%s626 + $0x99] sm:$0xff]
        %v2188 = vld [vmem:[%s626 + $0xb1] sm:$0xff]
        %v2189 = vld [vmem:[%s635 + $0x1] sm:$0x1]
        %v2190 = vlaneseq
        %v2191 = vshrl.u32 %v2190, 7
        %v2192 = vsub.s32 0, %v2191
        %v2193 = vrot.slane %v2189, %v2192
        %v2194 = vmul.f32 %v2181, %v2193
        %v2195 = vmul.f32 %v2182, %v2193
        %v2196 = vmul.f32 %v2183, %v2193
        %v2197 = vmul.f32 %v2184, %v2193
        %v2198 = vmul.f32 %v2185, %v2193
        %v2199 = vmul.f32 %v2186, %v2193
        %v2200 = vmul.f32 %v2187, %v2193
        %v2201 = vmul.f32 %v2188, %v2193
        %v2202 = vadd.f32 %v2144, %v2194
        %v2203 = vadd.f32 %v2145, %v2195
        %v2204 = vadd.f32 %v2146, %v2196
        %v2205 = vadd.f32 %v2147, %v2197
        %v2206 = vadd.f32 %v2148, %v2198
        %v2207 = vadd.f32 %v2149, %v2199
        %v2208 = vadd.f32 %v2150, %v2200
        %v2209 = vadd.f32 %v2151, %v2201
        %v2210 = vld [vmem:[%s626 + $0xa] sm:$0xff]
        %v2211 = vld [vmem:[%s626 + $0x22] sm:$0xff]
        %v2212 = vld [vmem:[%s626 + $0x3a] sm:$0xff]
        %v2213 = vld [vmem:[%s626 + $0x52] sm:$0xff]
        %v2214 = vld [vmem:[%s626 + $0x6a] sm:$0xff]
        %v2215 = vld [vmem:[%s626 + $0x82] sm:$0xff]
        %v2216 = vld [vmem:[%s626 + $0x9a] sm:$0xff]
        %v2217 = vld [vmem:[%s626 + $0xb2] sm:$0xff]
        %v2218 = vld [vmem:[%s635 + $0x2] sm:$0x1]
        %v2219 = vlaneseq
        %v2220 = vshrl.u32 %v2219, 7
        %v2221 = vsub.s32 0, %v2220
        %v2222 = vrot.slane %v2218, %v2221
        %v2223 = vmul.f32 %v2210, %v2222
        %v2224 = vmul.f32 %v2211, %v2222
        %v2225 = vmul.f32 %v2212, %v2222
        %v2226 = vmul.f32 %v2213, %v2222
        %v2227 = vmul.f32 %v2214, %v2222
        %v2228 = vmul.f32 %v2215, %v2222
        %v2229 = vmul.f32 %v2216, %v2222
        %v2230 = vmul.f32 %v2217, %v2222
        %v2231 = vadd.f32 %v2173, %v2223
        %v2232 = vadd.f32 %v2174, %v2224
        %v2233 = vadd.f32 %v2175, %v2225
        %v2234 = vadd.f32 %v2176, %v2226
        %v2235 = vadd.f32 %v2177, %v2227
        %v2236 = vadd.f32 %v2178, %v2228
        %v2237 = vadd.f32 %v2179, %v2229
        %v2238 = vadd.f32 %v2180, %v2230
        %v2239 = vld [vmem:[%s626 + $0xb] sm:$0xff]
        %v2240 = vld [vmem:[%s626 + $0x23] sm:$0xff]
        %v2241 = vld [vmem:[%s626 + $0x3b] sm:$0xff]
        %v2242 = vld [vmem:[%s626 + $0x53] sm:$0xff]
        %v2243 = vld [vmem:[%s626 + $0x6b] sm:$0xff]
        %v2244 = vld [vmem:[%s626 + $0x83] sm:$0xff]
        %v2245 = vld [vmem:[%s626 + $0x9b] sm:$0xff]
        %v2246 = vld [vmem:[%s626 + $0xb3] sm:$0xff]
        %v2247 = vld [vmem:[%s635 + $0x3] sm:$0x1]
        %v2248 = vlaneseq
        %v2249 = vshrl.u32 %v2248, 7
        %v2250 = vsub.s32 0, %v2249
        %v2251 = vrot.slane %v2247, %v2250
        %v2252 = vmul.f32 %v2239, %v2251
        %v2253 = vmul.f32 %v2240, %v2251
        %v2254 = vmul.f32 %v2241, %v2251
        %v2255 = vmul.f32 %v2242, %v2251
        %v2256 = vmul.f32 %v2243, %v2251
        %v2257 = vmul.f32 %v2244, %v2251
        %v2258 = vmul.f32 %v2245, %v2251
        %v2259 = vmul.f32 %v2246, %v2251
        %v2260 = vadd.f32 %v2202, %v2252
        %v2261 = vadd.f32 %v2203, %v2253
        %v2262 = vadd.f32 %v2204, %v2254
        %v2263 = vadd.f32 %v2205, %v2255
        %v2264 = vadd.f32 %v2206, %v2256
        %v2265 = vadd.f32 %v2207, %v2257
        %v2266 = vadd.f32 %v2208, %v2258
        %v2267 = vadd.f32 %v2209, %v2259
        %v2268 = vld [vmem:[%s626 + $0xc] sm:$0xff]
        %v2269 = vld [vmem:[%s626 + $0x24] sm:$0xff]
        %v2270 = vld [vmem:[%s626 + $0x3c] sm:$0xff]
        %v2271 = vld [vmem:[%s626 + $0x54] sm:$0xff]
        %v2272 = vld [vmem:[%s626 + $0x6c] sm:$0xff]
        %v2273 = vld [vmem:[%s626 + $0x84] sm:$0xff]
        %v2274 = vld [vmem:[%s626 + $0x9c] sm:$0xff]
        %v2275 = vld [vmem:[%s626 + $0xb4] sm:$0xff]
        %v2276 = vld [vmem:[%s635 + $0x4] sm:$0x1]
        %v2277 = vlaneseq
        %v2278 = vshrl.u32 %v2277, 7
        %v2279 = vsub.s32 0, %v2278
        %v2280 = vrot.slane %v2276, %v2279
        %v2281 = vmul.f32 %v2268, %v2280
        %v2282 = vmul.f32 %v2269, %v2280
        %v2283 = vmul.f32 %v2270, %v2280
        %v2284 = vmul.f32 %v2271, %v2280
        %v2285 = vmul.f32 %v2272, %v2280
        %v2286 = vmul.f32 %v2273, %v2280
        %v2287 = vmul.f32 %v2274, %v2280
        %v2288 = vmul.f32 %v2275, %v2280
        %v2289 = vadd.f32 %v2231, %v2281
        %v2290 = vadd.f32 %v2232, %v2282
        %v2291 = vadd.f32 %v2233, %v2283
        %v2292 = vadd.f32 %v2234, %v2284
        %v2293 = vadd.f32 %v2235, %v2285
        %v2294 = vadd.f32 %v2236, %v2286
        %v2295 = vadd.f32 %v2237, %v2287
        %v2296 = vadd.f32 %v2238, %v2288
        %v2297 = vld [vmem:[%s626 + $0xd] sm:$0xff]
        %v2298 = vld [vmem:[%s626 + $0x25] sm:$0xff]
        %v2299 = vld [vmem:[%s626 + $0x3d] sm:$0xff]
        %v2300 = vld [vmem:[%s626 + $0x55] sm:$0xff]
        %v2301 = vld [vmem:[%s626 + $0x6d] sm:$0xff]
        %v2302 = vld [vmem:[%s626 + $0x85] sm:$0xff]
        %v2303 = vld [vmem:[%s626 + $0x9d] sm:$0xff]
        %v2304 = vld [vmem:[%s626 + $0xb5] sm:$0xff]
        %v2305 = vld [vmem:[%s635 + $0x5] sm:$0x1]
        %v2306 = vlaneseq
        %v2307 = vshrl.u32 %v2306, 7
        %v2308 = vsub.s32 0, %v2307
        %v2309 = vrot.slane %v2305, %v2308
        %v2310 = vmul.f32 %v2297, %v2309
        %v2311 = vmul.f32 %v2298, %v2309
        %v2312 = vmul.f32 %v2299, %v2309
        %v2313 = vmul.f32 %v2300, %v2309
        %v2314 = vmul.f32 %v2301, %v2309
        %v2315 = vmul.f32 %v2302, %v2309
        %v2316 = vmul.f32 %v2303, %v2309
        %v2317 = vmul.f32 %v2304, %v2309
        %v2318 = vadd.f32 %v2260, %v2310
        %v2319 = vadd.f32 %v2261, %v2311
        %v2320 = vadd.f32 %v2262, %v2312
        %v2321 = vadd.f32 %v2263, %v2313
        %v2322 = vadd.f32 %v2264, %v2314
        %v2323 = vadd.f32 %v2265, %v2315
        %v2324 = vadd.f32 %v2266, %v2316
        %v2325 = vadd.f32 %v2267, %v2317
        %v2326 = vld [vmem:[%s626 + $0xe] sm:$0xff]
        %v2327 = vld [vmem:[%s626 + $0x26] sm:$0xff]
        %v2328 = vld [vmem:[%s626 + $0x3e] sm:$0xff]
        %v2329 = vld [vmem:[%s626 + $0x56] sm:$0xff]
        %v2330 = vld [vmem:[%s626 + $0x6e] sm:$0xff]
        %v2331 = vld [vmem:[%s626 + $0x86] sm:$0xff]
        %v2332 = vld [vmem:[%s626 + $0x9e] sm:$0xff]
        %v2333 = vld [vmem:[%s626 + $0xb6] sm:$0xff]
        %v2334 = vld [vmem:[%s635 + $0x6] sm:$0x1]
        %v2335 = vlaneseq
        %v2336 = vshrl.u32 %v2335, 7
        %v2337 = vsub.s32 0, %v2336
        %v2338 = vrot.slane %v2334, %v2337
        %v2339 = vmul.f32 %v2326, %v2338
        %v2340 = vmul.f32 %v2327, %v2338
        %v2341 = vmul.f32 %v2328, %v2338
        %v2342 = vmul.f32 %v2329, %v2338
        %v2343 = vmul.f32 %v2330, %v2338
        %v2344 = vmul.f32 %v2331, %v2338
        %v2345 = vmul.f32 %v2332, %v2338
        %v2346 = vmul.f32 %v2333, %v2338
        %v2347 = vadd.f32 %v2289, %v2339
        %v2348 = vadd.f32 %v2290, %v2340
        %v2349 = vadd.f32 %v2291, %v2341
        %v2350 = vadd.f32 %v2292, %v2342
        %v2351 = vadd.f32 %v2293, %v2343
        %v2352 = vadd.f32 %v2294, %v2344
        %v2353 = vadd.f32 %v2295, %v2345
        %v2354 = vadd.f32 %v2296, %v2346
        %v2355 = vld [vmem:[%s831 + $0x8] sm:$0xff]
        %v2356 = vld [vmem:[%s831 + $0x20] sm:$0xff]
        %v2357 = vld [vmem:[%s831 + $0x38] sm:$0xff]
        %v2358 = vld [vmem:[%s831 + $0x50] sm:$0xff]
        %v2359 = vld [vmem:[%s831 + $0x68] sm:$0xff]
        %v2360 = vld [vmem:[%s831 + $0x80] sm:$0xff]
        %v2361 = vld [vmem:[%s831 + $0x98] sm:$0xff]
        %v2362 = vld [vmem:[%s831 + $0xb0] sm:$0xff]
        %v2363 = vld [vmem:[%s840] sm:$0x1]
        %v2364 = vlaneseq
        %v2365 = vshrl.u32 %v2364, 7
        %v2366 = vsub.s32 0, %v2365
        %v2367 = vrot.slane %v2363, %v2366
        %v2368 = vmul.f32 %v2355, %v2367
        %v2369 = vmul.f32 %v2356, %v2367
        %v2370 = vmul.f32 %v2357, %v2367
        %v2371 = vmul.f32 %v2358, %v2367
        %v2372 = vmul.f32 %v2359, %v2367
        %v2373 = vmul.f32 %v2360, %v2367
        %v2374 = vmul.f32 %v2361, %v2367
        %v2375 = vmul.f32 %v2362, %v2367
        %v2376 = vadd.f32 %v2318, %v2368
        %v2377 = vadd.f32 %v2319, %v2369
        %v2378 = vadd.f32 %v2320, %v2370
        %v2379 = vadd.f32 %v2321, %v2371
        %v2380 = vadd.f32 %v2322, %v2372
        %v2381 = vadd.f32 %v2323, %v2373
        %v2382 = vadd.f32 %v2324, %v2374
        %v2383 = vadd.f32 %v2325, %v2375
        %v2384 = vld [vmem:[%s831 + $0x9] sm:$0xff]
        %v2385 = vld [vmem:[%s831 + $0x21] sm:$0xff]
        %v2386 = vld [vmem:[%s831 + $0x39] sm:$0xff]
        %v2387 = vld [vmem:[%s831 + $0x51] sm:$0xff]
        %v2388 = vld [vmem:[%s831 + $0x69] sm:$0xff]
        %v2389 = vld [vmem:[%s831 + $0x81] sm:$0xff]
        %v2390 = vld [vmem:[%s831 + $0x99] sm:$0xff]
        %v2391 = vld [vmem:[%s831 + $0xb1] sm:$0xff]
        %v2392 = vld [vmem:[%s840 + $0x1] sm:$0x1]
        %v2393 = vlaneseq
        %v2394 = vshrl.u32 %v2393, 7
        %v2395 = vsub.s32 0, %v2394
        %v2396 = vrot.slane %v2392, %v2395
        %v2397 = vmul.f32 %v2384, %v2396
        %v2398 = vmul.f32 %v2385, %v2396
        %v2399 = vmul.f32 %v2386, %v2396
        %v2400 = vmul.f32 %v2387, %v2396
        %v2401 = vmul.f32 %v2388, %v2396
        %v2402 = vmul.f32 %v2389, %v2396
        %v2403 = vmul.f32 %v2390, %v2396
        %v2404 = vmul.f32 %v2391, %v2396
        %v2405 = vadd.f32 %v2347, %v2397
        %v2406 = vadd.f32 %v2348, %v2398
        %v2407 = vadd.f32 %v2349, %v2399
        %v2408 = vadd.f32 %v2350, %v2400
        %v2409 = vadd.f32 %v2351, %v2401
        %v2410 = vadd.f32 %v2352, %v2402
        %v2411 = vadd.f32 %v2353, %v2403
        %v2412 = vadd.f32 %v2354, %v2404
        %v2413 = vld [vmem:[%s831 + $0xa] sm:$0xff]
        %v2414 = vld [vmem:[%s831 + $0x22] sm:$0xff]
        %v2415 = vld [vmem:[%s831 + $0x3a] sm:$0xff]
        %v2416 = vld [vmem:[%s831 + $0x52] sm:$0xff]
        %v2417 = vld [vmem:[%s831 + $0x6a] sm:$0xff]
        %v2418 = vld [vmem:[%s831 + $0x82] sm:$0xff]
        %v2419 = vld [vmem:[%s831 + $0x9a] sm:$0xff]
        %v2420 = vld [vmem:[%s831 + $0xb2] sm:$0xff]
        %v2421 = vld [vmem:[%s840 + $0x2] sm:$0x1]
        %v2422 = vlaneseq
        %v2423 = vshrl.u32 %v2422, 7
        %v2424 = vsub.s32 0, %v2423
        %v2425 = vrot.slane %v2421, %v2424
        %v2426 = vmul.f32 %v2413, %v2425
        %v2427 = vmul.f32 %v2414, %v2425
        %v2428 = vmul.f32 %v2415, %v2425
        %v2429 = vmul.f32 %v2416, %v2425
        %v2430 = vmul.f32 %v2417, %v2425
        %v2431 = vmul.f32 %v2418, %v2425
        %v2432 = vmul.f32 %v2419, %v2425
        %v2433 = vmul.f32 %v2420, %v2425
        %v2434 = vadd.f32 %v2376, %v2426
        %v2435 = vadd.f32 %v2377, %v2427
        %v2436 = vadd.f32 %v2378, %v2428
        %v2437 = vadd.f32 %v2379, %v2429
        %v2438 = vadd.f32 %v2380, %v2430
        %v2439 = vadd.f32 %v2381, %v2431
        %v2440 = vadd.f32 %v2382, %v2432
        %v2441 = vadd.f32 %v2383, %v2433
        %v2442 = vld [vmem:[%s831 + $0xb] sm:$0xff]
        %v2443 = vld [vmem:[%s831 + $0x23] sm:$0xff]
        %v2444 = vld [vmem:[%s831 + $0x3b] sm:$0xff]
        %v2445 = vld [vmem:[%s831 + $0x53] sm:$0xff]
        %v2446 = vld [vmem:[%s831 + $0x6b] sm:$0xff]
        %v2447 = vld [vmem:[%s831 + $0x83] sm:$0xff]
        %v2448 = vld [vmem:[%s831 + $0x9b] sm:$0xff]
        %v2449 = vld [vmem:[%s831 + $0xb3] sm:$0xff]
        %v2450 = vld [vmem:[%s840 + $0x3] sm:$0x1]
        %v2451 = vlaneseq
        %v2452 = vshrl.u32 %v2451, 7
        %v2453 = vsub.s32 0, %v2452
        %v2454 = vrot.slane %v2450, %v2453
        %v2455 = vmul.f32 %v2442, %v2454
        %v2456 = vmul.f32 %v2443, %v2454
        %v2457 = vmul.f32 %v2444, %v2454
        %v2458 = vmul.f32 %v2445, %v2454
        %v2459 = vmul.f32 %v2446, %v2454
        %v2460 = vmul.f32 %v2447, %v2454
        %v2461 = vmul.f32 %v2448, %v2454
        %v2462 = vmul.f32 %v2449, %v2454
        %v2463 = vadd.f32 %v2405, %v2455
        %v2464 = vadd.f32 %v2406, %v2456
        %v2465 = vadd.f32 %v2407, %v2457
        %v2466 = vadd.f32 %v2408, %v2458
        %v2467 = vadd.f32 %v2409, %v2459
        %v2468 = vadd.f32 %v2410, %v2460
        %v2469 = vadd.f32 %v2411, %v2461
        %v2470 = vadd.f32 %v2412, %v2462
        %v2471 = vld [vmem:[%s831 + $0xc] sm:$0xff]
        %v2472 = vld [vmem:[%s831 + $0x24] sm:$0xff]
        %v2473 = vld [vmem:[%s831 + $0x3c] sm:$0xff]
        %v2474 = vld [vmem:[%s831 + $0x54] sm:$0xff]
        %v2475 = vld [vmem:[%s831 + $0x6c] sm:$0xff]
        %v2476 = vld [vmem:[%s831 + $0x84] sm:$0xff]
        %v2477 = vld [vmem:[%s831 + $0x9c] sm:$0xff]
        %v2478 = vld [vmem:[%s831 + $0xb4] sm:$0xff]
        %v2479 = vld [vmem:[%s840 + $0x4] sm:$0x1]
        %v2480 = vlaneseq
        %v2481 = vshrl.u32 %v2480, 7
        %v2482 = vsub.s32 0, %v2481
        %v2483 = vrot.slane %v2479, %v2482
        %v2484 = vmul.f32 %v2471, %v2483
        %v2485 = vmul.f32 %v2472, %v2483
        %v2486 = vmul.f32 %v2473, %v2483
        %v2487 = vmul.f32 %v2474, %v2483
        %v2488 = vmul.f32 %v2475, %v2483
        %v2489 = vmul.f32 %v2476, %v2483
        %v2490 = vmul.f32 %v2477, %v2483
        %v2491 = vmul.f32 %v2478, %v2483
        %v2492 = vadd.f32 %v2434, %v2484
        %v2493 = vadd.f32 %v2435, %v2485
        %v2494 = vadd.f32 %v2436, %v2486
        %v2495 = vadd.f32 %v2437, %v2487
        %v2496 = vadd.f32 %v2438, %v2488
        %v2497 = vadd.f32 %v2439, %v2489
        %v2498 = vadd.f32 %v2440, %v2490
        %v2499 = vadd.f32 %v2441, %v2491
        %v2500 = vld [vmem:[%s831 + $0xd] sm:$0xff]
        %v2501 = vld [vmem:[%s831 + $0x25] sm:$0xff]
        %v2502 = vld [vmem:[%s831 + $0x3d] sm:$0xff]
        %v2503 = vld [vmem:[%s831 + $0x55] sm:$0xff]
        %v2504 = vld [vmem:[%s831 + $0x6d] sm:$0xff]
        %v2505 = vld [vmem:[%s831 + $0x85] sm:$0xff]
        %v2506 = vld [vmem:[%s831 + $0x9d] sm:$0xff]
        %v2507 = vld [vmem:[%s831 + $0xb5] sm:$0xff]
        %v2508 = vld [vmem:[%s840 + $0x5] sm:$0x1]
        %v2509 = vlaneseq
        %v2510 = vshrl.u32 %v2509, 7
        %v2511 = vsub.s32 0, %v2510
        %v2512 = vrot.slane %v2508, %v2511
        %v2513 = vmul.f32 %v2500, %v2512
        %v2514 = vmul.f32 %v2501, %v2512
        %v2515 = vmul.f32 %v2502, %v2512
        %v2516 = vmul.f32 %v2503, %v2512
        %v2517 = vmul.f32 %v2504, %v2512
        %v2518 = vmul.f32 %v2505, %v2512
        %v2519 = vmul.f32 %v2506, %v2512
        %v2520 = vmul.f32 %v2507, %v2512
        %v2521 = vadd.f32 %v2463, %v2513
        %v2522 = vadd.f32 %v2464, %v2514
        %v2523 = vadd.f32 %v2465, %v2515
        %v2524 = vadd.f32 %v2466, %v2516
        %v2525 = vadd.f32 %v2467, %v2517
        %v2526 = vadd.f32 %v2468, %v2518
        %v2527 = vadd.f32 %v2469, %v2519
        %v2528 = vadd.f32 %v2470, %v2520
        %v2529 = vld [vmem:[%s831 + $0xe] sm:$0xff]
        %v2530 = vld [vmem:[%s831 + $0x26] sm:$0xff]
        %v2531 = vld [vmem:[%s831 + $0x3e] sm:$0xff]
        %v2532 = vld [vmem:[%s831 + $0x56] sm:$0xff]
        %v2533 = vld [vmem:[%s831 + $0x6e] sm:$0xff]
        %v2534 = vld [vmem:[%s831 + $0x86] sm:$0xff]
        %v2535 = vld [vmem:[%s831 + $0x9e] sm:$0xff]
        %v2536 = vld [vmem:[%s831 + $0xb6] sm:$0xff]
        %v2537 = vld [vmem:[%s840 + $0x6] sm:$0x1]
        %v2538 = vlaneseq
        %v2539 = vshrl.u32 %v2538, 7
        %v2540 = vsub.s32 0, %v2539
        %v2541 = vrot.slane %v2537, %v2540
        %v2542 = vmul.f32 %v2529, %v2541
        %v2543 = vmul.f32 %v2530, %v2541
        %v2544 = vmul.f32 %v2531, %v2541
        %v2545 = vmul.f32 %v2532, %v2541
        %v2546 = vmul.f32 %v2533, %v2541
        %v2547 = vmul.f32 %v2534, %v2541
        %v2548 = vmul.f32 %v2535, %v2541
        %v2549 = vmul.f32 %v2536, %v2541
        %v2550 = vadd.f32 %v2492, %v2542
        %v2551 = vadd.f32 %v2493, %v2543
        %v2552 = vadd.f32 %v2494, %v2544
        %v2553 = vadd.f32 %v2495, %v2545
        %v2554 = vadd.f32 %v2496, %v2546
        %v2555 = vadd.f32 %v2497, %v2547
        %v2556 = vadd.f32 %v2498, %v2548
        %v2557 = vadd.f32 %v2499, %v2549
        %v2558 = vld [vmem:[%s331 + $0x8] sm:$0xff]
        %v2559 = vld [vmem:[%s331 + $0x20] sm:$0xff]
        %v2560 = vld [vmem:[%s331 + $0x38] sm:$0xff]
        %v2561 = vld [vmem:[%s331 + $0x50] sm:$0xff]
        %v2562 = vld [vmem:[%s331 + $0x68] sm:$0xff]
        %v2563 = vld [vmem:[%s331 + $0x80] sm:$0xff]
        %v2564 = vld [vmem:[%s331 + $0x98] sm:$0xff]
        %v2565 = vld [vmem:[%s331 + $0xb0] sm:$0xff]
        %v2566 = vld [vmem:[%s1044] sm:$0x1]
        %v2567 = vlaneseq
        %v2568 = vshrl.u32 %v2567, 7
        %v2569 = vsub.s32 0, %v2568
        %v2570 = vrot.slane %v2566, %v2569
        %v2571 = vmul.f32 %v2558, %v2570
        %v2572 = vmul.f32 %v2559, %v2570
        %v2573 = vmul.f32 %v2560, %v2570
        %v2574 = vmul.f32 %v2561, %v2570
        %v2575 = vmul.f32 %v2562, %v2570
        %v2576 = vmul.f32 %v2563, %v2570
        %v2577 = vmul.f32 %v2564, %v2570
        %v2578 = vmul.f32 %v2565, %v2570
        %v2579 = vadd.f32 %v2521, %v2571
        %v2580 = vadd.f32 %v2522, %v2572
        %v2581 = vadd.f32 %v2523, %v2573
        %v2582 = vadd.f32 %v2524, %v2574
        %v2583 = vadd.f32 %v2525, %v2575
        %v2584 = vadd.f32 %v2526, %v2576
        %v2585 = vadd.f32 %v2527, %v2577
        %v2586 = vadd.f32 %v2528, %v2578
        %v2587 = vld [vmem:[%s331 + $0x9] sm:$0xff]
        %v2588 = vld [vmem:[%s331 + $0x21] sm:$0xff]
        %v2589 = vld [vmem:[%s331 + $0x39] sm:$0xff]
        %v2590 = vld [vmem:[%s331 + $0x51] sm:$0xff]
        %v2591 = vld [vmem:[%s331 + $0x69] sm:$0xff]
        %v2592 = vld [vmem:[%s331 + $0x81] sm:$0xff]
        %v2593 = vld [vmem:[%s331 + $0x99] sm:$0xff]
        %v2594 = vld [vmem:[%s331 + $0xb1] sm:$0xff]
        %v2595 = vld [vmem:[%s1044 + $0x1] sm:$0x1]
        %v2596 = vlaneseq
        %v2597 = vshrl.u32 %v2596, 7
        %v2598 = vsub.s32 0, %v2597
        %v2599 = vrot.slane %v2595, %v2598
        %v2600 = vmul.f32 %v2587, %v2599
        %v2601 = vmul.f32 %v2588, %v2599
        %v2602 = vmul.f32 %v2589, %v2599
        %v2603 = vmul.f32 %v2590, %v2599
        %v2604 = vmul.f32 %v2591, %v2599
        %v2605 = vmul.f32 %v2592, %v2599
        %v2606 = vmul.f32 %v2593, %v2599
        %v2607 = vmul.f32 %v2594, %v2599
        %v2608 = vadd.f32 %v2550, %v2600
        %v2609 = vadd.f32 %v2551, %v2601
        %v2610 = vadd.f32 %v2552, %v2602
        %v2611 = vadd.f32 %v2553, %v2603
        %v2612 = vadd.f32 %v2554, %v2604
        %v2613 = vadd.f32 %v2555, %v2605
        %v2614 = vadd.f32 %v2556, %v2606
        %v2615 = vadd.f32 %v2557, %v2607
        %v2616 = vld [vmem:[%s331 + $0xa] sm:$0xff]
        %v2617 = vld [vmem:[%s331 + $0x22] sm:$0xff]
        %v2618 = vld [vmem:[%s331 + $0x3a] sm:$0xff]
        %v2619 = vld [vmem:[%s331 + $0x52] sm:$0xff]
        %v2620 = vld [vmem:[%s331 + $0x6a] sm:$0xff]
        %v2621 = vld [vmem:[%s331 + $0x82] sm:$0xff]
        %v2622 = vld [vmem:[%s331 + $0x9a] sm:$0xff]
        %v2623 = vld [vmem:[%s331 + $0xb2] sm:$0xff]
        %v2624 = vld [vmem:[%s1044 + $0x2] sm:$0x1]
        %v2625 = vlaneseq
        %v2626 = vshrl.u32 %v2625, 7
        %v2627 = vsub.s32 0, %v2626
        %v2628 = vrot.slane %v2624, %v2627
        %v2629 = vmul.f32 %v2616, %v2628
        %v2630 = vmul.f32 %v2617, %v2628
        %v2631 = vmul.f32 %v2618, %v2628
        %v2632 = vmul.f32 %v2619, %v2628
        %v2633 = vmul.f32 %v2620, %v2628
        %v2634 = vmul.f32 %v2621, %v2628
        %v2635 = vmul.f32 %v2622, %v2628
        %v2636 = vmul.f32 %v2623, %v2628
        %v2637 = vadd.f32 %v2579, %v2629
        %v2638 = vadd.f32 %v2580, %v2630
        %v2639 = vadd.f32 %v2581, %v2631
        %v2640 = vadd.f32 %v2582, %v2632
        %v2641 = vadd.f32 %v2583, %v2633
        %v2642 = vadd.f32 %v2584, %v2634
        %v2643 = vadd.f32 %v2585, %v2635
        %v2644 = vadd.f32 %v2586, %v2636
        %v2645 = vld [vmem:[%s331 + $0xb] sm:$0xff]
        %v2646 = vld [vmem:[%s331 + $0x23] sm:$0xff]
        %v2647 = vld [vmem:[%s331 + $0x3b] sm:$0xff]
        %v2648 = vld [vmem:[%s331 + $0x53] sm:$0xff]
        %v2649 = vld [vmem:[%s331 + $0x6b] sm:$0xff]
        %v2650 = vld [vmem:[%s331 + $0x83] sm:$0xff]
        %v2651 = vld [vmem:[%s331 + $0x9b] sm:$0xff]
        %v2652 = vld [vmem:[%s331 + $0xb3] sm:$0xff]
        %v2653 = vld [vmem:[%s1044 + $0x3] sm:$0x1]
        %v2654 = vlaneseq
        %v2655 = vshrl.u32 %v2654, 7
        %v2656 = vsub.s32 0, %v2655
        %v2657 = vrot.slane %v2653, %v2656
        %v2658 = vmul.f32 %v2645, %v2657
        %v2659 = vmul.f32 %v2646, %v2657
        %v2660 = vmul.f32 %v2647, %v2657
        %v2661 = vmul.f32 %v2648, %v2657
        %v2662 = vmul.f32 %v2649, %v2657
        %v2663 = vmul.f32 %v2650, %v2657
        %v2664 = vmul.f32 %v2651, %v2657
        %v2665 = vmul.f32 %v2652, %v2657
        %v2666 = vadd.f32 %v2608, %v2658
        %v2667 = vadd.f32 %v2609, %v2659
        %v2668 = vadd.f32 %v2610, %v2660
        %v2669 = vadd.f32 %v2611, %v2661
        %v2670 = vadd.f32 %v2612, %v2662
        %v2671 = vadd.f32 %v2613, %v2663
        %v2672 = vadd.f32 %v2614, %v2664
        %v2673 = vadd.f32 %v2615, %v2665
        %v2674 = vld [vmem:[%s331 + $0xc] sm:$0xff]
        %v2675 = vld [vmem:[%s331 + $0x24] sm:$0xff]
        %v2676 = vld [vmem:[%s331 + $0x3c] sm:$0xff]
        %v2677 = vld [vmem:[%s331 + $0x54] sm:$0xff]
        %v2678 = vld [vmem:[%s331 + $0x6c] sm:$0xff]
        %v2679 = vld [vmem:[%s331 + $0x84] sm:$0xff]
        %v2680 = vld [vmem:[%s331 + $0x9c] sm:$0xff]
        %v2681 = vld [vmem:[%s331 + $0xb4] sm:$0xff]
        %v2682 = vld [vmem:[%s1044 + $0x4] sm:$0x1]
        %v2683 = vlaneseq
        %v2684 = vshrl.u32 %v2683, 7
        %v2685 = vsub.s32 0, %v2684
        %v2686 = vrot.slane %v2682, %v2685
        %v2687 = vmul.f32 %v2674, %v2686
        %v2688 = vmul.f32 %v2675, %v2686
        %v2689 = vmul.f32 %v2676, %v2686
        %v2690 = vmul.f32 %v2677, %v2686
        %v2691 = vmul.f32 %v2678, %v2686
        %v2692 = vmul.f32 %v2679, %v2686
        %v2693 = vmul.f32 %v2680, %v2686
        %v2694 = vmul.f32 %v2681, %v2686
        %v2695 = vadd.f32 %v2637, %v2687
        %v2696 = vadd.f32 %v2638, %v2688
        %v2697 = vadd.f32 %v2639, %v2689
        %v2698 = vadd.f32 %v2640, %v2690
        %v2699 = vadd.f32 %v2641, %v2691
        %v2700 = vadd.f32 %v2642, %v2692
        %v2701 = vadd.f32 %v2643, %v2693
        %v2702 = vadd.f32 %v2644, %v2694
        %v2703 = vld [vmem:[%s331 + $0xd] sm:$0xff]
        %v2704 = vld [vmem:[%s331 + $0x25] sm:$0xff]
        %v2705 = vld [vmem:[%s331 + $0x3d] sm:$0xff]
        %v2706 = vld [vmem:[%s331 + $0x55] sm:$0xff]
        %v2707 = vld [vmem:[%s331 + $0x6d] sm:$0xff]
        %v2708 = vld [vmem:[%s331 + $0x85] sm:$0xff]
        %v2709 = vld [vmem:[%s331 + $0x9d] sm:$0xff]
        %v2710 = vld [vmem:[%s331 + $0xb5] sm:$0xff]
        %v2711 = vld [vmem:[%s1044 + $0x5] sm:$0x1]
        %v2712 = vlaneseq
        %v2713 = vshrl.u32 %v2712, 7
        %v2714 = vsub.s32 0, %v2713
        %v2715 = vrot.slane %v2711, %v2714
        %v2716 = vmul.f32 %v2703, %v2715
        %v2717 = vmul.f32 %v2704, %v2715
        %v2718 = vmul.f32 %v2705, %v2715
        %v2719 = vmul.f32 %v2706, %v2715
        %v2720 = vmul.f32 %v2707, %v2715
        %v2721 = vmul.f32 %v2708, %v2715
        %v2722 = vmul.f32 %v2709, %v2715
        %v2723 = vmul.f32 %v2710, %v2715
        %v2724 = vadd.f32 %v2666, %v2716
        %v2725 = vadd.f32 %v2667, %v2717
        %v2726 = vadd.f32 %v2668, %v2718
        %v2727 = vadd.f32 %v2669, %v2719
        %v2728 = vadd.f32 %v2670, %v2720
        %v2729 = vadd.f32 %v2671, %v2721
        %v2730 = vadd.f32 %v2672, %v2722
        %v2731 = vadd.f32 %v2673, %v2723
        %v2732 = vld [vmem:[%s331 + $0xe] sm:$0xff]
        %v2733 = vld [vmem:[%s331 + $0x26] sm:$0xff]
        %v2734 = vld [vmem:[%s331 + $0x3e] sm:$0xff]
        %v2735 = vld [vmem:[%s331 + $0x56] sm:$0xff]
        %v2736 = vld [vmem:[%s331 + $0x6e] sm:$0xff]
        %v2737 = vld [vmem:[%s331 + $0x86] sm:$0xff]
        %v2738 = vld [vmem:[%s331 + $0x9e] sm:$0xff]
        %v2739 = vld [vmem:[%s331 + $0xb6] sm:$0xff]
        %v2740 = vld [vmem:[%s1044 + $0x6] sm:$0x1]
        %v2741 = vlaneseq
        %v2742 = vshrl.u32 %v2741, 7
        %v2743 = vsub.s32 0, %v2742
        %v2744 = vrot.slane %v2740, %v2743
        %v2745 = vmul.f32 %v2732, %v2744
        %v2746 = vmul.f32 %v2733, %v2744
        %v2747 = vmul.f32 %v2734, %v2744
        %v2748 = vmul.f32 %v2735, %v2744
        %v2749 = vmul.f32 %v2736, %v2744
        %v2750 = vmul.f32 %v2737, %v2744
        %v2751 = vmul.f32 %v2738, %v2744
        %v2752 = vmul.f32 %v2739, %v2744
        %v2753 = vadd.f32 %v2695, %v2745
        %v2754 = vadd.f32 %v2696, %v2746
        %v2755 = vadd.f32 %v2697, %v2747
        %v2756 = vadd.f32 %v2698, %v2748
        %v2757 = vadd.f32 %v2699, %v2749
        %v2758 = vadd.f32 %v2700, %v2750
        %v2759 = vadd.f32 %v2701, %v2751
        %v2760 = vadd.f32 %v2702, %v2752
        %v2761 = vld [vmem:[%s1240 + $0x8] sm:$0xff]
        %v2762 = vld [vmem:[%s1240 + $0x20] sm:$0xff]
        %v2763 = vld [vmem:[%s1240 + $0x38] sm:$0xff]
        %v2764 = vld [vmem:[%s1240 + $0x50] sm:$0xff]
        %v2765 = vld [vmem:[%s1240 + $0x68] sm:$0xff]
        %v2766 = vld [vmem:[%s1240 + $0x80] sm:$0xff]
        %v2767 = vld [vmem:[%s1240 + $0x98] sm:$0xff]
        %v2768 = vld [vmem:[%s1240 + $0xb0] sm:$0xff]
        %v2769 = vld [vmem:[%s1249] sm:$0x1]
        %v2770 = vlaneseq
        %v2771 = vshrl.u32 %v2770, 7
        %v2772 = vsub.s32 0, %v2771
        %v2773 = vrot.slane %v2769, %v2772
        %v2774 = vmul.f32 %v2761, %v2773
        %v2775 = vmul.f32 %v2762, %v2773
        %v2776 = vmul.f32 %v2763, %v2773
        %v2777 = vmul.f32 %v2764, %v2773
        %v2778 = vmul.f32 %v2765, %v2773
        %v2779 = vmul.f32 %v2766, %v2773
        %v2780 = vmul.f32 %v2767, %v2773
        %v2781 = vmul.f32 %v2768, %v2773
        %v2782 = vadd.f32 %v2724, %v2774
        %v2783 = vadd.f32 %v2725, %v2775
        %v2784 = vadd.f32 %v2726, %v2776
        %v2785 = vadd.f32 %v2727, %v2777
        %v2786 = vadd.f32 %v2728, %v2778
        %v2787 = vadd.f32 %v2729, %v2779
        %v2788 = vadd.f32 %v2730, %v2780
        %v2789 = vadd.f32 %v2731, %v2781
        %v2790 = vld [vmem:[%s1240 + $0x9] sm:$0xff]
        %v2791 = vld [vmem:[%s1240 + $0x21] sm:$0xff]
        %v2792 = vld [vmem:[%s1240 + $0x39] sm:$0xff]
        %v2793 = vld [vmem:[%s1240 + $0x51] sm:$0xff]
        %v2794 = vld [vmem:[%s1240 + $0x69] sm:$0xff]
        %v2795 = vld [vmem:[%s1240 + $0x81] sm:$0xff]
        %v2796 = vld [vmem:[%s1240 + $0x99] sm:$0xff]
        %v2797 = vld [vmem:[%s1240 + $0xb1] sm:$0xff]
        %v2798 = vld [vmem:[%s1249 + $0x1] sm:$0x1]
        %v2799 = vlaneseq
        %v2800 = vshrl.u32 %v2799, 7
        %v2801 = vsub.s32 0, %v2800
        %v2802 = vrot.slane %v2798, %v2801
        %v2803 = vmul.f32 %v2790, %v2802
        %v2804 = vmul.f32 %v2791, %v2802
        %v2805 = vmul.f32 %v2792, %v2802
        %v2806 = vmul.f32 %v2793, %v2802
        %v2807 = vmul.f32 %v2794, %v2802
        %v2808 = vmul.f32 %v2795, %v2802
        %v2809 = vmul.f32 %v2796, %v2802
        %v2810 = vmul.f32 %v2797, %v2802
        %v2811 = vadd.f32 %v2753, %v2803
        %v2812 = vadd.f32 %v2754, %v2804
        %v2813 = vadd.f32 %v2755, %v2805
        %v2814 = vadd.f32 %v2756, %v2806
        %v2815 = vadd.f32 %v2757, %v2807
        %v2816 = vadd.f32 %v2758, %v2808
        %v2817 = vadd.f32 %v2759, %v2809
        %v2818 = vadd.f32 %v2760, %v2810
        %v2819 = vld [vmem:[%s1240 + $0xa] sm:$0xff]
        %v2820 = vld [vmem:[%s1240 + $0x22] sm:$0xff]
        %v2821 = vld [vmem:[%s1240 + $0x3a] sm:$0xff]
        %v2822 = vld [vmem:[%s1240 + $0x52] sm:$0xff]
        %v2823 = vld [vmem:[%s1240 + $0x6a] sm:$0xff]
        %v2824 = vld [vmem:[%s1240 + $0x82] sm:$0xff]
        %v2825 = vld [vmem:[%s1240 + $0x9a] sm:$0xff]
        %v2826 = vld [vmem:[%s1240 + $0xb2] sm:$0xff]
        %v2827 = vld [vmem:[%s1249 + $0x2] sm:$0x1]
        %v2828 = vlaneseq
        %v2829 = vshrl.u32 %v2828, 7
        %v2830 = vsub.s32 0, %v2829
        %v2831 = vrot.slane %v2827, %v2830
        %v2832 = vmul.f32 %v2819, %v2831
        %v2833 = vmul.f32 %v2820, %v2831
        %v2834 = vmul.f32 %v2821, %v2831
        %v2835 = vmul.f32 %v2822, %v2831
        %v2836 = vmul.f32 %v2823, %v2831
        %v2837 = vmul.f32 %v2824, %v2831
        %v2838 = vmul.f32 %v2825, %v2831
        %v2839 = vmul.f32 %v2826, %v2831
        %v2840 = vadd.f32 %v2782, %v2832
        %v2841 = vadd.f32 %v2783, %v2833
        %v2842 = vadd.f32 %v2784, %v2834
        %v2843 = vadd.f32 %v2785, %v2835
        %v2844 = vadd.f32 %v2786, %v2836
        %v2845 = vadd.f32 %v2787, %v2837
        %v2846 = vadd.f32 %v2788, %v2838
        %v2847 = vadd.f32 %v2789, %v2839
        %v2848 = vld [vmem:[%s1240 + $0xb] sm:$0xff]
        %v2849 = vld [vmem:[%s1240 + $0x23] sm:$0xff]
        %v2850 = vld [vmem:[%s1240 + $0x3b] sm:$0xff]
        %v2851 = vld [vmem:[%s1240 + $0x53] sm:$0xff]
        %v2852 = vld [vmem:[%s1240 + $0x6b] sm:$0xff]
        %v2853 = vld [vmem:[%s1240 + $0x83] sm:$0xff]
        %v2854 = vld [vmem:[%s1240 + $0x9b] sm:$0xff]
        %v2855 = vld [vmem:[%s1240 + $0xb3] sm:$0xff]
        %v2856 = vld [vmem:[%s1249 + $0x3] sm:$0x1]
        %v2857 = vlaneseq
        %v2858 = vshrl.u32 %v2857, 7
        %v2859 = vsub.s32 0, %v2858
        %v2860 = vrot.slane %v2856, %v2859
        %v2861 = vmul.f32 %v2848, %v2860
        %v2862 = vmul.f32 %v2849, %v2860
        %v2863 = vmul.f32 %v2850, %v2860
        %v2864 = vmul.f32 %v2851, %v2860
        %v2865 = vmul.f32 %v2852, %v2860
        %v2866 = vmul.f32 %v2853, %v2860
        %v2867 = vmul.f32 %v2854, %v2860
        %v2868 = vmul.f32 %v2855, %v2860
        %v2869 = vadd.f32 %v2811, %v2861
        %v2870 = vadd.f32 %v2812, %v2862
        %v2871 = vadd.f32 %v2813, %v2863
        %v2872 = vadd.f32 %v2814, %v2864
        %v2873 = vadd.f32 %v2815, %v2865
        %v2874 = vadd.f32 %v2816, %v2866
        %v2875 = vadd.f32 %v2817, %v2867
        %v2876 = vadd.f32 %v2818, %v2868
        %v2877 = vld [vmem:[%s1240 + $0xc] sm:$0xff]
        %v2878 = vld [vmem:[%s1240 + $0x24] sm:$0xff]
        %v2879 = vld [vmem:[%s1240 + $0x3c] sm:$0xff]
        %v2880 = vld [vmem:[%s1240 + $0x54] sm:$0xff]
        %v2881 = vld [vmem:[%s1240 + $0x6c] sm:$0xff]
        %v2882 = vld [vmem:[%s1240 + $0x84] sm:$0xff]
        %v2883 = vld [vmem:[%s1240 + $0x9c] sm:$0xff]
        %v2884 = vld [vmem:[%s1240 + $0xb4] sm:$0xff]
        %v2885 = vld [vmem:[%s1249 + $0x4] sm:$0x1]
        %v2886 = vlaneseq
        %v2887 = vshrl.u32 %v2886, 7
        %v2888 = vsub.s32 0, %v2887
        %v2889 = vrot.slane %v2885, %v2888
        %v2890 = vmul.f32 %v2877, %v2889
        %v2891 = vmul.f32 %v2878, %v2889
        %v2892 = vmul.f32 %v2879, %v2889
        %v2893 = vmul.f32 %v2880, %v2889
        %v2894 = vmul.f32 %v2881, %v2889
        %v2895 = vmul.f32 %v2882, %v2889
        %v2896 = vmul.f32 %v2883, %v2889
        %v2897 = vmul.f32 %v2884, %v2889
        %v2898 = vadd.f32 %v2840, %v2890
        %v2899 = vadd.f32 %v2841, %v2891
        %v2900 = vadd.f32 %v2842, %v2892
        %v2901 = vadd.f32 %v2843, %v2893
        %v2902 = vadd.f32 %v2844, %v2894
        %v2903 = vadd.f32 %v2845, %v2895
        %v2904 = vadd.f32 %v2846, %v2896
        %v2905 = vadd.f32 %v2847, %v2897
        %v2906 = vld [vmem:[%s1240 + $0xd] sm:$0xff]
        %v2907 = vld [vmem:[%s1240 + $0x25] sm:$0xff]
        %v2908 = vld [vmem:[%s1240 + $0x3d] sm:$0xff]
        %v2909 = vld [vmem:[%s1240 + $0x55] sm:$0xff]
        %v2910 = vld [vmem:[%s1240 + $0x6d] sm:$0xff]
        %v2911 = vld [vmem:[%s1240 + $0x85] sm:$0xff]
        %v2912 = vld [vmem:[%s1240 + $0x9d] sm:$0xff]
        %v2913 = vld [vmem:[%s1240 + $0xb5] sm:$0xff]
        %v2914 = vld [vmem:[%s1249 + $0x5] sm:$0x1]
        %v2915 = vlaneseq
        %v2916 = vshrl.u32 %v2915, 7
        %v2917 = vsub.s32 0, %v2916
        %v2918 = vrot.slane %v2914, %v2917
        %v2919 = vmul.f32 %v2906, %v2918
        %v2920 = vmul.f32 %v2907, %v2918
        %v2921 = vmul.f32 %v2908, %v2918
        %v2922 = vmul.f32 %v2909, %v2918
        %v2923 = vmul.f32 %v2910, %v2918
        %v2924 = vmul.f32 %v2911, %v2918
        %v2925 = vmul.f32 %v2912, %v2918
        %v2926 = vmul.f32 %v2913, %v2918
        %v2927 = vadd.f32 %v2869, %v2919
        %v2928 = vadd.f32 %v2870, %v2920
        %v2929 = vadd.f32 %v2871, %v2921
        %v2930 = vadd.f32 %v2872, %v2922
        %v2931 = vadd.f32 %v2873, %v2923
        %v2932 = vadd.f32 %v2874, %v2924
        %v2933 = vadd.f32 %v2875, %v2925
        %v2934 = vadd.f32 %v2876, %v2926
        %v2935 = vld [vmem:[%s1240 + $0xe] sm:$0xff]
        %v2936 = vld [vmem:[%s1240 + $0x26] sm:$0xff]
        %v2937 = vld [vmem:[%s1240 + $0x3e] sm:$0xff]
        %v2938 = vld [vmem:[%s1240 + $0x56] sm:$0xff]
        %v2939 = vld [vmem:[%s1240 + $0x6e] sm:$0xff]
        %v2940 = vld [vmem:[%s1240 + $0x86] sm:$0xff]
        %v2941 = vld [vmem:[%s1240 + $0x9e] sm:$0xff]
        %v2942 = vld [vmem:[%s1240 + $0xb6] sm:$0xff]
        %v2943 = vld [vmem:[%s1249 + $0x6] sm:$0x1]
        %v2944 = vlaneseq
        %v2945 = vshrl.u32 %v2944, 7
        %v2946 = vsub.s32 0, %v2945
        %v2947 = vrot.slane %v2943, %v2946
        %v2948 = vmul.f32 %v2935, %v2947
        %v2949 = vmul.f32 %v2936, %v2947
        %v2950 = vmul.f32 %v2937, %v2947
        %v2951 = vmul.f32 %v2938, %v2947
        %v2952 = vmul.f32 %v2939, %v2947
        %v2953 = vmul.f32 %v2940, %v2947
        %v2954 = vmul.f32 %v2941, %v2947
        %v2955 = vmul.f32 %v2942, %v2947
        %v2956 = vadd.f32 %v2898, %v2948
        %v2957 = vadd.f32 %v2899, %v2949
        %v2958 = vadd.f32 %v2900, %v2950
        %v2959 = vadd.f32 %v2901, %v2951
        %v2960 = vadd.f32 %v2902, %v2952
        %v2961 = vadd.f32 %v2903, %v2953
        %v2962 = vadd.f32 %v2904, %v2954
        %v2963 = vadd.f32 %v2905, %v2955
        %v2964 = vld [vmem:[%s1445 + $0x8] sm:$0xff]
        %v2965 = vld [vmem:[%s1445 + $0x20] sm:$0xff]
        %v2966 = vld [vmem:[%s1445 + $0x38] sm:$0xff]
        %v2967 = vld [vmem:[%s1445 + $0x50] sm:$0xff]
        %v2968 = vld [vmem:[%s1445 + $0x68] sm:$0xff]
        %v2969 = vld [vmem:[%s1445 + $0x80] sm:$0xff]
        %v2970 = vld [vmem:[%s1445 + $0x98] sm:$0xff]
        %v2971 = vld [vmem:[%s1445 + $0xb0] sm:$0xff]
        %v2972 = vld [vmem:[%s1454] sm:$0x1]
        %v2973 = vlaneseq
        %v2974 = vshrl.u32 %v2973, 7
        %v2975 = vsub.s32 0, %v2974
        %v2976 = vrot.slane %v2972, %v2975
        %v2977 = vmul.f32 %v2964, %v2976
        %v2978 = vmul.f32 %v2965, %v2976
        %v2979 = vmul.f32 %v2966, %v2976
        %v2980 = vmul.f32 %v2967, %v2976
        %v2981 = vmul.f32 %v2968, %v2976
        %v2982 = vmul.f32 %v2969, %v2976
        %v2983 = vmul.f32 %v2970, %v2976
        %v2984 = vmul.f32 %v2971, %v2976
        %v2985 = vadd.f32 %v2927, %v2977
        %v2986 = vadd.f32 %v2928, %v2978
        %v2987 = vadd.f32 %v2929, %v2979
        %v2988 = vadd.f32 %v2930, %v2980
        %v2989 = vadd.f32 %v2931, %v2981
        %v2990 = vadd.f32 %v2932, %v2982
        %v2991 = vadd.f32 %v2933, %v2983
        %v2992 = vadd.f32 %v2934, %v2984
        %v2993 = vld [vmem:[%s1445 + $0x9] sm:$0xff]
        %v2994 = vld [vmem:[%s1445 + $0x21] sm:$0xff]
        %v2995 = vld [vmem:[%s1445 + $0x39] sm:$0xff]
        %v2996 = vld [vmem:[%s1445 + $0x51] sm:$0xff]
        %v2997 = vld [vmem:[%s1445 + $0x69] sm:$0xff]
        %v2998 = vld [vmem:[%s1445 + $0x81] sm:$0xff]
        %v2999 = vld [vmem:[%s1445 + $0x99] sm:$0xff]
        %v3000 = vld [vmem:[%s1445 + $0xb1] sm:$0xff]
        %v3001 = vld [vmem:[%s1454 + $0x1] sm:$0x1]
        %v3002 = vlaneseq
        %v3003 = vshrl.u32 %v3002, 7
        %v3004 = vsub.s32 0, %v3003
        %v3005 = vrot.slane %v3001, %v3004
        %v3006 = vmul.f32 %v2993, %v3005
        %v3007 = vmul.f32 %v2994, %v3005
        %v3008 = vmul.f32 %v2995, %v3005
        %v3009 = vmul.f32 %v2996, %v3005
        %v3010 = vmul.f32 %v2997, %v3005
        %v3011 = vmul.f32 %v2998, %v3005
        %v3012 = vmul.f32 %v2999, %v3005
        %v3013 = vmul.f32 %v3000, %v3005
        %v3014 = vadd.f32 %v2956, %v3006
        %v3015 = vadd.f32 %v2957, %v3007
        %v3016 = vadd.f32 %v2958, %v3008
        %v3017 = vadd.f32 %v2959, %v3009
        %v3018 = vadd.f32 %v2960, %v3010
        %v3019 = vadd.f32 %v2961, %v3011
        %v3020 = vadd.f32 %v2962, %v3012
        %v3021 = vadd.f32 %v2963, %v3013
        %v3022 = vld [vmem:[%s1445 + $0xa] sm:$0xff]
        %v3023 = vld [vmem:[%s1445 + $0x22] sm:$0xff]
        %v3024 = vld [vmem:[%s1445 + $0x3a] sm:$0xff]
        %v3025 = vld [vmem:[%s1445 + $0x52] sm:$0xff]
        %v3026 = vld [vmem:[%s1445 + $0x6a] sm:$0xff]
        %v3027 = vld [vmem:[%s1445 + $0x82] sm:$0xff]
        %v3028 = vld [vmem:[%s1445 + $0x9a] sm:$0xff]
        %v3029 = vld [vmem:[%s1445 + $0xb2] sm:$0xff]
        %v3030 = vld [vmem:[%s1454 + $0x2] sm:$0x1]
        %v3031 = vlaneseq
        %v3032 = vshrl.u32 %v3031, 7
        %v3033 = vsub.s32 0, %v3032
        %v3034 = vrot.slane %v3030, %v3033
        %v3035 = vmul.f32 %v3022, %v3034
        %v3036 = vmul.f32 %v3023, %v3034
        %v3037 = vmul.f32 %v3024, %v3034
        %v3038 = vmul.f32 %v3025, %v3034
        %v3039 = vmul.f32 %v3026, %v3034
        %v3040 = vmul.f32 %v3027, %v3034
        %v3041 = vmul.f32 %v3028, %v3034
        %v3042 = vmul.f32 %v3029, %v3034
        %v3043 = vadd.f32 %v2985, %v3035
        %v3044 = vadd.f32 %v2986, %v3036
        %v3045 = vadd.f32 %v2987, %v3037
        %v3046 = vadd.f32 %v2988, %v3038
        %v3047 = vadd.f32 %v2989, %v3039
        %v3048 = vadd.f32 %v2990, %v3040
        %v3049 = vadd.f32 %v2991, %v3041
        %v3050 = vadd.f32 %v2992, %v3042
        %v3051 = vld [vmem:[%s1445 + $0xb] sm:$0xff]
        %v3052 = vld [vmem:[%s1445 + $0x23] sm:$0xff]
        %v3053 = vld [vmem:[%s1445 + $0x3b] sm:$0xff]
        %v3054 = vld [vmem:[%s1445 + $0x53] sm:$0xff]
        %v3055 = vld [vmem:[%s1445 + $0x6b] sm:$0xff]
        %v3056 = vld [vmem:[%s1445 + $0x83] sm:$0xff]
        %v3057 = vld [vmem:[%s1445 + $0x9b] sm:$0xff]
        %v3058 = vld [vmem:[%s1445 + $0xb3] sm:$0xff]
        %v3059 = vld [vmem:[%s1454 + $0x3] sm:$0x1]
        %v3060 = vlaneseq
        %v3061 = vshrl.u32 %v3060, 7
        %v3062 = vsub.s32 0, %v3061
        %v3063 = vrot.slane %v3059, %v3062
        %v3064 = vmul.f32 %v3051, %v3063
        %v3065 = vmul.f32 %v3052, %v3063
        %v3066 = vmul.f32 %v3053, %v3063
        %v3067 = vmul.f32 %v3054, %v3063
        %v3068 = vmul.f32 %v3055, %v3063
        %v3069 = vmul.f32 %v3056, %v3063
        %v3070 = vmul.f32 %v3057, %v3063
        %v3071 = vmul.f32 %v3058, %v3063
        %v3072 = vadd.f32 %v3014, %v3064
        %v3073 = vadd.f32 %v3015, %v3065
        %v3074 = vadd.f32 %v3016, %v3066
        %v3075 = vadd.f32 %v3017, %v3067
        %v3076 = vadd.f32 %v3018, %v3068
        %v3077 = vadd.f32 %v3019, %v3069
        %v3078 = vadd.f32 %v3020, %v3070
        %v3079 = vadd.f32 %v3021, %v3071
        %v3080 = vld [vmem:[%s1445 + $0xc] sm:$0xff]
        %v3081 = vld [vmem:[%s1445 + $0x24] sm:$0xff]
        %v3082 = vld [vmem:[%s1445 + $0x3c] sm:$0xff]
        %v3083 = vld [vmem:[%s1445 + $0x54] sm:$0xff]
        %v3084 = vld [vmem:[%s1445 + $0x6c] sm:$0xff]
        %v3085 = vld [vmem:[%s1445 + $0x84] sm:$0xff]
        %v3086 = vld [vmem:[%s1445 + $0x9c] sm:$0xff]
        %v3087 = vld [vmem:[%s1445 + $0xb4] sm:$0xff]
        %v3088 = vld [vmem:[%s1454 + $0x4] sm:$0x1]
        %v3089 = vlaneseq
        %v3090 = vshrl.u32 %v3089, 7
        %v3091 = vsub.s32 0, %v3090
        %v3092 = vrot.slane %v3088, %v3091
        %v3093 = vmul.f32 %v3080, %v3092
        %v3094 = vmul.f32 %v3081, %v3092
        %v3095 = vmul.f32 %v3082, %v3092
        %v3096 = vmul.f32 %v3083, %v3092
        %v3097 = vmul.f32 %v3084, %v3092
        %v3098 = vmul.f32 %v3085, %v3092
        %v3099 = vmul.f32 %v3086, %v3092
        %v3100 = vmul.f32 %v3087, %v3092
        %v3101 = vadd.f32 %v3043, %v3093
        %v3102 = vadd.f32 %v3044, %v3094
        %v3103 = vadd.f32 %v3045, %v3095
        %v3104 = vadd.f32 %v3046, %v3096
        %v3105 = vadd.f32 %v3047, %v3097
        %v3106 = vadd.f32 %v3048, %v3098
        %v3107 = vadd.f32 %v3049, %v3099
        %v3108 = vadd.f32 %v3050, %v3100
        %v3109 = vld [vmem:[%s1445 + $0xd] sm:$0xff]
        %v3110 = vld [vmem:[%s1445 + $0x25] sm:$0xff]
        %v3111 = vld [vmem:[%s1445 + $0x3d] sm:$0xff]
        %v3112 = vld [vmem:[%s1445 + $0x55] sm:$0xff]
        %v3113 = vld [vmem:[%s1445 + $0x6d] sm:$0xff]
        %v3114 = vld [vmem:[%s1445 + $0x85] sm:$0xff]
        %v3115 = vld [vmem:[%s1445 + $0x9d] sm:$0xff]
        %v3116 = vld [vmem:[%s1445 + $0xb5] sm:$0xff]
        %v3117 = vld [vmem:[%s1454 + $0x5] sm:$0x1]
        %v3118 = vlaneseq
        %v3119 = vshrl.u32 %v3118, 7
        %v3120 = vsub.s32 0, %v3119
        %v3121 = vrot.slane %v3117, %v3120
        %v3122 = vmul.f32 %v3109, %v3121
        %v3123 = vmul.f32 %v3110, %v3121
        %v3124 = vmul.f32 %v3111, %v3121
        %v3125 = vmul.f32 %v3112, %v3121
        %v3126 = vmul.f32 %v3113, %v3121
        %v3127 = vmul.f32 %v3114, %v3121
        %v3128 = vmul.f32 %v3115, %v3121
        %v3129 = vmul.f32 %v3116, %v3121
        %v3130 = vadd.f32 %v3072, %v3122
        %v3131 = vadd.f32 %v3073, %v3123
        %v3132 = vadd.f32 %v3074, %v3124
        %v3133 = vadd.f32 %v3075, %v3125
        %v3134 = vadd.f32 %v3076, %v3126
        %v3135 = vadd.f32 %v3077, %v3127
        %v3136 = vadd.f32 %v3078, %v3128
        %v3137 = vadd.f32 %v3079, %v3129
        %v3138 = vld [vmem:[%s1445 + $0xe] sm:$0xff]
        %v3139 = vld [vmem:[%s1445 + $0x26] sm:$0xff]
        %v3140 = vld [vmem:[%s1445 + $0x3e] sm:$0xff]
        %v3141 = vld [vmem:[%s1445 + $0x56] sm:$0xff]
        %v3142 = vld [vmem:[%s1445 + $0x6e] sm:$0xff]
        %v3143 = vld [vmem:[%s1445 + $0x86] sm:$0xff]
        %v3144 = vld [vmem:[%s1445 + $0x9e] sm:$0xff]
        %v3145 = vld [vmem:[%s1445 + $0xb6] sm:$0xff]
        %v3146 = vld [vmem:[%s1454 + $0x6] sm:$0x1]
        %v3147 = vlaneseq
        %v3148 = vshrl.u32 %v3147, 7
        %v3149 = vsub.s32 0, %v3148
        %v3150 = vrot.slane %v3146, %v3149
        %v3151 = vmul.f32 %v3138, %v3150
        %v3152 = vmul.f32 %v3139, %v3150
        %v3153 = vmul.f32 %v3140, %v3150
        %v3154 = vmul.f32 %v3141, %v3150
        %v3155 = vmul.f32 %v3142, %v3150
        %v3156 = vmul.f32 %v3143, %v3150
        %v3157 = vmul.f32 %v3144, %v3150
        %v3158 = vmul.f32 %v3145, %v3150
        %v3159 = vadd.f32 %v3101, %v3151
        %v3160 = vadd.f32 %v3102, %v3152
        %v3161 = vadd.f32 %v3103, %v3153
        %v3162 = vadd.f32 %v3104, %v3154
        %v3163 = vadd.f32 %v3105, %v3155
        %v3164 = vadd.f32 %v3106, %v3156
        %v3165 = vadd.f32 %v3107, %v3157
        %v3166 = vadd.f32 %v3108, %v3158
        %v3167 = vld [vmem:[%s1650 + $0x8] sm:$0xff]
        %v3168 = vld [vmem:[%s1650 + $0x20] sm:$0xff]
        %v3169 = vld [vmem:[%s1650 + $0x38] sm:$0xff]
        %v3170 = vld [vmem:[%s1650 + $0x50] sm:$0xff]
        %v3171 = vld [vmem:[%s1650 + $0x68] sm:$0xff]
        %v3172 = vld [vmem:[%s1650 + $0x80] sm:$0xff]
        %v3173 = vld [vmem:[%s1650 + $0x98] sm:$0xff]
        %v3174 = vld [vmem:[%s1650 + $0xb0] sm:$0xff]
        %v3175 = vld [vmem:[%s1659] sm:$0x1]
        %v3176 = vlaneseq
        %v3177 = vshrl.u32 %v3176, 7
        %v3178 = vsub.s32 0, %v3177
        %v3179 = vrot.slane %v3175, %v3178
        %v3180 = vmul.f32 %v3167, %v3179
        %v3181 = vmul.f32 %v3168, %v3179
        %v3182 = vmul.f32 %v3169, %v3179
        %v3183 = vmul.f32 %v3170, %v3179
        %v3184 = vmul.f32 %v3171, %v3179
        %v3185 = vmul.f32 %v3172, %v3179
        %v3186 = vmul.f32 %v3173, %v3179
        %v3187 = vmul.f32 %v3174, %v3179
        %v3188 = vadd.f32 %v3130, %v3180
        %v3189 = vadd.f32 %v3131, %v3181
        %v3190 = vadd.f32 %v3132, %v3182
        %v3191 = vadd.f32 %v3133, %v3183
        %v3192 = vadd.f32 %v3134, %v3184
        %v3193 = vadd.f32 %v3135, %v3185
        %v3194 = vadd.f32 %v3136, %v3186
        %v3195 = vadd.f32 %v3137, %v3187
        %v3196 = vld [vmem:[%s1650 + $0x9] sm:$0xff]
        %v3197 = vld [vmem:[%s1650 + $0x21] sm:$0xff]
        %v3198 = vld [vmem:[%s1650 + $0x39] sm:$0xff]
        %v3199 = vld [vmem:[%s1650 + $0x51] sm:$0xff]
        %v3200 = vld [vmem:[%s1650 + $0x69] sm:$0xff]
        %v3201 = vld [vmem:[%s1650 + $0x81] sm:$0xff]
        %v3202 = vld [vmem:[%s1650 + $0x99] sm:$0xff]
        %v3203 = vld [vmem:[%s1650 + $0xb1] sm:$0xff]
        %v3204 = vld [vmem:[%s1659 + $0x1] sm:$0x1]
        %v3205 = vlaneseq
        %v3206 = vshrl.u32 %v3205, 7
        %v3207 = vsub.s32 0, %v3206
        %v3208 = vrot.slane %v3204, %v3207
        %v3209 = vmul.f32 %v3196, %v3208
        %v3210 = vmul.f32 %v3197, %v3208
        %v3211 = vmul.f32 %v3198, %v3208
        %v3212 = vmul.f32 %v3199, %v3208
        %v3213 = vmul.f32 %v3200, %v3208
        %v3214 = vmul.f32 %v3201, %v3208
        %v3215 = vmul.f32 %v3202, %v3208
        %v3216 = vmul.f32 %v3203, %v3208
        %v3217 = vadd.f32 %v3159, %v3209
        %v3218 = vadd.f32 %v3160, %v3210
        %v3219 = vadd.f32 %v3161, %v3211
        %v3220 = vadd.f32 %v3162, %v3212
        %v3221 = vadd.f32 %v3163, %v3213
        %v3222 = vadd.f32 %v3164, %v3214
        %v3223 = vadd.f32 %v3165, %v3215
        %v3224 = vadd.f32 %v3166, %v3216
        %v3225 = vld [vmem:[%s1650 + $0xa] sm:$0xff]
        %v3226 = vld [vmem:[%s1650 + $0x22] sm:$0xff]
        %v3227 = vld [vmem:[%s1650 + $0x3a] sm:$0xff]
        %v3228 = vld [vmem:[%s1650 + $0x52] sm:$0xff]
        %v3229 = vld [vmem:[%s1650 + $0x6a] sm:$0xff]
        %v3230 = vld [vmem:[%s1650 + $0x82] sm:$0xff]
        %v3231 = vld [vmem:[%s1650 + $0x9a] sm:$0xff]
        %v3232 = vld [vmem:[%s1650 + $0xb2] sm:$0xff]
        %v3233 = vld [vmem:[%s1659 + $0x2] sm:$0x1]
        %v3234 = vlaneseq
        %v3235 = vshrl.u32 %v3234, 7
        %v3236 = vsub.s32 0, %v3235
        %v3237 = vrot.slane %v3233, %v3236
        %v3238 = vmul.f32 %v3225, %v3237
        %v3239 = vmul.f32 %v3226, %v3237
        %v3240 = vmul.f32 %v3227, %v3237
        %v3241 = vmul.f32 %v3228, %v3237
        %v3242 = vmul.f32 %v3229, %v3237
        %v3243 = vmul.f32 %v3230, %v3237
        %v3244 = vmul.f32 %v3231, %v3237
        %v3245 = vmul.f32 %v3232, %v3237
        %v3246 = vadd.f32 %v3188, %v3238
        %v3247 = vadd.f32 %v3189, %v3239
        %v3248 = vadd.f32 %v3190, %v3240
        %v3249 = vadd.f32 %v3191, %v3241
        %v3250 = vadd.f32 %v3192, %v3242
        %v3251 = vadd.f32 %v3193, %v3243
        %v3252 = vadd.f32 %v3194, %v3244
        %v3253 = vadd.f32 %v3195, %v3245
        %v3254 = vld [vmem:[%s1650 + $0xb] sm:$0xff]
        %v3255 = vld [vmem:[%s1650 + $0x23] sm:$0xff]
        %v3256 = vld [vmem:[%s1650 + $0x3b] sm:$0xff]
        %v3257 = vld [vmem:[%s1650 + $0x53] sm:$0xff]
        %v3258 = vld [vmem:[%s1650 + $0x6b] sm:$0xff]
        %v3259 = vld [vmem:[%s1650 + $0x83] sm:$0xff]
        %v3260 = vld [vmem:[%s1650 + $0x9b] sm:$0xff]
        %v3261 = vld [vmem:[%s1650 + $0xb3] sm:$0xff]
        %v3262 = vld [vmem:[%s1659 + $0x3] sm:$0x1]
        %v3263 = vlaneseq
        %v3264 = vshrl.u32 %v3263, 7
        %v3265 = vsub.s32 0, %v3264
        %v3266 = vrot.slane %v3262, %v3265
        %v3267 = vmul.f32 %v3254, %v3266
        %v3268 = vmul.f32 %v3255, %v3266
        %v3269 = vmul.f32 %v3256, %v3266
        %v3270 = vmul.f32 %v3257, %v3266
        %v3271 = vmul.f32 %v3258, %v3266
        %v3272 = vmul.f32 %v3259, %v3266
        %v3273 = vmul.f32 %v3260, %v3266
        %v3274 = vmul.f32 %v3261, %v3266
        %v3275 = vadd.f32 %v3217, %v3267
        %v3276 = vadd.f32 %v3218, %v3268
        %v3277 = vadd.f32 %v3219, %v3269
        %v3278 = vadd.f32 %v3220, %v3270
        %v3279 = vadd.f32 %v3221, %v3271
        %v3280 = vadd.f32 %v3222, %v3272
        %v3281 = vadd.f32 %v3223, %v3273
        %v3282 = vadd.f32 %v3224, %v3274
        %v3283 = vld [vmem:[%s1650 + $0xc] sm:$0xff]
        %v3284 = vld [vmem:[%s1650 + $0x24] sm:$0xff]
        %v3285 = vld [vmem:[%s1650 + $0x3c] sm:$0xff]
        %v3286 = vld [vmem:[%s1650 + $0x54] sm:$0xff]
        %v3287 = vld [vmem:[%s1650 + $0x6c] sm:$0xff]
        %v3288 = vld [vmem:[%s1650 + $0x84] sm:$0xff]
        %v3289 = vld [vmem:[%s1650 + $0x9c] sm:$0xff]
        %v3290 = vld [vmem:[%s1650 + $0xb4] sm:$0xff]
        %v3291 = vld [vmem:[%s1659 + $0x4] sm:$0x1]
        %v3292 = vlaneseq
        %v3293 = vshrl.u32 %v3292, 7
        %v3294 = vsub.s32 0, %v3293
        %v3295 = vrot.slane %v3291, %v3294
        %v3296 = vmul.f32 %v3283, %v3295
        %v3297 = vmul.f32 %v3284, %v3295
        %v3298 = vmul.f32 %v3285, %v3295
        %v3299 = vmul.f32 %v3286, %v3295
        %v3300 = vmul.f32 %v3287, %v3295
        %v3301 = vmul.f32 %v3288, %v3295
        %v3302 = vmul.f32 %v3289, %v3295
        %v3303 = vmul.f32 %v3290, %v3295
        %v3304 = vadd.f32 %v3246, %v3296
        %v3305 = vadd.f32 %v3247, %v3297
        %v3306 = vadd.f32 %v3248, %v3298
        %v3307 = vadd.f32 %v3249, %v3299
        %v3308 = vadd.f32 %v3250, %v3300
        %v3309 = vadd.f32 %v3251, %v3301
        %v3310 = vadd.f32 %v3252, %v3302
        %v3311 = vadd.f32 %v3253, %v3303
        %v3312 = vld [vmem:[%s1650 + $0xd] sm:$0xff]
        %v3313 = vld [vmem:[%s1650 + $0x25] sm:$0xff]
        %v3314 = vld [vmem:[%s1650 + $0x3d] sm:$0xff]
        %v3315 = vld [vmem:[%s1650 + $0x55] sm:$0xff]
        %v3316 = vld [vmem:[%s1650 + $0x6d] sm:$0xff]
        %v3317 = vld [vmem:[%s1650 + $0x85] sm:$0xff]
        %v3318 = vld [vmem:[%s1650 + $0x9d] sm:$0xff]
        %v3319 = vld [vmem:[%s1650 + $0xb5] sm:$0xff]
        %v3320 = vld [vmem:[%s1659 + $0x5] sm:$0x1]
        %v3321 = vlaneseq
        %v3322 = vshrl.u32 %v3321, 7
        %v3323 = vsub.s32 0, %v3322
        %v3324 = vrot.slane %v3320, %v3323
        %v3325 = vmul.f32 %v3312, %v3324
        %v3326 = vmul.f32 %v3313, %v3324
        %v3327 = vmul.f32 %v3314, %v3324
        %v3328 = vmul.f32 %v3315, %v3324
        %v3329 = vmul.f32 %v3316, %v3324
        %v3330 = vmul.f32 %v3317, %v3324
        %v3331 = vmul.f32 %v3318, %v3324
        %v3332 = vmul.f32 %v3319, %v3324
        %v3333 = vadd.f32 %v3275, %v3325
        %v3334 = vadd.f32 %v3276, %v3326
        %v3335 = vadd.f32 %v3277, %v3327
        %v3336 = vadd.f32 %v3278, %v3328
        %v3337 = vadd.f32 %v3279, %v3329
        %v3338 = vadd.f32 %v3280, %v3330
        %v3339 = vadd.f32 %v3281, %v3331
        %v3340 = vadd.f32 %v3282, %v3332
        %v3341 = vld [vmem:[%s1650 + $0xe] sm:$0xff]
        %v3342 = vld [vmem:[%s1650 + $0x26] sm:$0xff]
        %v3343 = vld [vmem:[%s1650 + $0x3e] sm:$0xff]
        %v3344 = vld [vmem:[%s1650 + $0x56] sm:$0xff]
        %v3345 = vld [vmem:[%s1650 + $0x6e] sm:$0xff]
        %v3346 = vld [vmem:[%s1650 + $0x86] sm:$0xff]
        %v3347 = vld [vmem:[%s1650 + $0x9e] sm:$0xff]
        %v3348 = vld [vmem:[%s1650 + $0xb6] sm:$0xff]
        %v3349 = vld [vmem:[%s1659 + $0x6] sm:$0x1]
        %v3350 = vlaneseq
        %v3351 = vshrl.u32 %v3350, 7
        %v3352 = vsub.s32 0, %v3351
        %v3353 = vrot.slane %v3349, %v3352
        %v3354 = vmul.f32 %v3341, %v3353
        %v3355 = vmul.f32 %v3342, %v3353
        %v3356 = vmul.f32 %v3343, %v3353
        %v3357 = vmul.f32 %v3344, %v3353
        %v3358 = vmul.f32 %v3345, %v3353
        %v3359 = vmul.f32 %v3346, %v3353
        %v3360 = vmul.f32 %v3347, %v3353
        %v3361 = vmul.f32 %v3348, %v3353
        %v3362 = vadd.f32 %v3304, %v3354
        %v3363 = vadd.f32 %v3305, %v3355
        %v3364 = vadd.f32 %v3306, %v3356
        %v3365 = vadd.f32 %v3307, %v3357
        %v3366 = vadd.f32 %v3308, %v3358
        %v3367 = vadd.f32 %v3309, %v3359
        %v3368 = vadd.f32 %v3310, %v3360
        %v3369 = vadd.f32 %v3311, %v3361
        %v3370 = vadd.f32 %v3362, %v3333
        %v3371 = vadd.f32 %v3363, %v3334
        %v3372 = vadd.f32 %v3364, %v3335
        %v3373 = vadd.f32 %v3365, %v3336
        %v3374 = vadd.f32 %v3366, %v3337
        %v3375 = vadd.f32 %v3367, %v3338
        %v3376 = vadd.f32 %v3368, %v3339
        %v3377 = vadd.f32 %v3369, %v3340
        %v3378 = vadd.f32 %v3370, %v1867
        %v3379 = vadd.f32 %v3371, %v1867
        %v3380 = vadd.f32 %v3372, %v1867
        %v3381 = vadd.f32 %v3373, %v1867
        %v3382 = vadd.f32 %v3374, %v1867
        %v3383 = vadd.f32 %v3375, %v1867
        %v3384 = vadd.f32 %v3376, %v1867
        %v3385 = vadd.f32 %v3377, %v1867
        %v3386 = vxor.u32 %v3378, 2147483648
        %v3387 = vxor.u32 %v3379, 2147483648
        %v3388 = vxor.u32 %v3380, 2147483648
        %v3389 = vxor.u32 %v3381, 2147483648
        %v3390 = vxor.u32 %v3382, 2147483648
        %v3391 = vxor.u32 %v3383, 2147483648
        %v3392 = vxor.u32 %v3384, 2147483648
        %v3393 = vxor.u32 %v3385, 2147483648
        %v3394 = vmul.f32 %v3386, 1.442695
        %v3395 = vpow.pop %v3394
        %v3396 = vmul.f32 %v3387, 1.442695
        %v3397 = vpow.pop %v3396
        %v3398 = vmul.f32 %v3388, 1.442695
        %v3399 = vpow.pop %v3398
        %v3400 = vmul.f32 %v3389, 1.442695
        %v3401 = vpow.pop %v3400
        %v3402 = vmul.f32 %v3390, 1.442695
        %v3403 = vpow.pop %v3402
        %v3404 = vmul.f32 %v3391, 1.442695
        %v3405 = vpow.pop %v3404
        %v3406 = vmul.f32 %v3392, 1.442695
        %v3407 = vpow.pop %v3406
        %v3408 = vmul.f32 %v3393, 1.442695
        %v3409 = vpow.pop %v3408
        %v3410 = vadd.f32 %v3395, 1.0
        %v3411 = vadd.f32 %v3397, 1.0
        %v3412 = vadd.f32 %v3399, 1.0
        %v3413 = vadd.f32 %v3401, 1.0
        %v3414 = vadd.f32 %v3403, 1.0
        %v3415 = vadd.f32 %v3405, 1.0
        %v3416 = vadd.f32 %v3407, 1.0
        %v3417 = vadd.f32 %v3409, 1.0
        %v3418 = vrcp.pop %v3410
        %v3419 = vmul.f32 1.0, %v3418
        %v3420 = vrcp.pop %v3411
        %v3421 = vmul.f32 1.0, %v3420
        %v3422 = vrcp.pop %v3412
        %v3423 = vmul.f32 1.0, %v3422
        %v3424 = vrcp.pop %v3413
        %v3425 = vmul.f32 1.0, %v3424
        %v3426 = vrcp.pop %v3414
        %v3427 = vmul.f32 1.0, %v3426
        %v3428 = vrcp.pop %v3415
        %v3429 = vmul.f32 1.0, %v3428
        %v3430 = vrcp.pop %v3416
        %v3431 = vmul.f32 1.0, %v3430
        %v3432 = vrcp.pop %v3417
        %v3433 = vmul.f32 1.0, %v3432
        %v3434 = vld [vmem:[%s197 + $0x8] sm:$0xff]
        %v3435 = vld [vmem:[%s197 + $0x18] sm:$0xff]
        %v3436 = vld [vmem:[%s197 + $0x28] sm:$0xff]
        %v3437 = vld [vmem:[%s197 + $0x38] sm:$0xff]
        %v3438 = vld [vmem:[%s197 + $0x48] sm:$0xff]
        %v3439 = vld [vmem:[%s197 + $0x58] sm:$0xff]
        %v3440 = vld [vmem:[%s197 + $0x68] sm:$0xff]
        %v3441 = vld [vmem:[%s197 + $0x78] sm:$0xff]
        %v3442 = vmul.f32 %v3434, %v3419
        %v3443 = vmul.f32 %v3435, %v3421
        %v3444 = vmul.f32 %v3436, %v3423
        %v3445 = vmul.f32 %v3437, %v3425
        %v3446 = vmul.f32 %v3438, %v3427
        %v3447 = vmul.f32 %v3439, %v3429
        %v3448 = vmul.f32 %v3440, %v3431
        %v3449 = vmul.f32 %v3441, %v3433
        %3450 = vst [vmem:[%s223 + $0x8] sm:$0xff] %v3442
        %3451 = vst [vmem:[%s223 + $0x18] sm:$0xff] %v3443
        %3452 = vst [vmem:[%s223 + $0x28] sm:$0xff] %v3444
        %3453 = vst [vmem:[%s223 + $0x38] sm:$0xff] %v3445
        %3454 = vst [vmem:[%s223 + $0x48] sm:$0xff] %v3446
        %3455 = vst [vmem:[%s223 + $0x58] sm:$0xff] %v3447
        %3456 = vst [vmem:[%s223 + $0x68] sm:$0xff] %v3448
        %3457 = vst [vmem:[%s223 + $0x78] sm:$0xff] %v3449
        %s3458 = sand.u32 %s114, 1
        %s3459 = scalar_lea.sflag [#allocation7], %s3458
        %s3460 = sand.u32 %s114, 1
        %s3461 = smul.addr %s3460, 128
        %s3462 = scalar_lea.vmem [#allocation10], %s3461
        // Predicated region
        $region73: #{tpu_custom_call.1} parent=31 // pred_check
          %p3463 = pneg %p124
        $region74: #{tpu_custom_call.1} parent=31 // pred_check_branch
          %3465 = sbr.rel (%p3463) target = $region76
        $region75: #{tpu_custom_call.1} parent=31 // pred_region
          %s3466 = smul.u32 8, %s27
          %s3468 = ssub.s32 2048, 2048
          %3469 = vsyncadd %s3459, %s3468
          %s3470 = smul.addr %s3466, 2
          %s3471 = smul.addr %s26, 32
          %s3472 = sadd.s32 %s3470, %s3471
          %s3473 = smul.addr %s3472, 128
          %s3474 = scalar_lea.hbm %s4, %s3473
          %s3475 = sshll.u32 %s3462, 4
          %s3476 = int_to_ptr.vmem [resolvable:$true] %s3475
          %3481 = dma.vmem_to_hbm [thread:$0]  %s3476, 2048, %s3474, %s3459, 128, 128, 8
        $region76: #{tpu_custom_call.1} parent=31 // pred_fallthru
          _
      $region32: #{tpu_custom_call.1} parent=5 // pred_fallthru
        _
      %p3482 = scmp.le.s32.totalorder 2, %s17
      // Predicated region
      $region77: #{tpu_custom_call.1} parent=5 // pred_check
        %p3483 = pneg %p3482
      $region78: #{tpu_custom_call.1} parent=5 // pred_check_branch
        %3485 = sbr.rel (%p3483) target = $region80
      $region79: #{tpu_custom_call.1} parent=5 // pred_region
        %s3486 = ssub.s32 %s17, 2
        // Predicated region
        $region81: #{tpu_custom_call.1} parent=79 // pred_check
          %p3487 = pneg %p130
        $region82: #{tpu_custom_call.1} parent=79 // pred_check_branch
          %3489 = sbr.rel (%p3487) target = $region84
        $region83: #{tpu_custom_call.1} parent=79 // pred_region
          %s3490 = sand.u32 %s115, 1
          %s3491 = scalar_lea.sflag [#allocation7], %s3490
          %s3492 = sand.u32 %s115, 1
          %s3493 = smul.addr %s3492, 128
          %s3494 = scalar_lea.vmem [#allocation10], %s3493
          %3495 = dma.done %s3491, 2048
        $region84: #{tpu_custom_call.1} parent=79 // pred_fallthru
          _
      $region80: #{tpu_custom_call.1} parent=5 // pred_fallthru
        _
    $region6: #{tpu_custom_call.1} parent=1 // loop_footer
      %s21 = sadd.s32 1, %s17
    $region7: #{tpu_custom_call.1} parent=1 // loop_footer_branch
      %16 = sbr.rel target = $region3
    $region8: #{tpu_custom_call.1} parent=1 // loop_exit
      _
    %3496 = vsyncpa [#allocation6], 1
    %s3497 = scalar_lea.sflag [#allocation6], 1
    %3498 = vsyncpa %s3497, 1
    %3499 = vsyncpa [#allocation9], 1
    %3500 = vsyncpa [#allocation7], 1
    %s3501 = scalar_lea.sflag [#allocation7], 1
    %3502 = vsyncpa %s3501, 1
  %3503 = vsyncmov [#allocation4]
  %s3504 = vpop.sfrf %3503
  %p3505 = scmp.eq.s32.totalorder %s3504, 0
  %p3506 = pneg %p3505
  %3508 = shalt.err (%p3506)
  %s3509 = scalar_lea.sflag [#allocation4], 1
  %3510 = vsyncmov %s3509
  %s3511 = vpop.sfrf %3510
  %p3512 = scmp.eq.s32.totalorder %s3511, 0
  %p3513 = pneg %p3512
  %3515 = shalt.err (%p3513)

</llo_original>
